<compile_context>
chip_gen: v7x
topology: tpu7x:2x2x1
jax: 0.10.0
libtpu: 0.0.40
codegen_flags: <defaults>
</compile_context>

<pallas_src>
import jax
import jax.numpy as jnp
from jax.experimental import pallas as pl
from jax.experimental.pallas import tpu as pltpu

# DenseNet121 block-1 constants
GROWTH = 32
BN_SIZE = 4
NUM_INIT = 64
NUM_LAYERS_BLOCK1 = 6
C_BLOCK = NUM_INIT + GROWTH * NUM_LAYERS_BLOCK1   # 256
LANE = 128                                        # lane-dense output width


def _round_up(x, m):
    return ((x + m - 1) // m) * m


def _choose_tm(mp):
    """Largest row tile <=512 dividing mp, preferring >=2 grid steps."""
    for tm in (512, 384, 256, 128):
        if mp % tm == 0 and (mp // tm >= 2 or mp == 128):
            return tm
    return 128


# ---------------------------------------------------------------------------
# Pallas kernels: MXU matmul with fused BN+ReLU prologue or epilogue
# ---------------------------------------------------------------------------
def _matmul_in_fused_kernel(a_ref, b_ref, s_ref, t_ref, o_ref):
    """o = relu(a * s + t) @ b   (BN+ReLU fused as prologue on the A tile)."""
    a = a_ref[...].astype(jnp.float32)
    a = jnp.maximum(a * s_ref[...] + t_ref[...], 0.0)
    o_ref[...] = jnp.dot(a.astype(jnp.bfloat16), b_ref[...],
                         preferred_element_type=jnp.float32).astype(o_ref.dtype)


def _matmul_out_fused_kernel(a_ref, b_ref, s_ref, t_ref, o_ref):
    """o = relu((a @ b) * s + t)   (BN+ReLU fused as epilogue on the acc)."""
    acc = jnp.dot(a_ref[...], b_ref[...], preferred_element_type=jnp.float32)
    o_ref[...] = jnp.maximum(acc * s_ref[...] + t_ref[...], 0.0
                             ).astype(o_ref.dtype)


def fused_matmul(a, b, s, t, kernel):
    """a: (M, K) bf16, b: (K, N) bf16, s/t: (1, K or N) f32 -> (M, N) bf16."""
    M, K = a.shape
    _, N = b.shape
    Mp = _round_up(M, 128)
    if Mp != M:
        a = jnp.pad(a, ((0, Mp - M), (0, 0)))
    tm = _choose_tm(Mp)
    out = pl.pallas_call(
        kernel,
        out_shape=jax.ShapeDtypeStruct((Mp, N), jnp.bfloat16),
        grid=(Mp // tm,),
        in_specs=[
            pl.BlockSpec((tm, K), lambda i: (i, 0)),
            pl.BlockSpec((K, N), lambda i: (0, 0)),
            pl.BlockSpec(s.shape, lambda i: (0, 0)),
            pl.BlockSpec(t.shape, lambda i: (0, 0)),
        ],
        out_specs=pl.BlockSpec((tm, N), lambda i: (i, 0)),
        compiler_params=pltpu.CompilerParams(
            dimension_semantics=("parallel",)),
    )(a, b, s, t)
    return out[:M]


# ---------------------------------------------------------------------------
# Pallas kernel: fully fused DenseNet layer (per image)
#   z  = relu(x * s1 + b1)            (norm1 + relu on the 256-ch slab)
#   y1 = z @ w1                       (1x1 bottleneck conv, 128 ch)
#   u  = relu(y1 * s2 + b2)           (norm2 + relu)
#   o  = conv3x3(zero_pad(u), w2)     (pad applied AFTER activation, exact)
# ---------------------------------------------------------------------------
def _dense_layer_kernel(x_ref, w1_ref, s1_ref, b1_ref, w2_ref, s2_ref, b2_ref,
                        o_ref, upad_ref):
    H, W = x_ref.shape[1], x_ref.shape[2]
    C = x_ref.shape[3]

    # norm1 + relu prologue, then 1x1 bottleneck on the MXU
    x = x_ref[...].reshape(H * W, C).astype(jnp.float32)
    z = jnp.maximum(x * s1_ref[...] + b1_ref[...], 0.0).astype(jnp.bfloat16)
    y1 = jnp.dot(z, w1_ref[...], preferred_element_type=jnp.float32)

    # norm2 + relu epilogue of the bottleneck
    u = jnp.maximum(y1 * s2_ref[...] + b2_ref[...], 0.0).astype(jnp.bfloat16)

    # zero-padded activated bottleneck lives entirely in VMEM scratch
    upad_ref[...] = jnp.zeros_like(upad_ref)
    upad_ref[pl.ds(1, H), pl.ds(1, W), :] = u.reshape(H, W, LANE)

    # 3x3 growth conv as 9 tap matmuls accumulated in f32
    acc = jnp.zeros((H * W, LANE), jnp.float32)
    for tap in range(9):
        i, j = tap // 3, tap % 3
        a = upad_ref[pl.ds(i, H), pl.ds(j, W), :].reshape(H * W, LANE)
        acc = acc + jnp.dot(a, w2_ref[tap], preferred_element_type=jnp.float32)
    o_ref[...] = acc.reshape(1, H, W, LANE).astype(o_ref.dtype)


def dense_layer(feats, w1, s1, b1, w2, s2, b2):
    """feats: (N, H, W, 256) bf16 -> (N, H, W, 128) bf16 (first 32 ch valid)."""
    N, H, W, C = feats.shape
    return pl.pallas_call(
        _dense_layer_kernel,
        out_shape=jax.ShapeDtypeStruct((N, H, W, LANE), jnp.bfloat16),
        grid=(N,),
        in_specs=[
            pl.BlockSpec((1, H, W, C), lambda n: (n, 0, 0, 0)),
            pl.BlockSpec((C, LANE), lambda n: (0, 0)),
            pl.BlockSpec((1, C), lambda n: (0, 0)),
            pl.BlockSpec((1, C), lambda n: (0, 0)),
            pl.BlockSpec((9, LANE, LANE), lambda n: (0, 0, 0)),
            pl.BlockSpec((1, LANE), lambda n: (0, 0)),
            pl.BlockSpec((1, LANE), lambda n: (0, 0)),
        ],
        out_specs=pl.BlockSpec((1, H, W, LANE), lambda n: (n, 0, 0, 0)),
        scratch_shapes=[pltpu.VMEM((H + 2, W + 2, LANE), jnp.bfloat16)],
        compiler_params=pltpu.CompilerParams(
            dimension_semantics=("parallel",)),
    )(feats, w1, s1, b1, w2, s2, b2)


# ---------------------------------------------------------------------------
# JAX glue (fused by XLA under jit)
# ---------------------------------------------------------------------------
def _im2col(x, kh, kw, stride, pad):
    """x: NHWC -> (N*OH*OW, kh*kw*C) in x.dtype, tap-major column order."""
    N, H, W, C = x.shape
    xp = jnp.pad(x, ((0, 0), (pad, pad), (pad, pad), (0, 0)))
    OH = (H + 2 * pad - kh) // stride + 1
    OW = (W + 2 * pad - kw) // stride + 1
    patches = []
    for i in range(kh):
        for j in range(kw):
            patches.append(xp[:, i:i + stride * OH:stride,
                               j:j + stride * OW:stride, :])
    col = jnp.stack(patches, axis=3)                 # (N, OH, OW, kh*kw, C)
    return col.reshape(N * OH * OW, kh * kw * C), OH, OW


def maxpool_3x3_s2_p1(x):
    """XLA-fused strided-slice max tree (no 9x window-stack materialization)."""
    N, H, W, C = x.shape
    OH = (H - 1) // 2 + 1
    OW = (W - 1) // 2 + 1
    xp = jnp.pad(x, ((0, 0), (1, 1), (1, 1), (0, 0)),
                 constant_values=-jnp.inf)
    out = None
    for i in range(3):
        for j in range(3):
            s = xp[:, i:i + 2 * OH:2, j:j + 2 * OW:2, :]
            out = s if out is None else jnp.maximum(out, s)
    return out


# ---------------------------------------------------------------------------
# Parameter init (deterministic, synthetic — no checkpoint load)
# ---------------------------------------------------------------------------
def init_params(key):
    def conv_w(k, shape):
        fan_in = shape[1] * shape[2] * shape[3]
        return (jax.random.normal(k, shape, jnp.float32)
                * jnp.sqrt(2.0 / fan_in))

    def bn_p(k, c):
        k1, k2, k3, k4 = jax.random.split(k, 4)
        gamma = 1.0 + 0.1 * jax.random.normal(k1, (c,), jnp.float32)
        beta = 0.1 * jax.random.normal(k2, (c,), jnp.float32)
        mean = 0.1 * jax.random.normal(k3, (c,), jnp.float32)
        var = 1.0 + 0.5 * jax.random.uniform(k4, (c,), jnp.float32)
        return (gamma, beta, mean, var)

    keys = jax.random.split(key, 4 + NUM_LAYERS_BLOCK1)
    params = {
        "conv0": conv_w(keys[0], (NUM_INIT, 3, 7, 7)),
        "norm0": bn_p(keys[1], NUM_INIT),
        "dense_layers": [],
    }
    for i in range(NUM_LAYERS_BLOCK1):
        in_ch = NUM_INIT + GROWTH * i
        lk = jax.random.split(keys[4 + i], 4)
        params["dense_layers"].append({
            "norm1": bn_p(lk[0], in_ch),
            "conv1": conv_w(lk[1], (BN_SIZE * GROWTH, in_ch, 1, 1)),
            "norm2": bn_p(lk[2], BN_SIZE * GROWTH),
            "conv2": conv_w(lk[3], (GROWTH, BN_SIZE * GROWTH, 3, 3)),
        })
    params["trans_norm"] = bn_p(keys[2], C_BLOCK)
    params["trans_conv"] = conv_w(keys[3], (C_BLOCK // 2, C_BLOCK, 1, 1))
    return params


# ---------------------------------------------------------------------------
# One-time parameter preparation: fold BN, reshape/pad weights, cast to bf16
# ---------------------------------------------------------------------------
def _bn_scale_bias(bn, eps=1e-5):
    gamma, beta, mean, var = bn
    scale = gamma / jnp.sqrt(var + eps)
    bias = beta - mean * scale
    return scale, bias


def _conv_w_mat(w_oihw):
    Cout, Cin, kh, kw = w_oihw.shape
    return jnp.transpose(w_oihw, (2, 3, 1, 0)).reshape(kh * kw * Cin, Cout)


def prepare_params(params, eps=1e-5):
    def pad_cols(m, n):
        return jnp.pad(m, ((0, 0), (0, n - m.shape[1])))

    def pad_rows(m, n):
        return jnp.pad(m, ((0, n - m.shape[0]), (0, 0)))

    def pad_vec(v, n, fill):
        return jnp.concatenate(
            [v, jnp.full((n - v.shape[0],), fill, v.dtype)]).reshape(1, n)

    prep = {}

    # conv0 folded with norm0 (+relu0) as epilogue; K 147->256, N 64->128.
    w0 = _conv_w_mat(params["conv0"])                         # (147, 64)
    k0p = _round_up(w0.shape[0], LANE)                        # 256
    w0 = pad_cols(pad_rows(w0, k0p), LANE)                    # (256, 128)
    s0, b0 = _bn_scale_bias(params["norm0"], eps)
    prep["conv0_w"] = w0.astype(jnp.bfloat16)
    prep["conv0_s"] = pad_vec(s0, LANE, 1.0).astype(jnp.float32)
    prep["conv0_b"] = pad_vec(b0, LANE, 0.0).astype(jnp.float32)

    # dense block 1 layers: w1 reads the full 256-ch slab (zero weights /
    # scale / bias for channels not yet written); w2 stored per-tap (9,128,128).
    prep["dense_layers"] = []
    for lp in params["dense_layers"]:
        s1, b1 = _bn_scale_bias(lp["norm1"], eps)
        w1 = pad_rows(_conv_w_mat(lp["conv1"]), C_BLOCK)      # (256, 128)
        s2, b2 = _bn_scale_bias(lp["norm2"], eps)
        wc2 = lp["conv2"]                                     # (32, 128, 3, 3)
        taps = []
        for i in range(3):
            for j in range(3):
                wt = jnp.transpose(wc2[:, :, i, j], (1, 0))   # (128, 32)
                taps.append(pad_cols(wt, LANE))               # (128, 128)
        w2 = jnp.stack(taps, axis=0)                          # (9, 128, 128)
        prep["dense_layers"].append({
            "w1": w1.astype(jnp.bfloat16),
            "s1": pad_vec(s1, C_BLOCK, 0.0).astype(jnp.float32),
            "b1": pad_vec(b1, C_BLOCK, 0.0).astype(jnp.float32),
            "w2": w2.astype(jnp.bfloat16),
            "s2": s2.reshape(1, -1).astype(jnp.float32),
            "b2": b2.reshape(1, -1).astype(jnp.float32),
        })

    # transition: BN/ReLU prologue + [1x1 conv then 2x2 avgpool] expressed as
    # a single 2x2 stride-2 conv with weights 0.25*W at every tap (exact).
    st, bt = _bn_scale_bias(params["trans_norm"], eps)
    wt = _conv_w_mat(params["trans_conv"])                    # (256, 128)
    wt4 = 0.25 * jnp.concatenate([wt, wt, wt, wt], axis=0)    # (1024, 128)
    prep["trans_w"] = wt4.astype(jnp.bfloat16)
    prep["trans_s"] = jnp.tile(st, 4).reshape(1, -1).astype(jnp.float32)
    prep["trans_b"] = jnp.tile(bt, 4).reshape(1, -1).astype(jnp.float32)
    return prep


# ---------------------------------------------------------------------------
# Forward pass (NHWC internally, bf16 activations, f32 accumulation)
# ---------------------------------------------------------------------------
def feature_extractor(img_nchw, prep):
    x = jnp.transpose(img_nchw.astype(jnp.float32),
                      (0, 2, 3, 1)).astype(jnp.bfloat16)       # NHWC bf16
    N = x.shape[0]

    # conv0 (7x7/s2/p3) with norm0+relu0 fused as matmul epilogue
    col, H1, W1 = _im2col(x, 7, 7, 2, 3)                       # (M0, 147)
    col = jnp.pad(col, ((0, 0), (0, prep["conv0_w"].shape[0] - col.shape[1])))
    y = fused_matmul(col, prep["conv0_w"], prep["conv0_s"], prep["conv0_b"],
                     _matmul_out_fused_kernel)[:, :NUM_INIT]
    x = y.reshape(N, H1, W1, NUM_INIT)

    # pool0: 3x3/s2/p1 max pool
    x = maxpool_3x3_s2_p1(x)
    _, H2, W2, _ = x.shape

    # denseblock1: preallocated 256-channel NHWC slab updated in place
    feats = jnp.pad(x, ((0, 0), (0, 0), (0, 0), (0, C_BLOCK - NUM_INIT)))
    for i, lp in enumerate(prep["dense_layers"]):
        y2 = dense_layer(feats, lp["w1"], lp["s1"], lp["b1"],
                         lp["w2"], lp["s2"], lp["b2"])[..., :GROWTH]
        feats = jax.lax.dynamic_update_slice(
            feats, y2, (0, 0, 0, NUM_INIT + GROWTH * i))

    # transition1: BN+ReLU prologue + (1x1 conv ∘ 2x2 avgpool) as one matmul
    colT, HT, WT = _im2col(feats, 2, 2, 2, 0)
    t = fused_matmul(colT, prep["trans_w"], prep["trans_s"], prep["trans_b"],
                     _matmul_in_fused_kernel)                  # (N*HT*WT, 128)
    t = t.reshape(N, HT, WT, C_BLOCK // 2)
    return jnp.transpose(t, (0, 3, 1, 2)).astype(jnp.float32)  # NCHW f32


if __name__ == "__main__":
    key = jax.random.PRNGKey(0)
    pkey, xkey = jax.random.split(key)
    params = init_params(pkey)
    prep = prepare_params(params)

    # Small RGB batch: (N=2, C=3, H=32, W=32) -> output (2, 128, 4, 4)
    img = jax.random.normal(xkey, (2, 3, 32, 32), jnp.float32)

    fwd = jax.jit(feature_extractor)
    out = fwd(img, prep)
    out = jax.block_until_ready(out)
    assert out.shape == (2, 128, 4, 4), out.shape
    assert bool(jnp.all(jnp.isfinite(out)))
    print("KERNEL_OK")
</pallas_src>

<mosaic_0001>
module attributes {stable_mosaic.version = 11 : i64} {
  func.func @_matmul_out_fused_kernel(%arg0: i32, %arg1: memref<256x256xbf16, #tpu.memory_space<vmem>>, %arg2: memref<256x128xbf16, #tpu.memory_space<vmem>>, %arg3: memref<1x128xf32, #tpu.memory_space<vmem>>, %arg4: memref<1x128xf32, #tpu.memory_space<vmem>>, %arg5: memref<256x128xbf16, #tpu.memory_space<vmem>>) attributes {dimension_semantics = [#tpu.dimension_semantics<parallel>], iteration_bounds = array<i64: 2>, scalar_prefetch = 0 : i64, scratch_operands = 0 : i64, tpu.core_type = #tpu.core_type<tc>, window_params = [{transform_indices = @transform_0, window_bounds = array<i64: 256, 256>}, {pipeline_mode = #tpu.pipeline_mode<synchronous>, transform_indices = @transform_1, window_bounds = array<i64: 256, 128>}, {pipeline_mode = #tpu.pipeline_mode<synchronous>, transform_indices = @transform_2, window_bounds = array<i64: 1, 128>}, {pipeline_mode = #tpu.pipeline_mode<synchronous>, transform_indices = @transform_3, window_bounds = array<i64: 1, 128>}, {transform_indices = @transform_4, window_bounds = array<i64: 256, 128>}]} {
    %c0 = arith.constant 0 : index
    %c0_0 = arith.constant 0 : index
    %0 = vector.load %arg1[%c0, %c0_0] : memref<256x256xbf16, #tpu.memory_space<vmem>>, vector<256x256xbf16>
    %c0_1 = arith.constant 0 : index
    %c0_2 = arith.constant 0 : index
    %1 = vector.load %arg2[%c0_1, %c0_2] : memref<256x128xbf16, #tpu.memory_space<vmem>>, vector<256x128xbf16>
    %cst = arith.constant dense<0.000000e+00> : vector<256x128xf32>
    %2 = tpu.matmul %0, %1, %cst {dimension_numbers = #tpu.dot_dimension_numbers<[1], [0], [0], [1], [0, 0, 1, 1], [], []>} : vector<256x256xbf16>, vector<256x128xbf16>, vector<256x128xf32> -> vector<256x128xf32>
    %c0_3 = arith.constant 0 : index
    %c0_4 = arith.constant 0 : index
    %3 = vector.load %arg3[%c0_3, %c0_4] : memref<1x128xf32, #tpu.memory_space<vmem>>, vector<1x128xf32>
    %4 = vector.broadcast %3 : vector<1x128xf32> to vector<256x128xf32>
    %5 = arith.mulf %2, %4 : vector<256x128xf32>
    %c0_5 = arith.constant 0 : index
    %c0_6 = arith.constant 0 : index
    %6 = vector.load %arg4[%c0_5, %c0_6] : memref<1x128xf32, #tpu.memory_space<vmem>>, vector<1x128xf32>
    %7 = vector.broadcast %6 : vector<1x128xf32> to vector<256x128xf32>
    %8 = arith.addf %5, %7 : vector<256x128xf32>
    %cst_7 = arith.constant 0.000000e+00 : f32
    %9 = vector.broadcast %cst_7 : f32 to vector<256x128xf32>
    %10 = arith.maximumf %8, %9 : vector<256x128xf32>
    %11 = arith.truncf %10 : vector<256x128xf32> to vector<256x128xbf16>
    %c0_8 = arith.constant 0 : index
    %c0_9 = arith.constant 0 : index
    %12 = vector.load %arg5[%c0_8, %c0_9] : memref<256x128xbf16, #tpu.memory_space<vmem>>, vector<256x128xbf16>
    tpu.vector_store %arg5[%c0_8, %c0_9], %11 {strides = array<i32>} : memref<256x128xbf16, #tpu.memory_space<vmem>>, vector<256x128xbf16>,
    return
  }
  func.func @transform_0(%arg0: i32) -> (i32, i32) {
    %c0_i32 = arith.constant 0 : i32
    %c0_i32_0 = arith.constant 0 : i32
    return %arg0, %c0_i32 : i32, i32
  }
  func.func @transform_1(%arg0: i32) -> (i32, i32) {
    %c0_i32 = arith.constant 0 : i32
    %c0_i32_0 = arith.constant 0 : i32
    %c0_i32_1 = arith.constant 0 : i32
    return %c0_i32, %c0_i32_0 : i32, i32
  }
  func.func @transform_2(%arg0: i32) -> (i32, i32) {
    %c0_i32 = arith.constant 0 : i32
    %c0_i32_0 = arith.constant 0 : i32
    %c0_i32_1 = arith.constant 0 : i32
    return %c0_i32, %c0_i32_0 : i32, i32
  }
  func.func @transform_3(%arg0: i32) -> (i32, i32) {
    %c0_i32 = arith.constant 0 : i32
    %c0_i32_0 = arith.constant 0 : i32
    %c0_i32_1 = arith.constant 0 : i32
    return %c0_i32, %c0_i32_0 : i32, i32
  }
  func.func @transform_4(%arg0: i32) -> (i32, i32) {
    %c0_i32 = arith.constant 0 : i32
    %c0_i32_0 = arith.constant 0 : i32
    return %arg0, %c0_i32 : i32, i32
  }
}

module attributes {stable_mosaic.version = 11 : i64} {
  func.func @_dense_layer_kernel(%arg0: i32, %arg1: memref<1x8x8x256xbf16, #tpu.memory_space<vmem>>, %arg2: memref<256x128xbf16, #tpu.memory_space<vmem>>, %arg3: memref<1x256xf32, #tpu.memory_space<vmem>>, %arg4: memref<1x256xf32, #tpu.memory_space<vmem>>, %arg5: memref<9x128x128xbf16, #tpu.memory_space<vmem>>, %arg6: memref<1x128xf32, #tpu.memory_space<vmem>>, %arg7: memref<1x128xf32, #tpu.memory_space<vmem>>, %arg8: memref<1x8x8x128xbf16, #tpu.memory_space<vmem>>, %arg9: memref<10x10x128xbf16, #tpu.memory_space<vmem>>) attributes {dimension_semantics = [#tpu.dimension_semantics<parallel>], iteration_bounds = array<i64: 2>, scalar_prefetch = 0 : i64, scratch_operands = 1 : i64, tpu.core_type = #tpu.core_type<tc>, window_params = [{transform_indices = @transform_0, window_bounds = array<i64: 1, 8, 8, 256>}, {pipeline_mode = #tpu.pipeline_mode<synchronous>, transform_indices = @transform_1, window_bounds = array<i64: 256, 128>}, {pipeline_mode = #tpu.pipeline_mode<synchronous>, transform_indices = @transform_2, window_bounds = array<i64: 1, 256>}, {pipeline_mode = #tpu.pipeline_mode<synchronous>, transform_indices = @transform_3, window_bounds = array<i64: 1, 256>}, {pipeline_mode = #tpu.pipeline_mode<synchronous>, transform_indices = @transform_4, window_bounds = array<i64: 9, 128, 128>}, {pipeline_mode = #tpu.pipeline_mode<synchronous>, transform_indices = @transform_5, window_bounds = array<i64: 1, 128>}, {pipeline_mode = #tpu.pipeline_mode<synchronous>, transform_indices = @transform_6, window_bounds = array<i64: 1, 128>}, {transform_indices = @transform_7, window_bounds = array<i64: 1, 8, 8, 128>}]} {
    %c0 = arith.constant 0 : index
    %c0_0 = arith.constant 0 : index
    %c0_1 = arith.constant 0 : index
    %c0_2 = arith.constant 0 : index
    %0 = vector.load %arg1[%c0, %c0_0, %c0_1, %c0_2] : memref<1x8x8x256xbf16, #tpu.memory_space<vmem>>, vector<1x8x8x256xbf16>
    %1 = vector.shape_cast %0 : vector<1x8x8x256xbf16> to vector<64x256xbf16>
    %2 = arith.extf %1 : vector<64x256xbf16> to vector<64x256xf32>
    %c0_3 = arith.constant 0 : index
    %c0_4 = arith.constant 0 : index
    %3 = vector.load %arg3[%c0_3, %c0_4] : memref<1x256xf32, #tpu.memory_space<vmem>>, vector<1x256xf32>
    %4 = vector.broadcast %3 : vector<1x256xf32> to vector<64x256xf32>
    %5 = arith.mulf %2, %4 : vector<64x256xf32>
    %c0_5 = arith.constant 0 : index
    %c0_6 = arith.constant 0 : index
    %6 = vector.load %arg4[%c0_5, %c0_6] : memref<1x256xf32, #tpu.memory_space<vmem>>, vector<1x256xf32>
    %7 = vector.broadcast %6 : vector<1x256xf32> to vector<64x256xf32>
    %8 = arith.addf %5, %7 : vector<64x256xf32>
    %cst = arith.constant 0.000000e+00 : f32
    %9 = vector.broadcast %cst : f32 to vector<64x256xf32>
    %10 = arith.maximumf %8, %9 : vector<64x256xf32>
    %11 = arith.truncf %10 : vector<64x256xf32> to vector<64x256xbf16>
    %c0_7 = arith.constant 0 : index
    %c0_8 = arith.constant 0 : index
    %12 = vector.load %arg2[%c0_7, %c0_8] : memref<256x128xbf16, #tpu.memory_space<vmem>>, vector<256x128xbf16>
    %cst_9 = arith.constant dense<0.000000e+00> : vector<64x128xf32>
    %13 = tpu.matmul %11, %12, %cst_9 {dimension_numbers = #tpu.dot_dimension_numbers<[1], [0], [0], [1], [0, 0, 1, 1], [], []>} : vector<64x256xbf16>, vector<256x128xbf16>, vector<64x128xf32> -> vector<64x128xf32>
    %c0_10 = arith.constant 0 : index
    %c0_11 = arith.constant 0 : index
    %14 = vector.load %arg6[%c0_10, %c0_11] : memref<1x128xf32, #tpu.memory_space<vmem>>, vector<1x128xf32>
    %15 = vector.broadcast %14 : vector<1x128xf32> to vector<64x128xf32>
    %16 = arith.mulf %13, %15 : vector<64x128xf32>
    %c0_12 = arith.constant 0 : index
    %c0_13 = arith.constant 0 : index
    %17 = vector.load %arg7[%c0_12, %c0_13] : memref<1x128xf32, #tpu.memory_space<vmem>>, vector<1x128xf32>
    %18 = vector.broadcast %17 : vector<1x128xf32> to vector<64x128xf32>
    %19 = arith.addf %16, %18 : vector<64x128xf32>
    %cst_14 = arith.constant 0.000000e+00 : f32
    %20 = vector.broadcast %cst_14 : f32 to vector<64x128xf32>
    %21 = arith.maximumf %19, %20 : vector<64x128xf32>
    %22 = arith.truncf %21 : vector<64x128xf32> to vector<64x128xbf16>
    %cst_15 = arith.constant 0.000000e+00 : bf16
    %23 = vector.broadcast %cst_15 : bf16 to vector<10x10x128xbf16>
    %c0_16 = arith.constant 0 : index
    %c0_17 = arith.constant 0 : index
    %c0_18 = arith.constant 0 : index
    %24 = vector.load %arg9[%c0_16, %c0_17, %c0_18] : memref<10x10x128xbf16, #tpu.memory_space<vmem>>, vector<10x10x128xbf16>
    tpu.vector_store %arg9[%c0_16, %c0_17, %c0_18], %23 {strides = array<i32>} : memref<10x10x128xbf16, #tpu.memory_space<vmem>>, vector<10x10x128xbf16>,
    %25 = vector.shape_cast %22 : vector<64x128xbf16> to vector<8x8x128xbf16>
    %c1 = arith.constant 1 : index
    %c1_19 = arith.constant 1 : index
    %c0_20 = arith.constant 0 : index
    %26 = vector.load %arg9[%c1, %c1_19, %c0_20] : memref<10x10x128xbf16, #tpu.memory_space<vmem>>, vector<8x8x128xbf16>
    tpu.vector_store %arg9[%c1, %c1_19, %c0_20], %25 {strides = array<i32>} : memref<10x10x128xbf16, #tpu.memory_space<vmem>>, vector<8x8x128xbf16>,
    %cst_21 = arith.constant 0.000000e+00 : f32
    %27 = vector.broadcast %cst_21 : f32 to vector<64x128xf32>
    %c0_22 = arith.constant 0 : index
    %c0_23 = arith.constant 0 : index
    %c0_24 = arith.constant 0 : index
    %28 = vector.load %arg9[%c0_22, %c0_23, %c0_24] : memref<10x10x128xbf16, #tpu.memory_space<vmem>>, vector<8x8x128xbf16>
    %29 = vector.shape_cast %28 : vector<8x8x128xbf16> to vector<64x128xbf16>
    %c0_25 = arith.constant 0 : index
    %c0_26 = arith.constant 0 : index
    %c0_27 = arith.constant 0 : index
    %30 = vector.load %arg5[%c0_25, %c0_26, %c0_27] : memref<9x128x128xbf16, #tpu.memory_space<vmem>>, vector<1x128x128xbf16>
    %31 = vector.shape_cast %30 : vector<1x128x128xbf16> to vector<128x128xbf16>
    %cst_28 = arith.constant dense<0.000000e+00> : vector<64x128xf32>
    %32 = tpu.matmul %29, %31, %cst_28 {dimension_numbers = #tpu.dot_dimension_numbers<[1], [0], [0], [1], [0, 0, 1, 1], [], []>} : vector<64x128xbf16>, vector<128x128xbf16>, vector<64x128xf32> -> vector<64x128xf32>
    %33 = arith.addf %27, %32 : vector<64x128xf32>
    %c0_29 = arith.constant 0 : index
    %c1_30 = arith.constant 1 : index
    %c0_31 = arith.constant 0 : index
    %34 = vector.load %arg9[%c0_29, %c1_30, %c0_31] : memref<10x10x128xbf16, #tpu.memory_space<vmem>>, vector<8x8x128xbf16>
    %35 = vector.shape_cast %34 : vector<8x8x128xbf16> to vector<64x128xbf16>
    %c1_32 = arith.constant 1 : index
    %c0_33 = arith.constant 0 : index
    %c0_34 = arith.constant 0 : index
    %36 = vector.load %arg5[%c1_32, %c0_33, %c0_34] : memref<9x128x128xbf16, #tpu.memory_space<vmem>>, vector<1x128x128xbf16>
    %37 = vector.shape_cast %36 : vector<1x128x128xbf16> to vector<128x128xbf16>
    %cst_35 = arith.constant dense<0.000000e+00> : vector<64x128xf32>
    %38 = tpu.matmul %35, %37, %cst_35 {dimension_numbers = #tpu.dot_dimension_numbers<[1], [0], [0], [1], [0, 0, 1, 1], [], []>} : vector<64x128xbf16>, vector<128x128xbf16>, vector<64x128xf32> -> vector<64x128xf32>
    %39 = arith.addf %33, %38 : vector<64x128xf32>
    %c0_36 = arith.constant 0 : index
    %c2 = arith.constant 2 : index
    %c0_37 = arith.constant 0 : index
    %40 = vector.load %arg9[%c0_36, %c2, %c0_37] : memref<10x10x128xbf16, #tpu.memory_space<vmem>>, vector<8x8x128xbf16>
    %41 = vector.shape_cast %40 : vector<8x8x128xbf16> to vector<64x128xbf16>
    %c2_38 = arith.constant 2 : index
    %c0_39 = arith.constant 0 : index
    %c0_40 = arith.constant 0 : index
    %42 = vector.load %arg5[%c2_38, %c0_39, %c0_40] : memref<9x128x128xbf16, #tpu.memory_space<vmem>>, vector<1x128x128xbf16>
    %43 = vector.shape_cast %42 : vector<1x128x128xbf16> to vector<128x128xbf16>
    %cst_41 = arith.constant dense<0.000000e+00> : vector<64x128xf32>
    %44 = tpu.matmul %41, %43, %cst_41 {dimension_numbers = #tpu.dot_dimension_numbers<[1], [0], [0], [1], [0, 0, 1, 1], [], []>} : vector<64x128xbf16>, vector<128x128xbf16>, vector<64x128xf32> -> vector<64x128xf32>
    %45 = arith.addf %39, %44 : vector<64x128xf32>
    %c1_42 = arith.constant 1 : index
    %c0_43 = arith.constant 0 : index
    %c0_44 = arith.constant 0 : index
    %46 = vector.load %arg9[%c1_42, %c0_43, %c0_44] : memref<10x10x128xbf16, #tpu.memory_space<vmem>>, vector<8x8x128xbf16>
    %47 = vector.shape_cast %46 : vector<8x8x128xbf16> to vector<64x128xbf16>
    %c3 = arith.constant 3 : index
    %c0_45 = arith.constant 0 : index
    %c0_46 = arith.constant 0 : index
    %48 = vector.load %arg5[%c3, %c0_45, %c0_46] : memref<9x128x128xbf16, #tpu.memory_space<vmem>>, vector<1x128x128xbf16>
    %49 = vector.shape_cast %48 : vector<1x128x128xbf16> to vector<128x128xbf16>
    %cst_47 = arith.constant dense<0.000000e+00> : vector<64x128xf32>
    %50 = tpu.matmul %47, %49, %cst_47 {dimension_numbers = #tpu.dot_dimension_numbers<[1], [0], [0], [1], [0, 0, 1, 1], [], []>} : vector<64x128xbf16>, vector<128x128xbf16>, vector<64x128xf32> -> vector<64x128xf32>
    %51 = arith.addf %45, %50 : vector<64x128xf32>
    %c1_48 = arith.constant 1 : index
    %c1_49 = arith.constant 1 : index
    %c0_50 = arith.constant 0 : index
    %52 = vector.load %arg9[%c1_48, %c1_49, %c0_50] : memref<10x10x128xbf16, #tpu.memory_space<vmem>>, vector<8x8x128xbf16>
    %53 = vector.shape_cast %52 : vector<8x8x128xbf16> to vector<64x128xbf16>
    %c4 = arith.constant 4 : index
    %c0_51 = arith.constant 0 : index
    %c0_52 = arith.constant 0 : index
    %54 = vector.load %arg5[%c4, %c0_51, %c0_52] : memref<9x128x128xbf16, #tpu.memory_space<vmem>>, vector<1x128x128xbf16>
    %55 = vector.shape_cast %54 : vector<1x128x128xbf16> to vector<128x128xbf16>
    %cst_53 = arith.constant dense<0.000000e+00> : vector<64x128xf32>
    %56 = tpu.matmul %53, %55, %cst_53 {dimension_numbers = #tpu.dot_dimension_numbers<[1], [0], [0], [1], [0, 0, 1, 1], [], []>} : vector<64x128xbf16>, vector<128x128xbf16>, vector<64x128xf32> -> vector<64x128xf32>
    %57 = arith.addf %51, %56 : vector<64x128xf32>
    %c1_54 = arith.constant 1 : index
    %c2_55 = arith.constant 2 : index
    %c0_56 = arith.constant 0 : index
    %58 = vector.load %arg9[%c1_54, %c2_55, %c0_56] : memref<10x10x128xbf16, #tpu.memory_space<vmem>>, vector<8x8x128xbf16>
    %59 = vector.shape_cast %58 : vector<8x8x128xbf16> to vector<64x128xbf16>
    %c5 = arith.constant 5 : index
    %c0_57 = arith.constant 0 : index
    %c0_58 = arith.constant 0 : index
    %60 = vector.load %arg5[%c5, %c0_57, %c0_58] : memref<9x128x128xbf16, #tpu.memory_space<vmem>>, vector<1x128x128xbf16>
    %61 = vector.shape_cast %60 : vector<1x128x128xbf16> to vector<128x128xbf16>
    %cst_59 = arith.constant dense<0.000000e+00> : vector<64x128xf32>
    %62 = tpu.matmul %59, %61, %cst_59 {dimension_numbers = #tpu.dot_dimension_numbers<[1], [0], [0], [1], [0, 0, 1, 1], [], []>} : vector<64x128xbf16>, vector<128x128xbf16>, vector<64x128xf32> -> vector<64x128xf32>
    %63 = arith.addf %57, %62 : vector<64x128xf32>
    %c2_60 = arith.constant 2 : index
    %c0_61 = arith.constant 0 : index
    %c0_62 = arith.constant 0 : index
    %64 = vector.load %arg9[%c2_60, %c0_61, %c0_62] : memref<10x10x128xbf16, #tpu.memory_space<vmem>>, vector<8x8x128xbf16>
    %65 = vector.shape_cast %64 : vector<8x8x128xbf16> to vector<64x128xbf16>
    %c6 = arith.constant 6 : index
    %c0_63 = arith.constant 0 : index
    %c0_64 = arith.constant 0 : index
    %66 = vector.load %arg5[%c6, %c0_63, %c0_64] : memref<9x128x128xbf16, #tpu.memory_space<vmem>>, vector<1x128x128xbf16>
    %67 = vector.shape_cast %66 : vector<1x128x128xbf16> to vector<128x128xbf16>
    %cst_65 = arith.constant dense<0.000000e+00> : vector<64x128xf32>
    %68 = tpu.matmul %65, %67, %cst_65 {dimension_numbers = #tpu.dot_dimension_numbers<[1], [0], [0], [1], [0, 0, 1, 1], [], []>} : vector<64x128xbf16>, vector<128x128xbf16>, vector<64x128xf32> -> vector<64x128xf32>
    %69 = arith.addf %63, %68 : vector<64x128xf32>
    %c2_66 = arith.constant 2 : index
    %c1_67 = arith.constant 1 : index
    %c0_68 = arith.constant 0 : index
    %70 = vector.load %arg9[%c2_66, %c1_67, %c0_68] : memref<10x10x128xbf16, #tpu.memory_space<vmem>>, vector<8x8x128xbf16>
    %71 = vector.shape_cast %70 : vector<8x8x128xbf16> to vector<64x128xbf16>
    %c7 = arith.constant 7 : index
    %c0_69 = arith.constant 0 : index
    %c0_70 = arith.constant 0 : index
    %72 = vector.load %arg5[%c7, %c0_69, %c0_70] : memref<9x128x128xbf16, #tpu.memory_space<vmem>>, vector<1x128x128xbf16>
    %73 = vector.shape_cast %72 : vector<1x128x128xbf16> to vector<128x128xbf16>
    %cst_71 = arith.constant dense<0.000000e+00> : vector<64x128xf32>
    %74 = tpu.matmul %71, %73, %cst_71 {dimension_numbers = #tpu.dot_dimension_numbers<[1], [0], [0], [1], [0, 0, 1, 1], [], []>} : vector<64x128xbf16>, vector<128x128xbf16>, vector<64x128xf32> -> vector<64x128xf32>
    %75 = arith.addf %69, %74 : vector<64x128xf32>
    %c2_72 = arith.constant 2 : index
    %c2_73 = arith.constant 2 : index
    %c0_74 = arith.constant 0 : index
    %76 = vector.load %arg9[%c2_72, %c2_73, %c0_74] : memref<10x10x128xbf16, #tpu.memory_space<vmem>>, vector<8x8x128xbf16>
    %77 = vector.shape_cast %76 : vector<8x8x128xbf16> to vector<64x128xbf16>
    %c8 = arith.constant 8 : index
    %c0_75 = arith.constant 0 : index
    %c0_76 = arith.constant 0 : index
    %78 = vector.load %arg5[%c8, %c0_75, %c0_76] : memref<9x128x128xbf16, #tpu.memory_space<vmem>>, vector<1x128x128xbf16>
    %79 = vector.shape_cast %78 : vector<1x128x128xbf16> to vector<128x128xbf16>
    %cst_77 = arith.constant dense<0.000000e+00> : vector<64x128xf32>
    %80 = tpu.matmul %77, %79, %cst_77 {dimension_numbers = #tpu.dot_dimension_numbers<[1], [0], [0], [1], [0, 0, 1, 1], [], []>} : vector<64x128xbf16>, vector<128x128xbf16>, vector<64x128xf32> -> vector<64x128xf32>
    %81 = arith.addf %75, %80 : vector<64x128xf32>
    %82 = vector.shape_cast %81 : vector<64x128xf32> to vector<1x8x8x128xf32>
    %83 = arith.truncf %82 : vector<1x8x8x128xf32> to vector<1x8x8x128xbf16>
    %c0_78 = arith.constant 0 : index
    %c0_79 = arith.constant 0 : index
    %c0_80 = arith.constant 0 : index
    %c0_81 = arith.constant 0 : index
    %84 = vector.load %arg8[%c0_78, %c0_79, %c0_80, %c0_81] : memref<1x8x8x128xbf16, #tpu.memory_space<vmem>>, vector<1x8x8x128xbf16>
    tpu.vector_store %arg8[%c0_78, %c0_79, %c0_80, %c0_81], %83 {strides = array<i32>} : memref<1x8x8x128xbf16, #tpu.memory_space<vmem>>, vector<1x8x8x128xbf16>,
    return
  }
  func.func @transform_0(%arg0: i32) -> (i32, i32, i32, i32) {
    %c0_i32 = arith.constant 0 : i32
    %c0_i32_0 = arith.constant 0 : i32
    %c0_i32_1 = arith.constant 0 : i32
    %c0_i32_2 = arith.constant 0 : i32
    return %arg0, %c0_i32, %c0_i32_0, %c0_i32_1 : i32, i32, i32, i32
  }
  func.func @transform_1(%arg0: i32) -> (i32, i32) {
    %c0_i32 = arith.constant 0 : i32
    %c0_i32_0 = arith.constant 0 : i32
    %c0_i32_1 = arith.constant 0 : i32
    return %c0_i32, %c0_i32_0 : i32, i32
  }
  func.func @transform_2(%arg0: i32) -> (i32, i32) {
    %c0_i32 = arith.constant 0 : i32
    %c0_i32_0 = arith.constant 0 : i32
    %c0_i32_1 = arith.constant 0 : i32
    return %c0_i32, %c0_i32_0 : i32, i32
  }
  func.func @transform_3(%arg0: i32) -> (i32, i32) {
    %c0_i32 = arith.constant 0 : i32
    %c0_i32_0 = arith.constant 0 : i32
    %c0_i32_1 = arith.constant 0 : i32
    return %c0_i32, %c0_i32_0 : i32, i32
  }
  func.func @transform_4(%arg0: i32) -> (i32, i32, i32) {
    %c0_i32 = arith.constant 0 : i32
    %c0_i32_0 = arith.constant 0 : i32
    %c0_i32_1 = arith.constant 0 : i32
    %c0_i32_2 = arith.constant 0 : i32
    return %c0_i32, %c0_i32_0, %c0_i32_1 : i32, i32, i32
  }
  func.func @transform_5(%arg0: i32) -> (i32, i32) {
    %c0_i32 = arith.constant 0 : i32
    %c0_i32_0 = arith.constant 0 : i32
    %c0_i32_1 = arith.constant 0 : i32
    return %c0_i32, %c0_i32_0 : i32, i32
  }
  func.func @transform_6(%arg0: i32) -> (i32, i32) {
    %c0_i32 = arith.constant 0 : i32
    %c0_i32_0 = arith.constant 0 : i32
    %c0_i32_1 = arith.constant 0 : i32
    return %c0_i32, %c0_i32_0 : i32, i32
  }
  func.func @transform_7(%arg0: i32) -> (i32, i32, i32, i32) {
    %c0_i32 = arith.constant 0 : i32
    %c0_i32_0 = arith.constant 0 : i32
    %c0_i32_1 = arith.constant 0 : i32
    %c0_i32_2 = arith.constant 0 : i32
    return %arg0, %c0_i32, %c0_i32_0, %c0_i32_1 : i32, i32, i32, i32
  }
}

module attributes {stable_mosaic.version = 11 : i64} {
  func.func @_matmul_in_fused_kernel(%arg0: i32, %arg1: memref<128x1024xbf16, #tpu.memory_space<vmem>>, %arg2: memref<1024x128xbf16, #tpu.memory_space<vmem>>, %arg3: memref<1x1024xf32, #tpu.memory_space<vmem>>, %arg4: memref<1x1024xf32, #tpu.memory_space<vmem>>, %arg5: memref<128x128xbf16, #tpu.memory_space<vmem>>) attributes {dimension_semantics = [#tpu.dimension_semantics<parallel>], iteration_bounds = array<i64: 1>, scalar_prefetch = 0 : i64, scratch_operands = 0 : i64, tpu.core_type = #tpu.core_type<tc>, window_params = [{transform_indices = @transform_0, window_bounds = array<i64: 128, 1024>}, {pipeline_mode = #tpu.pipeline_mode<synchronous>, transform_indices = @transform_1, window_bounds = array<i64: 1024, 128>}, {pipeline_mode = #tpu.pipeline_mode<synchronous>, transform_indices = @transform_2, window_bounds = array<i64: 1, 1024>}, {pipeline_mode = #tpu.pipeline_mode<synchronous>, transform_indices = @transform_3, window_bounds = array<i64: 1, 1024>}, {transform_indices = @transform_4, window_bounds = array<i64: 128, 128>}]} {
    %c0 = arith.constant 0 : index
    %c0_0 = arith.constant 0 : index
    %0 = vector.load %arg1[%c0, %c0_0] : memref<128x1024xbf16, #tpu.memory_space<vmem>>, vector<128x1024xbf16>
    %1 = arith.extf %0 : vector<128x1024xbf16> to vector<128x1024xf32>
    %c0_1 = arith.constant 0 : index
    %c0_2 = arith.constant 0 : index
    %2 = vector.load %arg3[%c0_1, %c0_2] : memref<1x1024xf32, #tpu.memory_space<vmem>>, vector<1x1024xf32>
    %3 = vector.broadcast %2 : vector<1x1024xf32> to vector<128x1024xf32>
    %4 = arith.mulf %1, %3 : vector<128x1024xf32>
    %c0_3 = arith.constant 0 : index
    %c0_4 = arith.constant 0 : index
    %5 = vector.load %arg4[%c0_3, %c0_4] : memref<1x1024xf32, #tpu.memory_space<vmem>>, vector<1x1024xf32>
    %6 = vector.broadcast %5 : vector<1x1024xf32> to vector<128x1024xf32>
    %7 = arith.addf %4, %6 : vector<128x1024xf32>
    %cst = arith.constant 0.000000e+00 : f32
    %8 = vector.broadcast %cst : f32 to vector<128x1024xf32>
    %9 = arith.maximumf %7, %8 : vector<128x1024xf32>
    %10 = arith.truncf %9 : vector<128x1024xf32> to vector<128x1024xbf16>
    %c0_5 = arith.constant 0 : index
    %c0_6 = arith.constant 0 : index
    %11 = vector.load %arg2[%c0_5, %c0_6] : memref<1024x128xbf16, #tpu.memory_space<vmem>>, vector<1024x128xbf16>
    %cst_7 = arith.constant dense<0.000000e+00> : vector<128x128xf32>
    %12 = tpu.matmul %10, %11, %cst_7 {dimension_numbers = #tpu.dot_dimension_numbers<[1], [0], [0], [1], [0, 0, 1, 1], [], []>} : vector<128x1024xbf16>, vector<1024x128xbf16>, vector<128x128xf32> -> vector<128x128xf32>
    %13 = arith.truncf %12 : vector<128x128xf32> to vector<128x128xbf16>
    %c0_8 = arith.constant 0 : index
    %c0_9 = arith.constant 0 : index
    %14 = vector.load %arg5[%c0_8, %c0_9] : memref<128x128xbf16, #tpu.memory_space<vmem>>, vector<128x128xbf16>
    tpu.vector_store %arg5[%c0_8, %c0_9], %13 {strides = array<i32>} : memref<128x128xbf16, #tpu.memory_space<vmem>>, vector<128x128xbf16>,
    return
  }
  func.func @transform_0(%arg0: i32) -> (i32, i32) {
    %c0_i32 = arith.constant 0 : i32
    %c0_i32_0 = arith.constant 0 : i32
    return %arg0, %c0_i32 : i32, i32
  }
  func.func @transform_1(%arg0: i32) -> (i32, i32) {
    %c0_i32 = arith.constant 0 : i32
    %c0_i32_0 = arith.constant 0 : i32
    %c0_i32_1 = arith.constant 0 : i32
    return %c0_i32, %c0_i32_0 : i32, i32
  }
  func.func @transform_2(%arg0: i32) -> (i32, i32) {
    %c0_i32 = arith.constant 0 : i32
    %c0_i32_0 = arith.constant 0 : i32
    %c0_i32_1 = arith.constant 0 : i32
    return %c0_i32, %c0_i32_0 : i32, i32
  }
  func.func @transform_3(%arg0: i32) -> (i32, i32) {
    %c0_i32 = arith.constant 0 : i32
    %c0_i32_0 = arith.constant 0 : i32
    %c0_i32_1 = arith.constant 0 : i32
    return %c0_i32, %c0_i32_0 : i32, i32
  }
  func.func @transform_4(%arg0: i32) -> (i32, i32) {
    %c0_i32 = arith.constant 0 : i32
    %c0_i32_0 = arith.constant 0 : i32
    return %arg0, %c0_i32 : i32, i32
  }
}

</mosaic_0001>

<llo_original>
// kernel: feature_extractor.8
$region0: #{feature_extractor.8}
  #allocation0 [shape = 'u32[]', space=smem, size = 0x4, offset = 0x4, fixed_abs, tag = 'smem constant byte address 0x4 - core index']
  #allocation1 [shape = 'u32[144,128]{1,0:T(1,128)}', space=vmem, size = 0x12000, scoped, tag = 'internal scratch']
  %s0 = inlined_call_operand.vmem [shape: bf16[512,256], index: 0, kind: input, shape index: {}]
  %s1 = inlined_call_operand.vmem [shape: bf16[256,128], index: 1, kind: input, shape index: {}]
  %s2 = inlined_call_operand.vmem [shape: f32[1,128], index: 2, kind: input, shape index: {}]
  %s3 = inlined_call_operand.vmem [shape: f32[1,128], index: 3, kind: input, shape index: {}]
  %s4 = inlined_call_operand.vmem [shape: bf16[512,128], index: 4, kind: output, shape index: {}]
  %s5 = sld [smem:[#allocation0]]
  $region49: #{feature_extractor.8} parent=0
    _
  %s7 = ssub.s32 1, %s5
  %s8 = scalar_select 0, %s7, %s5
  loop: start=0, step=1, limit=4
  $region2: #{feature_extractor.8} parent=0 // loop_pre_header
    _
  $region3: #{feature_extractor.8} parent=0 // loop_header
    %s10 = sphi 0, %s14
    %p11 = scmp.ge.s32.totalorder %s10, 4
    %s20 = sphi 0, %s22
    %s23 = sphi 0, %s20
    %s24 = sphi 0, %s23
    %s40 = sphi 0, %s24
    %s44 = sphi 0, %s44
    %s46 = sphi 0, %s44
    %s47 = sphi 0, %s46
    %s61 = sphi 0, %s47
    %s65 = sphi 0, %s65
    %s67 = sphi 0, %s65
    %s68 = sphi 0, %s67
    %s82 = sphi 0, %s68
    %s86 = sphi 0, %s86
    %s88 = sphi 0, %s86
    %s89 = sphi 0, %s88
    %s103 = sphi 0, %s89
    %s109 = sphi 0, %s111
    %s112 = sphi 0, %s109
    %s113 = sphi 0, %s112
    %s129 = sphi 0, %s113
  $region4: #{feature_extractor.8} parent=0 // loop_header_branch
    %13 = sbr.rel (%p11) target = $region8
  $region5: #{feature_extractor.8} parent=0 // loop_body
    %s15 = ssub.s32 %s10, 1
    %s16 = ssub.s32 %s10, 2
    %s17 = sadd.s32 %s10, 1
    %s18 = ssub.s32 %s10, %s17
    %p19 = scmp.eq.s32.totalorder %s18, 0
    %s21 = sadd.s32 %s20, 1
    %s22 = scalar_select %p19, %s20, %s21
    %p25 = pneg %p19
    %p26 = scmp.eq.s32.totalorder %s10, 1
    %p27 = por %p25, %p26
    %p28 = scmp.ne.s32.totalorder %s20, %s23
    %p29 = scmp.eq.s32.totalorder %s10, 0
    %p30 = por %p28, %p29
    %p31 = scmp.ne.s32.totalorder %s20, %s23
    %p32 = scmp.eq.s32.totalorder %s15, 1
    %p33 = por %p31, %p32
    %p34 = scmp.ne.s32.totalorder %s23, %s24
    %p35 = scmp.eq.s32.totalorder %s15, 0
    %p36 = por %p34, %p35
    %p37 = scmp.ne.s32.totalorder %s23, %s24
    %p38 = scmp.eq.s32.totalorder %s16, 1
    %p39 = por %p37, %p38
    %p41 = scmp.ne.s32.totalorder %s24, %s40
    %p42 = scmp.eq.s32.totalorder %s16, 0
    %p43 = por %p41, %p42
    %s45 = sadd.s32 %s44, 1
    %p48 = scmp.eq.s32.totalorder %s10, 1
    %p49 = scmp.ne.s32.totalorder %s44, %s46
    %p50 = scmp.eq.s32.totalorder %s10, 0
    %p51 = por %p49, %p50
    %p52 = scmp.ne.s32.totalorder %s44, %s46
    %p53 = scmp.eq.s32.totalorder %s15, 1
    %p54 = por %p52, %p53
    %p55 = scmp.ne.s32.totalorder %s46, %s47
    %p56 = scmp.eq.s32.totalorder %s15, 0
    %p57 = por %p55, %p56
    %p58 = scmp.ne.s32.totalorder %s46, %s47
    %p59 = scmp.eq.s32.totalorder %s16, 1
    %p60 = por %p58, %p59
    %p62 = scmp.ne.s32.totalorder %s47, %s61
    %p63 = scmp.eq.s32.totalorder %s16, 0
    %p64 = por %p62, %p63
    %s66 = sadd.s32 %s65, 1
    %p69 = scmp.eq.s32.totalorder %s10, 1
    %p70 = scmp.ne.s32.totalorder %s65, %s67
    %p71 = scmp.eq.s32.totalorder %s10, 0
    %p72 = por %p70, %p71
    %p73 = scmp.ne.s32.totalorder %s65, %s67
    %p74 = scmp.eq.s32.totalorder %s15, 1
    %p75 = por %p73, %p74
    %p76 = scmp.ne.s32.totalorder %s67, %s68
    %p77 = scmp.eq.s32.totalorder %s15, 0
    %p78 = por %p76, %p77
    %p79 = scmp.ne.s32.totalorder %s67, %s68
    %p80 = scmp.eq.s32.totalorder %s16, 1
    %p81 = por %p79, %p80
    %p83 = scmp.ne.s32.totalorder %s68, %s82
    %p84 = scmp.eq.s32.totalorder %s16, 0
    %p85 = por %p83, %p84
    %s87 = sadd.s32 %s86, 1
    %p90 = scmp.eq.s32.totalorder %s10, 1
    %p91 = scmp.ne.s32.totalorder %s86, %s88
    %p92 = scmp.eq.s32.totalorder %s10, 0
    %p93 = por %p91, %p92
    %p94 = scmp.ne.s32.totalorder %s86, %s88
    %p95 = scmp.eq.s32.totalorder %s15, 1
    %p96 = por %p94, %p95
    %p97 = scmp.ne.s32.totalorder %s88, %s89
    %p98 = scmp.eq.s32.totalorder %s15, 0
    %p99 = por %p97, %p98
    %p100 = scmp.ne.s32.totalorder %s88, %s89
    %p101 = scmp.eq.s32.totalorder %s16, 1
    %p102 = por %p100, %p101
    %p104 = scmp.ne.s32.totalorder %s89, %s103
    %p105 = scmp.eq.s32.totalorder %s16, 0
    %p106 = por %p104, %p105
    %s107 = ssub.s32 %s10, %s17
    %p108 = scmp.eq.s32.totalorder %s107, 0
    %s110 = sadd.s32 %s109, 1
    %s111 = scalar_select %p108, %s109, %s110
    %p114 = pneg %p108
    %p115 = scmp.eq.s32.totalorder %s10, 1
    %p116 = por %p114, %p115
    %p117 = scmp.ne.s32.totalorder %s109, %s112
    %p118 = scmp.eq.s32.totalorder %s10, 0
    %p119 = por %p117, %p118
    %p120 = scmp.ne.s32.totalorder %s109, %s112
    %p121 = scmp.eq.s32.totalorder %s15, 1
    %p122 = por %p120, %p121
    %p123 = scmp.ne.s32.totalorder %s112, %s113
    %p124 = scmp.eq.s32.totalorder %s15, 0
    %p125 = por %p123, %p124
    %p126 = scmp.ne.s32.totalorder %s112, %s113
    %p127 = scmp.eq.s32.totalorder %s16, 1
    %p128 = por %p126, %p127
    %p130 = scmp.ne.s32.totalorder %s113, %s129
    %p131 = scmp.eq.s32.totalorder %s16, 0
    %p132 = por %p130, %p131
    %p133 = scmp.le.s32.totalorder 1, %s10
    %p134 = scmp.lt.s32.totalorder %s10, 3
    %p135 = pnand %p133, %p134
    %p136 = pneg %p135
    // Predicated region
    $region9: #{feature_extractor.8} parent=5 // pred_check
      _
    $region10: #{feature_extractor.8} parent=5 // pred_check_branch
      %138 = sbr.rel (%p135) target = $region12
    $region11: #{feature_extractor.8} parent=5 // pred_region
      %s139 = ssub.s32 %s10, 1
      // Predicated region
      $region13: #{feature_extractor.8} parent=11 // pred_check
        %p140 = pneg %p57
      $region14: #{feature_extractor.8} parent=11 // pred_check_branch
        %142 = sbr.rel (%p140) target = $region16
      $region15: #{feature_extractor.8} parent=11 // pred_region
        _
      $region16: #{feature_extractor.8} parent=11 // pred_fallthru
        _
      // Predicated region
      $region17: #{feature_extractor.8} parent=11 // pred_check
        %p143 = pneg %p78
      $region18: #{feature_extractor.8} parent=11 // pred_check_branch
        %145 = sbr.rel (%p143) target = $region20
      $region19: #{feature_extractor.8} parent=11 // pred_region
        _
      $region20: #{feature_extractor.8} parent=11 // pred_fallthru
        _
      // Predicated region
      $region21: #{feature_extractor.8} parent=11 // pred_check
        %p146 = pneg %p99
      $region22: #{feature_extractor.8} parent=11 // pred_check_branch
        %148 = sbr.rel (%p146) target = $region24
      $region23: #{feature_extractor.8} parent=11 // pred_region
        _
      $region24: #{feature_extractor.8} parent=11 // pred_fallthru
        _
    $region12: #{feature_extractor.8} parent=5 // pred_fallthru
      _
    %p149 = scmp.lt.s32.totalorder %s10, 2
    // Predicated region
    $region25: #{feature_extractor.8} parent=5 // pred_check
      %p150 = pneg %p149
    $region26: #{feature_extractor.8} parent=5 // pred_check_branch
      %152 = sbr.rel (%p150) target = $region28
    $region27: #{feature_extractor.8} parent=5 // pred_region
      // Predicated region
      $region29: #{feature_extractor.8} parent=27 // pred_check
        %p153 = pneg %p30
      $region30: #{feature_extractor.8} parent=27 // pred_check_branch
        %155 = sbr.rel (%p153) target = $region32
      $region31: #{feature_extractor.8} parent=27 // pred_region
        %s156 = smul.u32 32, %s10
        %p157 = scmp.lt.s32.totalorder %s156, 63
        %s158 = scalar_select %p157, %s156, 63
        %s159 = smul.addr %s158, 2
        %s160 = smul.addr %s159, 4
        %s161 = scalar_lea.vmem %s0, %s160
        %s162 = smul.u32 32, %s10
      $region32: #{feature_extractor.8} parent=27 // pred_fallthru
        _
    $region28: #{feature_extractor.8} parent=5 // pred_fallthru
      _
    %p163 = scmp.le.s32.totalorder 1, %s10
    %p164 = scmp.lt.s32.totalorder %s10, 3
    %p165 = pnand %p163, %p164
    %p166 = pneg %p165
    // Predicated region
    $region33: #{feature_extractor.8} parent=5 // pred_check
      _
    $region34: #{feature_extractor.8} parent=5 // pred_check_branch
      %168 = sbr.rel (%p165) target = $region36
    $region35: #{feature_extractor.8} parent=5 // pred_region
      %s169 = ssub.s32 %s10, 1
      %s170 = smul.u32 32, %s15
      %p171 = scmp.lt.s32.totalorder %s170, 63
      %s172 = scalar_select %p171, %s170, 63
      %s173 = smul.addr %s172, 2
      %s174 = smul.addr %s173, 4
      %s175 = scalar_lea.vmem %s0, %s174
      %p176 = pneg %p36
      %p177 = pneg %p33
      %p178 = pneg %p57
      %p179 = pneg %p54
      %p180 = pneg %p78
      %p181 = pneg %p75
      %p182 = pneg %p99
      %p183 = pneg %p96
      %p184 = pneg %p125
      %p185 = pneg %p122
      %s186 = smul.u32 32, %s15
      %p187 = scmp.lt.s32.totalorder %s186, 63
      %s188 = scalar_select %p187, %s186, 63
      %s189 = smul.addr %s188, 4
      %s190 = scalar_lea.vmem %s4, %s189
      %s191 = smul.u32 32, %s15
      %p192 = scmp.lt.s32.totalorder %s191, 63
      %s193 = scalar_select %p192, %s191, 63
      %s194 = smul.addr %s193, 2
      %s195 = smul.addr %s194, 4
      %s196 = scalar_lea.vmem %s0, %s195
      %s197 = smul.u32 32, %s15
      %s198 = smul.u32 32, %s15
      %p199 = scmp.lt.s32.totalorder %s198, 63
      %s200 = scalar_select %p199, %s198, 63
      %s201 = smul.addr %s200, 4
      %s202 = scalar_lea.vmem %s4, %s201
      %s203 = smul.u32 32, %s15
      %v205 = vld [vmem:[%s196] sm:$0xff]
      %v206 = vld [vmem:[%s196 + $0x8] sm:$0xff]
      %v207 = vld [vmem:[%s196 + $0x10] sm:$0xff]
      %v208 = vld [vmem:[%s196 + $0x18] sm:$0xff]
      %v209 = vld [vmem:[%s196 + $0x20] sm:$0xff]
      %v210 = vld [vmem:[%s196 + $0x28] sm:$0xff]
      %v211 = vld [vmem:[%s196 + $0x30] sm:$0xff]
      %v212 = vld [vmem:[%s196 + $0x38] sm:$0xff]
      %v213 = vld [vmem:[%s196 + $0x40] sm:$0xff]
      %v214 = vld [vmem:[%s196 + $0x48] sm:$0xff]
      %v215 = vld [vmem:[%s196 + $0x50] sm:$0xff]
      %v216 = vld [vmem:[%s196 + $0x58] sm:$0xff]
      %v217 = vld [vmem:[%s196 + $0x60] sm:$0xff]
      %v218 = vld [vmem:[%s196 + $0x68] sm:$0xff]
      %v219 = vld [vmem:[%s196 + $0x70] sm:$0xff]
      %v220 = vld [vmem:[%s196 + $0x78] sm:$0xff]
      %v221 = vld [vmem:[%s196 + $0x80] sm:$0xff]
      %v222 = vld [vmem:[%s196 + $0x88] sm:$0xff]
      %v223 = vld [vmem:[%s196 + $0x90] sm:$0xff]
      %v224 = vld [vmem:[%s196 + $0x98] sm:$0xff]
      %v225 = vld [vmem:[%s196 + $0xa0] sm:$0xff]
      %v226 = vld [vmem:[%s196 + $0xa8] sm:$0xff]
      %v227 = vld [vmem:[%s196 + $0xb0] sm:$0xff]
      %v228 = vld [vmem:[%s196 + $0xb8] sm:$0xff]
      %v229 = vld [vmem:[%s196 + $0xc0] sm:$0xff]
      %v230 = vld [vmem:[%s196 + $0xc8] sm:$0xff]
      %v231 = vld [vmem:[%s196 + $0xd0] sm:$0xff]
      %v232 = vld [vmem:[%s196 + $0xd8] sm:$0xff]
      %v233 = vld [vmem:[%s196 + $0xe0] sm:$0xff]
      %v234 = vld [vmem:[%s196 + $0xe8] sm:$0xff]
      %v235 = vld [vmem:[%s196 + $0xf0] sm:$0xff]
      %v236 = vld [vmem:[%s196 + $0xf8] sm:$0xff]
      %v237 = vld [vmem:[%s1] sm:$0xf]
      %v238 = vld [vmem:[%s1 + $0x4] sm:$0xf]
      %v239 = vld [vmem:[%s1 + $0x8] sm:$0xf]
      %v240 = vld [vmem:[%s1 + $0xc] sm:$0xf]
      %v241 = vld [vmem:[%s1 + $0x10] sm:$0xf]
      %v242 = vld [vmem:[%s1 + $0x14] sm:$0xf]
      %v243 = vld [vmem:[%s1 + $0x18] sm:$0xf]
      %v244 = vld [vmem:[%s1 + $0x1c] sm:$0xf]
      %v245 = vld [vmem:[%s1 + $0x20] sm:$0xf]
      %v246 = vld [vmem:[%s1 + $0x24] sm:$0xf]
      %v247 = vld [vmem:[%s1 + $0x28] sm:$0xf]
      %v248 = vld [vmem:[%s1 + $0x2c] sm:$0xf]
      %v249 = vld [vmem:[%s1 + $0x30] sm:$0xf]
      %v250 = vld [vmem:[%s1 + $0x34] sm:$0xf]
      %v251 = vld [vmem:[%s1 + $0x38] sm:$0xf]
      %v252 = vld [vmem:[%s1 + $0x3c] sm:$0xf]
      %v253 = vld [vmem:[%s1 + $0x40] sm:$0xf]
      %v254 = vld [vmem:[%s1 + $0x44] sm:$0xf]
      %v255 = vld [vmem:[%s1 + $0x48] sm:$0xf]
      %v256 = vld [vmem:[%s1 + $0x4c] sm:$0xf]
      %v257 = vld [vmem:[%s1 + $0x50] sm:$0xf]
      %v258 = vld [vmem:[%s1 + $0x54] sm:$0xf]
      %v259 = vld [vmem:[%s1 + $0x58] sm:$0xf]
      %v260 = vld [vmem:[%s1 + $0x5c] sm:$0xf]
      %v261 = vld [vmem:[%s1 + $0x60] sm:$0xf]
      %v262 = vld [vmem:[%s1 + $0x64] sm:$0xf]
      %v263 = vld [vmem:[%s1 + $0x68] sm:$0xf]
      %v264 = vld [vmem:[%s1 + $0x6c] sm:$0xf]
      %v265 = vld [vmem:[%s1 + $0x70] sm:$0xf]
      %v266 = vld [vmem:[%s1 + $0x74] sm:$0xf]
      %v267 = vld [vmem:[%s1 + $0x78] sm:$0xf]
      %v268 = vld [vmem:[%s1 + $0x7c] sm:$0xf]
      %v301 = vunpack.c.l.b16 %v205
      %v302 = vunpack.c.h.b16 %v205
      %v303 = vunpack.c.l.b16 %v206
      %v304 = vunpack.c.h.b16 %v206
      %v305 = vunpack.c.l.b16 %v207
      %v306 = vunpack.c.h.b16 %v207
      %v307 = vunpack.c.l.b16 %v208
      %v308 = vunpack.c.h.b16 %v208
      %v309 = vunpack.c.l.b16 %v209
      %v310 = vunpack.c.h.b16 %v209
      %v311 = vunpack.c.l.b16 %v210
      %v312 = vunpack.c.h.b16 %v210
      %v313 = vunpack.c.l.b16 %v211
      %v314 = vunpack.c.h.b16 %v211
      %v315 = vunpack.c.l.b16 %v212
      %v316 = vunpack.c.h.b16 %v212
      %v317 = vunpack.c.l.b16 %v213
      %v318 = vunpack.c.h.b16 %v213
      %v319 = vunpack.c.l.b16 %v214
      %v320 = vunpack.c.h.b16 %v214
      %v321 = vunpack.c.l.b16 %v215
      %v322 = vunpack.c.h.b16 %v215
      %v323 = vunpack.c.l.b16 %v216
      %v324 = vunpack.c.h.b16 %v216
      %v325 = vunpack.c.l.b16 %v217
      %v326 = vunpack.c.h.b16 %v217
      %v327 = vunpack.c.l.b16 %v218
      %v328 = vunpack.c.h.b16 %v218
      %v329 = vunpack.c.l.b16 %v219
      %v330 = vunpack.c.h.b16 %v219
      %v331 = vunpack.c.l.b16 %v220
      %v332 = vunpack.c.h.b16 %v220
      %v333 = vunpack.c.l.b16 %v221
      %v334 = vunpack.c.h.b16 %v221
      %v335 = vunpack.c.l.b16 %v222
      %v336 = vunpack.c.h.b16 %v222
      %v337 = vunpack.c.l.b16 %v223
      %v338 = vunpack.c.h.b16 %v223
      %v339 = vunpack.c.l.b16 %v224
      %v340 = vunpack.c.h.b16 %v224
      %v341 = vunpack.c.l.b16 %v225
      %v342 = vunpack.c.h.b16 %v225
      %v343 = vunpack.c.l.b16 %v226
      %v344 = vunpack.c.h.b16 %v226
      %v345 = vunpack.c.l.b16 %v227
      %v346 = vunpack.c.h.b16 %v227
      %v347 = vunpack.c.l.b16 %v228
      %v348 = vunpack.c.h.b16 %v228
      %v349 = vunpack.c.l.b16 %v229
      %v350 = vunpack.c.h.b16 %v229
      %v351 = vunpack.c.l.b16 %v230
      %v352 = vunpack.c.h.b16 %v230
      %v353 = vunpack.c.l.b16 %v231
      %v354 = vunpack.c.h.b16 %v231
      %v355 = vunpack.c.l.b16 %v232
      %v356 = vunpack.c.h.b16 %v232
      %v357 = vunpack.c.l.b16 %v233
      %v358 = vunpack.c.h.b16 %v233
      %v359 = vunpack.c.l.b16 %v234
      %v360 = vunpack.c.h.b16 %v234
      %v361 = vunpack.c.l.b16 %v235
      %v362 = vunpack.c.h.b16 %v235
      %v363 = vunpack.c.l.b16 %v236
      %v364 = vunpack.c.h.b16 %v236
      %v365 = vpack.c.b16 %v303, %v301
      %v366 = vpack.c.b16 %v304, %v302
      %v367 = vpack.c.b16 %v307, %v305
      %v368 = vpack.c.b16 %v308, %v306
      %v369 = vpack.c.b16 %v311, %v309
      %v370 = vpack.c.b16 %v312, %v310
      %v371 = vpack.c.b16 %v315, %v313
      %v372 = vpack.c.b16 %v316, %v314
      %v373 = vpack.c.b16 %v319, %v317
      %v374 = vpack.c.b16 %v320, %v318
      %v375 = vpack.c.b16 %v323, %v321
      %v376 = vpack.c.b16 %v324, %v322
      %v377 = vpack.c.b16 %v327, %v325
      %v378 = vpack.c.b16 %v328, %v326
      %v379 = vpack.c.b16 %v331, %v329
      %v380 = vpack.c.b16 %v332, %v330
      %v381 = vpack.c.b16 %v335, %v333
      %v382 = vpack.c.b16 %v336, %v334
      %v383 = vpack.c.b16 %v339, %v337
      %v384 = vpack.c.b16 %v340, %v338
      %v385 = vpack.c.b16 %v343, %v341
      %v386 = vpack.c.b16 %v344, %v342
      %v387 = vpack.c.b16 %v347, %v345
      %v388 = vpack.c.b16 %v348, %v346
      %v389 = vpack.c.b16 %v351, %v349
      %v390 = vpack.c.b16 %v352, %v350
      %v391 = vpack.c.b16 %v355, %v353
      %v392 = vpack.c.b16 %v356, %v354
      %v393 = vpack.c.b16 %v359, %v357
      %v394 = vpack.c.b16 %v360, %v358
      %v395 = vpack.c.b16 %v363, %v361
      %v396 = vpack.c.b16 %v364, %v362
      %v461 = vunpack.c.l.b16 %v237
      %v462 = vunpack.c.l.b16 %v238
      %v463 = vunpack.c.l.b16 %v239
      %v464 = vunpack.c.l.b16 %v240
      %v465 = vunpack.c.l.b16 %v241
      %v466 = vunpack.c.l.b16 %v242
      %v467 = vunpack.c.l.b16 %v243
      %v468 = vunpack.c.l.b16 %v244
      %v469 = vunpack.c.l.b16 %v245
      %v470 = vunpack.c.l.b16 %v246
      %v471 = vunpack.c.l.b16 %v247
      %v472 = vunpack.c.l.b16 %v248
      %v473 = vunpack.c.l.b16 %v249
      %v474 = vunpack.c.l.b16 %v250
      %v475 = vunpack.c.l.b16 %v251
      %v476 = vunpack.c.l.b16 %v252
      %v477 = vunpack.c.l.b16 %v253
      %v478 = vunpack.c.l.b16 %v254
      %v479 = vunpack.c.l.b16 %v255
      %v480 = vunpack.c.l.b16 %v256
      %v481 = vunpack.c.l.b16 %v257
      %v482 = vunpack.c.l.b16 %v258
      %v483 = vunpack.c.l.b16 %v259
      %v484 = vunpack.c.l.b16 %v260
      %v485 = vunpack.c.l.b16 %v261
      %v486 = vunpack.c.l.b16 %v262
      %v487 = vunpack.c.l.b16 %v263
      %v488 = vunpack.c.l.b16 %v264
      %v489 = vunpack.c.l.b16 %v265
      %v490 = vunpack.c.l.b16 %v266
      %v491 = vunpack.c.l.b16 %v267
      %v492 = vunpack.c.l.b16 %v268
      %v493 = vpack.c.b16 %v462, %v461
      %v494 = vpack.c.b16 %v464, %v463
      %v495 = vpack.c.b16 %v466, %v465
      %v496 = vpack.c.b16 %v468, %v467
      %v497 = vpack.c.b16 %v470, %v469
      %v498 = vpack.c.b16 %v472, %v471
      %v499 = vpack.c.b16 %v474, %v473
      %v500 = vpack.c.b16 %v476, %v475
      %v501 = vpack.c.b16 %v478, %v477
      %v502 = vpack.c.b16 %v480, %v479
      %v503 = vpack.c.b16 %v482, %v481
      %v504 = vpack.c.b16 %v484, %v483
      %v505 = vpack.c.b16 %v486, %v485
      %v506 = vpack.c.b16 %v488, %v487
      %v507 = vpack.c.b16 %v490, %v489
      %v508 = vpack.c.b16 %v492, %v491
      %525 = vmatprep.subr.bf16.mxu0 0
      %526 = vmatpush1.bf16.msra.mxu0 %v493
      %527 = vmatprep.subr.bf16.mxu0 0
      %528 = vmatpush1.bf16.msra.mxu0 %v494
      %529 = vmatprep.subr.bf16.mxu0 0
      %530 = vmatpush1.bf16.msra.mxu0 %v495
      %531 = vmatprep.subr.bf16.mxu0 0
      %532 = vmatpush1.bf16.msra.mxu0 %v496
      %533 = vmatprep.subr.bf16.mxu0 0
      %534 = vmatpush1.bf16.msra.mxu0 %v497
      %535 = vmatprep.subr.bf16.mxu0 0
      %536 = vmatpush1.bf16.msra.mxu0 %v498
      %537 = vmatprep.subr.bf16.mxu0 0
      %538 = vmatpush1.bf16.msra.mxu0 %v499
      %539 = vmatprep.subr.bf16.mxu0 0
      %540 = vmatpush1.bf16.msra.mxu0 %v500
      %541 = vmatprep.subr.bf16.mxu0 0
      %542 = vmatpush1.bf16.msra.mxu0 %v501
      %543 = vmatprep.subr.bf16.mxu0 0
      %544 = vmatpush1.bf16.msra.mxu0 %v502
      %545 = vmatprep.subr.bf16.mxu0 0
      %546 = vmatpush1.bf16.msra.mxu0 %v503
      %547 = vmatprep.subr.bf16.mxu0 0
      %548 = vmatpush1.bf16.msra.mxu0 %v504
      %549 = vmatprep.subr.bf16.mxu0 0
      %550 = vmatpush1.bf16.msra.mxu0 %v505
      %551 = vmatprep.subr.bf16.mxu0 0
      %552 = vmatpush1.bf16.msra.mxu0 %v506
      %553 = vmatprep.subr.bf16.mxu0 0
      %554 = vmatpush1.bf16.msra.mxu0 %v507
      %555 = vmatprep.subr.bf16.mxu0 0
      %556 = vmatpush1.bf16.msra.mxu0 %v508
      %557 = vmatprep.mubr.bf16.mxu0 %v366
      %558 = vmatmul.mubr.bf16.gmra.mrb[0].mxu0 %v365
      %v559 = vpop.f32.mrb[0].mxu0
      %v560 = vadd.f32 0.0, %v559
      %v561 = vpop.f32.mrb[0].mxu0
      %v562 = vpop.f32.mrb[0].mxu0
      %v563 = vadd.f32 0.0, %v562
      %v564 = vpop.f32.mrb[0].mxu0
      %565 = vmatprep.mubr.bf16.mxu0 %v368
      %566 = vmatmul.mubr.bf16.gmra.mrb[0].mxu0 %v367
      %v567 = vpop.f32.mrb[0].mxu0
      %v568 = vadd.f32 0.0, %v567
      %v569 = vpop.f32.mrb[0].mxu0
      %v570 = vpop.f32.mrb[0].mxu0
      %v571 = vadd.f32 0.0, %v570
      %v572 = vpop.f32.mrb[0].mxu0
      %573 = vmatprep.mubr.bf16.mxu0 %v370
      %574 = vmatmul.mubr.bf16.gmra.mrb[0].mxu0 %v369
      %v575 = vpop.f32.mrb[0].mxu0
      %v576 = vadd.f32 0.0, %v575
      %v577 = vpop.f32.mrb[0].mxu0
      %v578 = vpop.f32.mrb[0].mxu0
      %v579 = vadd.f32 0.0, %v578
      %v580 = vpop.f32.mrb[0].mxu0
      %581 = vmatprep.mubr.bf16.mxu0 %v372
      %582 = vmatmul.mubr.bf16.gmra.mrb[0].mxu0 %v371
      %v583 = vpop.f32.mrb[0].mxu0
      %v584 = vadd.f32 0.0, %v583
      %v585 = vpop.f32.mrb[0].mxu0
      %v586 = vpop.f32.mrb[0].mxu0
      %v587 = vadd.f32 0.0, %v586
      %v588 = vpop.f32.mrb[0].mxu0
      %589 = vmatprep.mubr.bf16.mxu0 %v374
      %590 = vmatmul.mubr.bf16.gmra.mrb[0].mxu0 %v373
      %v591 = vpop.f32.mrb[0].mxu0
      %v592 = vadd.f32 0.0, %v591
      %v593 = vpop.f32.mrb[0].mxu0
      %v594 = vpop.f32.mrb[0].mxu0
      %v595 = vadd.f32 0.0, %v594
      %v596 = vpop.f32.mrb[0].mxu0
      %597 = vmatprep.mubr.bf16.mxu0 %v376
      %598 = vmatmul.mubr.bf16.gmra.mrb[0].mxu0 %v375
      %v599 = vpop.f32.mrb[0].mxu0
      %v600 = vadd.f32 0.0, %v599
      %v601 = vpop.f32.mrb[0].mxu0
      %v602 = vpop.f32.mrb[0].mxu0
      %v603 = vadd.f32 0.0, %v602
      %v604 = vpop.f32.mrb[0].mxu0
      %605 = vmatprep.mubr.bf16.mxu0 %v378
      %606 = vmatmul.mubr.bf16.gmra.mrb[0].mxu0 %v377
      %v607 = vpop.f32.mrb[0].mxu0
      %v608 = vadd.f32 0.0, %v607
      %v609 = vpop.f32.mrb[0].mxu0
      %v610 = vpop.f32.mrb[0].mxu0
      %v611 = vadd.f32 0.0, %v610
      %v612 = vpop.f32.mrb[0].mxu0
      %613 = vmatprep.mubr.bf16.mxu0 %v380
      %614 = vmatmul.mubr.bf16.gmra.mrb[0].mxu0 %v379
      %v615 = vpop.f32.mrb[0].mxu0
      %v616 = vadd.f32 0.0, %v615
      %v617 = vpop.f32.mrb[0].mxu0
      %v618 = vpop.f32.mrb[0].mxu0
      %v619 = vadd.f32 0.0, %v618
      %v620 = vpop.f32.mrb[0].mxu0
      %621 = vmatprep.mubr.bf16.mxu0 %v382
      %622 = vmatmul.mubr.bf16.gmra.mrb[0].mxu0 %v381
      %v623 = vpop.f32.mrb[0].mxu0
      %v624 = vadd.f32 0.0, %v623
      %v625 = vpop.f32.mrb[0].mxu0
      %v626 = vpop.f32.mrb[0].mxu0
      %v627 = vadd.f32 0.0, %v626
      %v628 = vpop.f32.mrb[0].mxu0
      %629 = vmatprep.mubr.bf16.mxu0 %v384
      %630 = vmatmul.mubr.bf16.gmra.mrb[0].mxu0 %v383
      %v631 = vpop.f32.mrb[0].mxu0
      %v632 = vadd.f32 0.0, %v631
      %v633 = vpop.f32.mrb[0].mxu0
      %v634 = vpop.f32.mrb[0].mxu0
      %v635 = vadd.f32 0.0, %v634
      %v636 = vpop.f32.mrb[0].mxu0
      %637 = vmatprep.mubr.bf16.mxu0 %v386
      %638 = vmatmul.mubr.bf16.gmra.mrb[0].mxu0 %v385
      %v639 = vpop.f32.mrb[0].mxu0
      %v640 = vadd.f32 0.0, %v639
      %v641 = vpop.f32.mrb[0].mxu0
      %v642 = vpop.f32.mrb[0].mxu0
      %v643 = vadd.f32 0.0, %v642
      %v644 = vpop.f32.mrb[0].mxu0
      %645 = vmatprep.mubr.bf16.mxu0 %v388
      %646 = vmatmul.mubr.bf16.gmra.mrb[0].mxu0 %v387
      %v647 = vpop.f32.mrb[0].mxu0
      %v648 = vadd.f32 0.0, %v647
      %v649 = vpop.f32.mrb[0].mxu0
      %v650 = vpop.f32.mrb[0].mxu0
      %v651 = vadd.f32 0.0, %v650
      %v652 = vpop.f32.mrb[0].mxu0
      %653 = vmatprep.mubr.bf16.mxu0 %v390
      %654 = vmatmul.mubr.bf16.gmra.mrb[0].mxu0 %v389
      %v655 = vpop.f32.mrb[0].mxu0
      %v656 = vadd.f32 0.0, %v655
      %v657 = vpop.f32.mrb[0].mxu0
      %v658 = vpop.f32.mrb[0].mxu0
      %v659 = vadd.f32 0.0, %v658
      %v660 = vpop.f32.mrb[0].mxu0
      %661 = vmatprep.mubr.bf16.mxu0 %v392
      %662 = vmatmul.mubr.bf16.gmra.mrb[0].mxu0 %v391
      %v663 = vpop.f32.mrb[0].mxu0
      %v664 = vadd.f32 0.0, %v663
      %v665 = vpop.f32.mrb[0].mxu0
      %v666 = vpop.f32.mrb[0].mxu0
      %v667 = vadd.f32 0.0, %v666
      %v668 = vpop.f32.mrb[0].mxu0
      %669 = vmatprep.mubr.bf16.mxu0 %v394
      %670 = vmatmul.mubr.bf16.gmra.mrb[0].mxu0 %v393
      %v671 = vpop.f32.mrb[0].mxu0
      %v672 = vadd.f32 0.0, %v671
      %v673 = vpop.f32.mrb[0].mxu0
      %v674 = vpop.f32.mrb[0].mxu0
      %v675 = vadd.f32 0.0, %v674
      %v676 = vpop.f32.mrb[0].mxu0
      %677 = vmatprep.mubr.bf16.mxu0 %v396
      %678 = vmatmul.mubr.bf16.gmra.mrb[0].mxu0 %v395
      %v679 = vpop.f32.mrb[0].mxu0
      %v680 = vadd.f32 0.0, %v679
      %v681 = vpop.f32.mrb[0].mxu0
      %v682 = vpop.f32.mrb[0].mxu0
      %v683 = vadd.f32 0.0, %v682
      %v684 = vpop.f32.mrb[0].mxu0
      %685 = vdwg.mxu0
      %v686 = vld [vmem:[%s2] sm:$0x1]
      %v688 = vlaneseq
      %v689 = vshrl.u32 %v688, 7
      %v690 = vsub.s32 0, %v689
      %v691 = vrot.slane %v686, %v690
      %v693 = vmul.f32 %v560, %v691
      %v694 = vmul.f32 %v563, %v691
      %v695 = vmul.f32 %v568, %v691
      %v696 = vmul.f32 %v571, %v691
      %v697 = vmul.f32 %v576, %v691
      %v698 = vmul.f32 %v579, %v691
      %v699 = vmul.f32 %v584, %v691
      %v700 = vmul.f32 %v587, %v691
      %v701 = vmul.f32 %v592, %v691
      %v702 = vmul.f32 %v595, %v691
      %v703 = vmul.f32 %v600, %v691
      %v704 = vmul.f32 %v603, %v691
      %v705 = vmul.f32 %v608, %v691
      %v706 = vmul.f32 %v611, %v691
      %v707 = vmul.f32 %v616, %v691
      %v708 = vmul.f32 %v619, %v691
      %v709 = vmul.f32 %v624, %v691
      %v710 = vmul.f32 %v627, %v691
      %v711 = vmul.f32 %v632, %v691
      %v712 = vmul.f32 %v635, %v691
      %v713 = vmul.f32 %v640, %v691
      %v714 = vmul.f32 %v643, %v691
      %v715 = vmul.f32 %v648, %v691
      %v716 = vmul.f32 %v651, %v691
      %v717 = vmul.f32 %v656, %v691
      %v718 = vmul.f32 %v659, %v691
      %v719 = vmul.f32 %v664, %v691
      %v720 = vmul.f32 %v667, %v691
      %v721 = vmul.f32 %v672, %v691
      %v722 = vmul.f32 %v675, %v691
      %v723 = vmul.f32 %v680, %v691
      %v724 = vmul.f32 %v683, %v691
      %v725 = vld [vmem:[%s3] sm:$0x1]
      %v727 = vlaneseq
      %v728 = vshrl.u32 %v727, 7
      %v729 = vsub.s32 0, %v728
      %v730 = vrot.slane %v725, %v729
      %v732 = vadd.f32 %v693, %v730
      %v733 = vadd.f32 %v694, %v730
      %v734 = vadd.f32 %v695, %v730
      %v735 = vadd.f32 %v696, %v730
      %v736 = vadd.f32 %v697, %v730
      %v737 = vadd.f32 %v698, %v730
      %v738 = vadd.f32 %v699, %v730
      %v739 = vadd.f32 %v700, %v730
      %v740 = vadd.f32 %v701, %v730
      %v741 = vadd.f32 %v702, %v730
      %v742 = vadd.f32 %v703, %v730
      %v743 = vadd.f32 %v704, %v730
      %v744 = vadd.f32 %v705, %v730
      %v745 = vadd.f32 %v706, %v730
      %v746 = vadd.f32 %v707, %v730
      %v747 = vadd.f32 %v708, %v730
      %v748 = vadd.f32 %v709, %v730
      %v749 = vadd.f32 %v710, %v730
      %v750 = vadd.f32 %v711, %v730
      %v751 = vadd.f32 %v712, %v730
      %v752 = vadd.f32 %v713, %v730
      %v753 = vadd.f32 %v714, %v730
      %v754 = vadd.f32 %v715, %v730
      %v755 = vadd.f32 %v716, %v730
      %v756 = vadd.f32 %v717, %v730
      %v757 = vadd.f32 %v718, %v730
      %v758 = vadd.f32 %v719, %v730
      %v759 = vadd.f32 %v720, %v730
      %v760 = vadd.f32 %v721, %v730
      %v761 = vadd.f32 %v722, %v730
      %v762 = vadd.f32 %v723, %v730
      %v763 = vadd.f32 %v724, %v730
      %v764 = vmax.f32 %v732, 0.0
      %v765 = vmax.f32 %v733, 0.0
      %v766 = vmax.f32 %v734, 0.0
      %v767 = vmax.f32 %v735, 0.0
      %v768 = vmax.f32 %v736, 0.0
      %v769 = vmax.f32 %v737, 0.0
      %v770 = vmax.f32 %v738, 0.0
      %v771 = vmax.f32 %v739, 0.0
      %v772 = vmax.f32 %v740, 0.0
      %v773 = vmax.f32 %v741, 0.0
      %v774 = vmax.f32 %v742, 0.0
      %v775 = vmax.f32 %v743, 0.0
      %v776 = vmax.f32 %v744, 0.0
      %v777 = vmax.f32 %v745, 0.0
      %v778 = vmax.f32 %v746, 0.0
      %v779 = vmax.f32 %v747, 0.0
      %v780 = vmax.f32 %v748, 0.0
      %v781 = vmax.f32 %v749, 0.0
      %v782 = vmax.f32 %v750, 0.0
      %v783 = vmax.f32 %v751, 0.0
      %v784 = vmax.f32 %v752, 0.0
      %v785 = vmax.f32 %v753, 0.0
      %v786 = vmax.f32 %v754, 0.0
      %v787 = vmax.f32 %v755, 0.0
      %v788 = vmax.f32 %v756, 0.0
      %v789 = vmax.f32 %v757, 0.0
      %v790 = vmax.f32 %v758, 0.0
      %v791 = vmax.f32 %v759, 0.0
      %v792 = vmax.f32 %v760, 0.0
      %v793 = vmax.f32 %v761, 0.0
      %v794 = vmax.f32 %v762, 0.0
      %v795 = vmax.f32 %v763, 0.0
      %v796 = vpack.c.bf16 %v765, %v764
      %v797 = vpack.c.bf16 %v767, %v766
      %v798 = vpack.c.bf16 %v769, %v768
      %v799 = vpack.c.bf16 %v771, %v770
      %v800 = vpack.c.bf16 %v773, %v772
      %v801 = vpack.c.bf16 %v775, %v774
      %v802 = vpack.c.bf16 %v777, %v776
      %v803 = vpack.c.bf16 %v779, %v778
      %v804 = vpack.c.bf16 %v781, %v780
      %v805 = vpack.c.bf16 %v783, %v782
      %v806 = vpack.c.bf16 %v785, %v784
      %v807 = vpack.c.bf16 %v787, %v786
      %v808 = vpack.c.bf16 %v789, %v788
      %v809 = vpack.c.bf16 %v791, %v790
      %v810 = vpack.c.bf16 %v793, %v792
      %v811 = vpack.c.bf16 %v795, %v794
      %v828 = vunpack.c.l.b16 %v796
      %v829 = vunpack.c.h.b16 %v796
      %v830 = vunpack.c.l.b16 %v797
      %v831 = vunpack.c.h.b16 %v797
      %v832 = vunpack.c.l.b16 %v798
      %v833 = vunpack.c.h.b16 %v798
      %v834 = vunpack.c.l.b16 %v799
      %v835 = vunpack.c.h.b16 %v799
      %v836 = vunpack.c.l.b16 %v800
      %v837 = vunpack.c.h.b16 %v800
      %v838 = vunpack.c.l.b16 %v801
      %v839 = vunpack.c.h.b16 %v801
      %v840 = vunpack.c.l.b16 %v802
      %v841 = vunpack.c.h.b16 %v802
      %v842 = vunpack.c.l.b16 %v803
      %v843 = vunpack.c.h.b16 %v803
      %v844 = vunpack.c.l.b16 %v804
      %v845 = vunpack.c.h.b16 %v804
      %v846 = vunpack.c.l.b16 %v805
      %v847 = vunpack.c.h.b16 %v805
      %v848 = vunpack.c.l.b16 %v806
      %v849 = vunpack.c.h.b16 %v806
      %v850 = vunpack.c.l.b16 %v807
      %v851 = vunpack.c.h.b16 %v807
      %v852 = vunpack.c.l.b16 %v808
      %v853 = vunpack.c.h.b16 %v808
      %v854 = vunpack.c.l.b16 %v809
      %v855 = vunpack.c.h.b16 %v809
      %v856 = vunpack.c.l.b16 %v810
      %v857 = vunpack.c.h.b16 %v810
      %v858 = vunpack.c.l.b16 %v811
      %v859 = vunpack.c.h.b16 %v811
      %v860 = vpack.c.b16 %v828, %v828
      %v861 = vpack.c.b16 %v829, %v829
      %v862 = vpack.c.b16 %v830, %v830
      %v863 = vpack.c.b16 %v831, %v831
      %v864 = vpack.c.b16 %v832, %v832
      %v865 = vpack.c.b16 %v833, %v833
      %v866 = vpack.c.b16 %v834, %v834
      %v867 = vpack.c.b16 %v835, %v835
      %v868 = vpack.c.b16 %v836, %v836
      %v869 = vpack.c.b16 %v837, %v837
      %v870 = vpack.c.b16 %v838, %v838
      %v871 = vpack.c.b16 %v839, %v839
      %v872 = vpack.c.b16 %v840, %v840
      %v873 = vpack.c.b16 %v841, %v841
      %v874 = vpack.c.b16 %v842, %v842
      %v875 = vpack.c.b16 %v843, %v843
      %v876 = vpack.c.b16 %v844, %v844
      %v877 = vpack.c.b16 %v845, %v845
      %v878 = vpack.c.b16 %v846, %v846
      %v879 = vpack.c.b16 %v847, %v847
      %v880 = vpack.c.b16 %v848, %v848
      %v881 = vpack.c.b16 %v849, %v849
      %v882 = vpack.c.b16 %v850, %v850
      %v883 = vpack.c.b16 %v851, %v851
      %v884 = vpack.c.b16 %v852, %v852
      %v885 = vpack.c.b16 %v853, %v853
      %v886 = vpack.c.b16 %v854, %v854
      %v887 = vpack.c.b16 %v855, %v855
      %v888 = vpack.c.b16 %v856, %v856
      %v889 = vpack.c.b16 %v857, %v857
      %v890 = vpack.c.b16 %v858, %v858
      %v891 = vpack.c.b16 %v859, %v859
      %924 = vst [vmem:[%s202] sm:$0xf] %v860
      %925 = vst [vmem:[%s202 + $0x4] sm:$0xf] %v861
      %926 = vst [vmem:[%s202 + $0x8] sm:$0xf] %v862
      %927 = vst [vmem:[%s202 + $0xc] sm:$0xf] %v863
      %928 = vst [vmem:[%s202 + $0x10] sm:$0xf] %v864
      %929 = vst [vmem:[%s202 + $0x14] sm:$0xf] %v865
      %930 = vst [vmem:[%s202 + $0x18] sm:$0xf] %v866
      %931 = vst [vmem:[%s202 + $0x1c] sm:$0xf] %v867
      %932 = vst [vmem:[%s202 + $0x20] sm:$0xf] %v868
      %933 = vst [vmem:[%s202 + $0x24] sm:$0xf] %v869
      %934 = vst [vmem:[%s202 + $0x28] sm:$0xf] %v870
      %935 = vst [vmem:[%s202 + $0x2c] sm:$0xf] %v871
      %936 = vst [vmem:[%s202 + $0x30] sm:$0xf] %v872
      %937 = vst [vmem:[%s202 + $0x34] sm:$0xf] %v873
      %938 = vst [vmem:[%s202 + $0x38] sm:$0xf] %v874
      %939 = vst [vmem:[%s202 + $0x3c] sm:$0xf] %v875
      %940 = vst [vmem:[%s202 + $0x40] sm:$0xf] %v876
      %941 = vst [vmem:[%s202 + $0x44] sm:$0xf] %v877
      %942 = vst [vmem:[%s202 + $0x48] sm:$0xf] %v878
      %943 = vst [vmem:[%s202 + $0x4c] sm:$0xf] %v879
      %944 = vst [vmem:[%s202 + $0x50] sm:$0xf] %v880
      %945 = vst [vmem:[%s202 + $0x54] sm:$0xf] %v881
      %946 = vst [vmem:[%s202 + $0x58] sm:$0xf] %v882
      %947 = vst [vmem:[%s202 + $0x5c] sm:$0xf] %v883
      %948 = vst [vmem:[%s202 + $0x60] sm:$0xf] %v884
      %949 = vst [vmem:[%s202 + $0x64] sm:$0xf] %v885
      %950 = vst [vmem:[%s202 + $0x68] sm:$0xf] %v886
      %951 = vst [vmem:[%s202 + $0x6c] sm:$0xf] %v887
      %952 = vst [vmem:[%s202 + $0x70] sm:$0xf] %v888
      %953 = vst [vmem:[%s202 + $0x74] sm:$0xf] %v889
      %954 = vst [vmem:[%s202 + $0x78] sm:$0xf] %v890
      %955 = vst [vmem:[%s202 + $0x7c] sm:$0xf] %v891
      %s956 = smul.u32 32, %s15
      %p957 = scmp.lt.s32.totalorder %s956, 63
      %s958 = scalar_select %p957, %s956, 63
      %s959 = smul.addr %s958, 4
      %s960 = scalar_lea.vmem %s4, %s959
      // Predicated region
      $region37: #{feature_extractor.8} parent=35 // pred_check
        %p961 = pneg %p122
      $region38: #{feature_extractor.8} parent=35 // pred_check_branch
        %963 = sbr.rel (%p961) target = $region40
      $region39: #{feature_extractor.8} parent=35 // pred_region
        %s964 = smul.u32 32, %s15
      $region40: #{feature_extractor.8} parent=35 // pred_fallthru
        _
    $region36: #{feature_extractor.8} parent=5 // pred_fallthru
      _
    %p965 = scmp.le.s32.totalorder 2, %s10
    // Predicated region
    $region41: #{feature_extractor.8} parent=5 // pred_check
      %p966 = pneg %p965
    $region42: #{feature_extractor.8} parent=5 // pred_check_branch
      %968 = sbr.rel (%p966) target = $region44
    $region43: #{feature_extractor.8} parent=5 // pred_region
      %s969 = ssub.s32 %s10, 2
      // Predicated region
      $region45: #{feature_extractor.8} parent=43 // pred_check
        %p970 = pneg %p128
      $region46: #{feature_extractor.8} parent=43 // pred_check_branch
        %972 = sbr.rel (%p970) target = $region48
      $region47: #{feature_extractor.8} parent=43 // pred_region
        %s973 = smul.u32 32, %s16
        %p974 = scmp.lt.s32.totalorder %s973, 63
        %s975 = scalar_select %p974, %s973, 63
        %s976 = smul.addr %s975, 4
        %s977 = scalar_lea.vmem %s4, %s976
      $region48: #{feature_extractor.8} parent=43 // pred_fallthru
        _
    $region44: #{feature_extractor.8} parent=5 // pred_fallthru
      _
  $region6: #{feature_extractor.8} parent=0 // loop_footer
    %s14 = sadd.s32 1, %s10
  $region7: #{feature_extractor.8} parent=0 // loop_footer_branch
    %9 = sbr.rel target = $region3
  $region8: #{feature_extractor.8} parent=0 // loop_exit
    _

// kernel: feature_extractor.9
$region0: #{feature_extractor.9}
  #allocation0 [shape = 'u32[]', space=smem, size = 0x4, offset = 0x4, fixed_abs, tag = 'smem constant byte address 0x4 - core index']
  #allocation1 [shape = 'u32[144,128]{1,0:T(1,128)}', space=vmem, size = 0x12000, scoped, tag = 'internal scratch']
  #allocation2 [shape = 'bf16[10,10,128]{2,1,0:T(8,128)(2,1)}', space=vmem, size = 0xa000, scoped, tag = 'scratch operand']
  %s0 = inlined_call_operand.vmem [shape: bf16[2,8,8,256], index: 0, kind: input, shape index: {}]
  %s1 = inlined_call_operand.vmem [shape: bf16[256,128], index: 1, kind: input, shape index: {}]
  %s2 = inlined_call_operand.vmem [shape: f32[1,256], index: 2, kind: input, shape index: {}]
  %s3 = inlined_call_operand.vmem [shape: f32[1,256], index: 3, kind: input, shape index: {}]
  %s4 = inlined_call_operand.vmem [shape: bf16[9,128,128], index: 4, kind: input, shape index: {}]
  %s5 = inlined_call_operand.vmem [shape: f32[1,128], index: 5, kind: input, shape index: {}]
  %s6 = inlined_call_operand.vmem [shape: f32[1,128], index: 6, kind: input, shape index: {}]
  %s7 = inlined_call_operand.vmem [shape: bf16[2,8,8,128], index: 7, kind: output, shape index: {}]
  %s8 = sld [smem:[#allocation0]]
  $region61: #{feature_extractor.9} parent=0
    _
  %s10 = ssub.s32 1, %s8
  %s11 = scalar_select 0, %s10, %s8
  loop: start=0, step=1, limit=4
  $region2: #{feature_extractor.9} parent=0 // loop_pre_header
    _
  $region3: #{feature_extractor.9} parent=0 // loop_header
    %s13 = sphi 0, %s17
    %p14 = scmp.ge.s32.totalorder %s13, 4
    %s23 = sphi 0, %s25
    %s26 = sphi 0, %s23
    %s27 = sphi 0, %s26
    %s43 = sphi 0, %s27
    %s47 = sphi 0, %s47
    %s49 = sphi 0, %s47
    %s50 = sphi 0, %s49
    %s64 = sphi 0, %s50
    %s68 = sphi 0, %s68
    %s70 = sphi 0, %s68
    %s71 = sphi 0, %s70
    %s85 = sphi 0, %s71
    %s89 = sphi 0, %s89
    %s91 = sphi 0, %s89
    %s92 = sphi 0, %s91
    %s106 = sphi 0, %s92
    %s110 = sphi 0, %s110
    %s112 = sphi 0, %s110
    %s113 = sphi 0, %s112
    %s127 = sphi 0, %s113
    %s131 = sphi 0, %s131
    %s133 = sphi 0, %s131
    %s134 = sphi 0, %s133
    %s148 = sphi 0, %s134
    %s152 = sphi 0, %s152
    %s154 = sphi 0, %s152
    %s155 = sphi 0, %s154
    %s169 = sphi 0, %s155
    %s175 = sphi 0, %s177
    %s178 = sphi 0, %s175
    %s179 = sphi 0, %s178
    %s195 = sphi 0, %s179
  $region4: #{feature_extractor.9} parent=0 // loop_header_branch
    %16 = sbr.rel (%p14) target = $region8
  $region5: #{feature_extractor.9} parent=0 // loop_body
    %s18 = ssub.s32 %s13, 1
    %s19 = ssub.s32 %s13, 2
    %s20 = sadd.s32 %s13, 1
    %s21 = ssub.s32 %s13, %s20
    %p22 = scmp.eq.s32.totalorder %s21, 0
    %s24 = sadd.s32 %s23, 1
    %s25 = scalar_select %p22, %s23, %s24
    %p28 = pneg %p22
    %p29 = scmp.eq.s32.totalorder %s13, 1
    %p30 = por %p28, %p29
    %p31 = scmp.ne.s32.totalorder %s23, %s26
    %p32 = scmp.eq.s32.totalorder %s13, 0
    %p33 = por %p31, %p32
    %p34 = scmp.ne.s32.totalorder %s23, %s26
    %p35 = scmp.eq.s32.totalorder %s18, 1
    %p36 = por %p34, %p35
    %p37 = scmp.ne.s32.totalorder %s26, %s27
    %p38 = scmp.eq.s32.totalorder %s18, 0
    %p39 = por %p37, %p38
    %p40 = scmp.ne.s32.totalorder %s26, %s27
    %p41 = scmp.eq.s32.totalorder %s19, 1
    %p42 = por %p40, %p41
    %p44 = scmp.ne.s32.totalorder %s27, %s43
    %p45 = scmp.eq.s32.totalorder %s19, 0
    %p46 = por %p44, %p45
    %s48 = sadd.s32 %s47, 1
    %p51 = scmp.eq.s32.totalorder %s13, 1
    %p52 = scmp.ne.s32.totalorder %s47, %s49
    %p53 = scmp.eq.s32.totalorder %s13, 0
    %p54 = por %p52, %p53
    %p55 = scmp.ne.s32.totalorder %s47, %s49
    %p56 = scmp.eq.s32.totalorder %s18, 1
    %p57 = por %p55, %p56
    %p58 = scmp.ne.s32.totalorder %s49, %s50
    %p59 = scmp.eq.s32.totalorder %s18, 0
    %p60 = por %p58, %p59
    %p61 = scmp.ne.s32.totalorder %s49, %s50
    %p62 = scmp.eq.s32.totalorder %s19, 1
    %p63 = por %p61, %p62
    %p65 = scmp.ne.s32.totalorder %s50, %s64
    %p66 = scmp.eq.s32.totalorder %s19, 0
    %p67 = por %p65, %p66
    %s69 = sadd.s32 %s68, 1
    %p72 = scmp.eq.s32.totalorder %s13, 1
    %p73 = scmp.ne.s32.totalorder %s68, %s70
    %p74 = scmp.eq.s32.totalorder %s13, 0
    %p75 = por %p73, %p74
    %p76 = scmp.ne.s32.totalorder %s68, %s70
    %p77 = scmp.eq.s32.totalorder %s18, 1
    %p78 = por %p76, %p77
    %p79 = scmp.ne.s32.totalorder %s70, %s71
    %p80 = scmp.eq.s32.totalorder %s18, 0
    %p81 = por %p79, %p80
    %p82 = scmp.ne.s32.totalorder %s70, %s71
    %p83 = scmp.eq.s32.totalorder %s19, 1
    %p84 = por %p82, %p83
    %p86 = scmp.ne.s32.totalorder %s71, %s85
    %p87 = scmp.eq.s32.totalorder %s19, 0
    %p88 = por %p86, %p87
    %s90 = sadd.s32 %s89, 1
    %p93 = scmp.eq.s32.totalorder %s13, 1
    %p94 = scmp.ne.s32.totalorder %s89, %s91
    %p95 = scmp.eq.s32.totalorder %s13, 0
    %p96 = por %p94, %p95
    %p97 = scmp.ne.s32.totalorder %s89, %s91
    %p98 = scmp.eq.s32.totalorder %s18, 1
    %p99 = por %p97, %p98
    %p100 = scmp.ne.s32.totalorder %s91, %s92
    %p101 = scmp.eq.s32.totalorder %s18, 0
    %p102 = por %p100, %p101
    %p103 = scmp.ne.s32.totalorder %s91, %s92
    %p104 = scmp.eq.s32.totalorder %s19, 1
    %p105 = por %p103, %p104
    %p107 = scmp.ne.s32.totalorder %s92, %s106
    %p108 = scmp.eq.s32.totalorder %s19, 0
    %p109 = por %p107, %p108
    %s111 = sadd.s32 %s110, 1
    %p114 = scmp.eq.s32.totalorder %s13, 1
    %p115 = scmp.ne.s32.totalorder %s110, %s112
    %p116 = scmp.eq.s32.totalorder %s13, 0
    %p117 = por %p115, %p116
    %p118 = scmp.ne.s32.totalorder %s110, %s112
    %p119 = scmp.eq.s32.totalorder %s18, 1
    %p120 = por %p118, %p119
    %p121 = scmp.ne.s32.totalorder %s112, %s113
    %p122 = scmp.eq.s32.totalorder %s18, 0
    %p123 = por %p121, %p122
    %p124 = scmp.ne.s32.totalorder %s112, %s113
    %p125 = scmp.eq.s32.totalorder %s19, 1
    %p126 = por %p124, %p125
    %p128 = scmp.ne.s32.totalorder %s113, %s127
    %p129 = scmp.eq.s32.totalorder %s19, 0
    %p130 = por %p128, %p129
    %s132 = sadd.s32 %s131, 1
    %p135 = scmp.eq.s32.totalorder %s13, 1
    %p136 = scmp.ne.s32.totalorder %s131, %s133
    %p137 = scmp.eq.s32.totalorder %s13, 0
    %p138 = por %p136, %p137
    %p139 = scmp.ne.s32.totalorder %s131, %s133
    %p140 = scmp.eq.s32.totalorder %s18, 1
    %p141 = por %p139, %p140
    %p142 = scmp.ne.s32.totalorder %s133, %s134
    %p143 = scmp.eq.s32.totalorder %s18, 0
    %p144 = por %p142, %p143
    %p145 = scmp.ne.s32.totalorder %s133, %s134
    %p146 = scmp.eq.s32.totalorder %s19, 1
    %p147 = por %p145, %p146
    %p149 = scmp.ne.s32.totalorder %s134, %s148
    %p150 = scmp.eq.s32.totalorder %s19, 0
    %p151 = por %p149, %p150
    %s153 = sadd.s32 %s152, 1
    %p156 = scmp.eq.s32.totalorder %s13, 1
    %p157 = scmp.ne.s32.totalorder %s152, %s154
    %p158 = scmp.eq.s32.totalorder %s13, 0
    %p159 = por %p157, %p158
    %p160 = scmp.ne.s32.totalorder %s152, %s154
    %p161 = scmp.eq.s32.totalorder %s18, 1
    %p162 = por %p160, %p161
    %p163 = scmp.ne.s32.totalorder %s154, %s155
    %p164 = scmp.eq.s32.totalorder %s18, 0
    %p165 = por %p163, %p164
    %p166 = scmp.ne.s32.totalorder %s154, %s155
    %p167 = scmp.eq.s32.totalorder %s19, 1
    %p168 = por %p166, %p167
    %p170 = scmp.ne.s32.totalorder %s155, %s169
    %p171 = scmp.eq.s32.totalorder %s19, 0
    %p172 = por %p170, %p171
    %s173 = ssub.s32 %s13, %s20
    %p174 = scmp.eq.s32.totalorder %s173, 0
    %s176 = sadd.s32 %s175, 1
    %s177 = scalar_select %p174, %s175, %s176
    %p180 = pneg %p174
    %p181 = scmp.eq.s32.totalorder %s13, 1
    %p182 = por %p180, %p181
    %p183 = scmp.ne.s32.totalorder %s175, %s178
    %p184 = scmp.eq.s32.totalorder %s13, 0
    %p185 = por %p183, %p184
    %p186 = scmp.ne.s32.totalorder %s175, %s178
    %p187 = scmp.eq.s32.totalorder %s18, 1
    %p188 = por %p186, %p187
    %p189 = scmp.ne.s32.totalorder %s178, %s179
    %p190 = scmp.eq.s32.totalorder %s18, 0
    %p191 = por %p189, %p190
    %p192 = scmp.ne.s32.totalorder %s178, %s179
    %p193 = scmp.eq.s32.totalorder %s19, 1
    %p194 = por %p192, %p193
    %p196 = scmp.ne.s32.totalorder %s179, %s195
    %p197 = scmp.eq.s32.totalorder %s19, 0
    %p198 = por %p196, %p197
    %p199 = scmp.le.s32.totalorder 1, %s13
    %p200 = scmp.lt.s32.totalorder %s13, 3
    %p201 = pnand %p199, %p200
    %p202 = pneg %p201
    // Predicated region
    $region9: #{feature_extractor.9} parent=5 // pred_check
      _
    $region10: #{feature_extractor.9} parent=5 // pred_check_branch
      %204 = sbr.rel (%p201) target = $region12
    $region11: #{feature_extractor.9} parent=5 // pred_region
      %s205 = ssub.s32 %s13, 1
      // Predicated region
      $region13: #{feature_extractor.9} parent=11 // pred_check
        %p206 = pneg %p60
      $region14: #{feature_extractor.9} parent=11 // pred_check_branch
        %208 = sbr.rel (%p206) target = $region16
      $region15: #{feature_extractor.9} parent=11 // pred_region
        _
      $region16: #{feature_extractor.9} parent=11 // pred_fallthru
        _
      // Predicated region
      $region17: #{feature_extractor.9} parent=11 // pred_check
        %p209 = pneg %p81
      $region18: #{feature_extractor.9} parent=11 // pred_check_branch
        %211 = sbr.rel (%p209) target = $region20
      $region19: #{feature_extractor.9} parent=11 // pred_region
        _
      $region20: #{feature_extractor.9} parent=11 // pred_fallthru
        _
      // Predicated region
      $region21: #{feature_extractor.9} parent=11 // pred_check
        %p212 = pneg %p102
      $region22: #{feature_extractor.9} parent=11 // pred_check_branch
        %214 = sbr.rel (%p212) target = $region24
      $region23: #{feature_extractor.9} parent=11 // pred_region
        _
      $region24: #{feature_extractor.9} parent=11 // pred_fallthru
        _
      // Predicated region
      $region25: #{feature_extractor.9} parent=11 // pred_check
        %p215 = pneg %p123
      $region26: #{feature_extractor.9} parent=11 // pred_check_branch
        %217 = sbr.rel (%p215) target = $region28
      $region27: #{feature_extractor.9} parent=11 // pred_region
        _
      $region28: #{feature_extractor.9} parent=11 // pred_fallthru
        _
      // Predicated region
      $region29: #{feature_extractor.9} parent=11 // pred_check
        %p218 = pneg %p144
      $region30: #{feature_extractor.9} parent=11 // pred_check_branch
        %220 = sbr.rel (%p218) target = $region32
      $region31: #{feature_extractor.9} parent=11 // pred_region
        _
      $region32: #{feature_extractor.9} parent=11 // pred_fallthru
        _
      // Predicated region
      $region33: #{feature_extractor.9} parent=11 // pred_check
        %p221 = pneg %p165
      $region34: #{feature_extractor.9} parent=11 // pred_check_branch
        %223 = sbr.rel (%p221) target = $region36
      $region35: #{feature_extractor.9} parent=11 // pred_region
        _
      $region36: #{feature_extractor.9} parent=11 // pred_fallthru
        _
    $region12: #{feature_extractor.9} parent=5 // pred_fallthru
      _
    %p224 = scmp.lt.s32.totalorder %s13, 2
    // Predicated region
    $region37: #{feature_extractor.9} parent=5 // pred_check
      %p225 = pneg %p224
    $region38: #{feature_extractor.9} parent=5 // pred_check_branch
      %227 = sbr.rel (%p225) target = $region40
    $region39: #{feature_extractor.9} parent=5 // pred_region
      // Predicated region
      $region41: #{feature_extractor.9} parent=39 // pred_check
        %p228 = pneg %p33
      $region42: #{feature_extractor.9} parent=39 // pred_check_branch
        %230 = sbr.rel (%p228) target = $region44
      $region43: #{feature_extractor.9} parent=39 // pred_region
        %p231 = scmp.lt.s32.totalorder %s13, 1
        %s232 = scalar_select %p231, %s13, 1
        %s233 = smul.addr %s232, 16
        %s234 = smul.addr %s233, 4
        %s235 = scalar_lea.vmem %s0, %s234
      $region44: #{feature_extractor.9} parent=39 // pred_fallthru
        _
    $region40: #{feature_extractor.9} parent=5 // pred_fallthru
      _
    %p236 = scmp.le.s32.totalorder 1, %s13
    %p237 = scmp.lt.s32.totalorder %s13, 3
    %p238 = pnand %p236, %p237
    %p239 = pneg %p238
    // Predicated region
    $region45: #{feature_extractor.9} parent=5 // pred_check
      _
    $region46: #{feature_extractor.9} parent=5 // pred_check_branch
      %241 = sbr.rel (%p238) target = $region48
    $region47: #{feature_extractor.9} parent=5 // pred_region
      %s242 = ssub.s32 %s13, 1
      %p243 = scmp.lt.s32.totalorder %s18, 1
      %s244 = scalar_select %p243, %s18, 1
      %s245 = smul.addr %s244, 16
      %s246 = smul.addr %s245, 4
      %s247 = scalar_lea.vmem %s0, %s246
      %p248 = pneg %p39
      %p249 = pneg %p36
      %p250 = pneg %p60
      %p251 = pneg %p57
      %p252 = pneg %p81
      %p253 = pneg %p78
      %p254 = pneg %p102
      %p255 = pneg %p99
      %p256 = pneg %p123
      %p257 = pneg %p120
      %p258 = pneg %p144
      %p259 = pneg %p141
      %p260 = pneg %p165
      %p261 = pneg %p162
      %p262 = pneg %p191
      %p263 = pneg %p188
      %p264 = scmp.lt.s32.totalorder %s18, 1
      %s265 = scalar_select %p264, %s18, 1
      %s266 = smul.addr %s265, 8
      %s267 = smul.addr %s266, 4
      %s268 = scalar_lea.vmem %s7, %s267
      %p269 = scmp.lt.s32.totalorder %s18, 1
      %s270 = scalar_select %p269, %s18, 1
      %s271 = smul.addr %s270, 16
      %s272 = smul.addr %s271, 4
      %s273 = scalar_lea.vmem %s0, %s272
      %p274 = scmp.lt.s32.totalorder %s18, 1
      %s275 = scalar_select %p274, %s18, 1
      %s276 = smul.addr %s275, 8
      %s277 = smul.addr %s276, 4
      %s278 = scalar_lea.vmem %s7, %s277
      %v280 = vld [vmem:[%s273] sm:$0xff]
      %v281 = vld [vmem:[%s273 + $0x8] sm:$0xff]
      %v282 = vld [vmem:[%s273 + $0x10] sm:$0xff]
      %v283 = vld [vmem:[%s273 + $0x18] sm:$0xff]
      %v284 = vld [vmem:[%s273 + $0x20] sm:$0xff]
      %v285 = vld [vmem:[%s273 + $0x28] sm:$0xff]
      %v286 = vld [vmem:[%s273 + $0x30] sm:$0xff]
      %v287 = vld [vmem:[%s273 + $0x38] sm:$0xff]
      %v288 = vunpack.c.l.bf16 %v280
      %v289 = vunpack.c.h.bf16 %v280
      %v290 = vunpack.c.l.bf16 %v281
      %v291 = vunpack.c.h.bf16 %v281
      %v292 = vunpack.c.l.bf16 %v282
      %v293 = vunpack.c.h.bf16 %v282
      %v294 = vunpack.c.l.bf16 %v283
      %v295 = vunpack.c.h.bf16 %v283
      %v296 = vunpack.c.l.bf16 %v284
      %v297 = vunpack.c.h.bf16 %v284
      %v298 = vunpack.c.l.bf16 %v285
      %v299 = vunpack.c.h.bf16 %v285
      %v300 = vunpack.c.l.bf16 %v286
      %v301 = vunpack.c.h.bf16 %v286
      %v302 = vunpack.c.l.bf16 %v287
      %v303 = vunpack.c.h.bf16 %v287
      %v304 = vld [vmem:[%s2] sm:$0x3]
      %v306 = vlaneseq
      %v307 = vshrl.u32 %v306, 7
      %v308 = vsub.s32 0, %v307
      %v309 = vrot.slane %v304, %v308
      %v310 = vlaneseq
      %v311 = vshrl.u32 %v310, 7
      %v312 = vsub.s32 1, %v311
      %v313 = vrot.slane %v304, %v312
      %v316 = vmul.f32 %v288, %v309
      %v317 = vmul.f32 %v289, %v313
      %v318 = vmul.f32 %v290, %v309
      %v319 = vmul.f32 %v291, %v313
      %v320 = vmul.f32 %v292, %v309
      %v321 = vmul.f32 %v293, %v313
      %v322 = vmul.f32 %v294, %v309
      %v323 = vmul.f32 %v295, %v313
      %v324 = vmul.f32 %v296, %v309
      %v325 = vmul.f32 %v297, %v313
      %v326 = vmul.f32 %v298, %v309
      %v327 = vmul.f32 %v299, %v313
      %v328 = vmul.f32 %v300, %v309
      %v329 = vmul.f32 %v301, %v313
      %v330 = vmul.f32 %v302, %v309
      %v331 = vmul.f32 %v303, %v313
      %v332 = vld [vmem:[%s3] sm:$0x3]
      %v334 = vlaneseq
      %v335 = vshrl.u32 %v334, 7
      %v336 = vsub.s32 0, %v335
      %v337 = vrot.slane %v332, %v336
      %v338 = vlaneseq
      %v339 = vshrl.u32 %v338, 7
      %v340 = vsub.s32 1, %v339
      %v341 = vrot.slane %v332, %v340
      %v344 = vadd.f32 %v316, %v337
      %v345 = vadd.f32 %v317, %v341
      %v346 = vadd.f32 %v318, %v337
      %v347 = vadd.f32 %v319, %v341
      %v348 = vadd.f32 %v320, %v337
      %v349 = vadd.f32 %v321, %v341
      %v350 = vadd.f32 %v322, %v337
      %v351 = vadd.f32 %v323, %v341
      %v352 = vadd.f32 %v324, %v337
      %v353 = vadd.f32 %v325, %v341
      %v354 = vadd.f32 %v326, %v337
      %v355 = vadd.f32 %v327, %v341
      %v356 = vadd.f32 %v328, %v337
      %v357 = vadd.f32 %v329, %v341
      %v358 = vadd.f32 %v330, %v337
      %v359 = vadd.f32 %v331, %v341
      %v360 = vmax.f32 %v344, 0.0
      %v361 = vmax.f32 %v345, 0.0
      %v362 = vmax.f32 %v346, 0.0
      %v363 = vmax.f32 %v347, 0.0
      %v364 = vmax.f32 %v348, 0.0
      %v365 = vmax.f32 %v349, 0.0
      %v366 = vmax.f32 %v350, 0.0
      %v367 = vmax.f32 %v351, 0.0
      %v368 = vmax.f32 %v352, 0.0
      %v369 = vmax.f32 %v353, 0.0
      %v370 = vmax.f32 %v354, 0.0
      %v371 = vmax.f32 %v355, 0.0
      %v372 = vmax.f32 %v356, 0.0
      %v373 = vmax.f32 %v357, 0.0
      %v374 = vmax.f32 %v358, 0.0
      %v375 = vmax.f32 %v359, 0.0
      %v376 = vpack.c.bf16 %v362, %v360
      %v377 = vpack.c.bf16 %v363, %v361
      %v378 = vpack.c.bf16 %v366, %v364
      %v379 = vpack.c.bf16 %v367, %v365
      %v380 = vpack.c.bf16 %v370, %v368
      %v381 = vpack.c.bf16 %v371, %v369
      %v382 = vpack.c.bf16 %v374, %v372
      %v383 = vpack.c.bf16 %v375, %v373
      %v384 = vld [vmem:[%s1] sm:$0xf]
      %v385 = vld [vmem:[%s1 + $0x4] sm:$0xf]
      %v386 = vld [vmem:[%s1 + $0x8] sm:$0xf]
      %v387 = vld [vmem:[%s1 + $0xc] sm:$0xf]
      %v388 = vld [vmem:[%s1 + $0x10] sm:$0xf]
      %v389 = vld [vmem:[%s1 + $0x14] sm:$0xf]
      %v390 = vld [vmem:[%s1 + $0x18] sm:$0xf]
      %v391 = vld [vmem:[%s1 + $0x1c] sm:$0xf]
      %v392 = vld [vmem:[%s1 + $0x20] sm:$0xf]
      %v393 = vld [vmem:[%s1 + $0x24] sm:$0xf]
      %v394 = vld [vmem:[%s1 + $0x28] sm:$0xf]
      %v395 = vld [vmem:[%s1 + $0x2c] sm:$0xf]
      %v396 = vld [vmem:[%s1 + $0x30] sm:$0xf]
      %v397 = vld [vmem:[%s1 + $0x34] sm:$0xf]
      %v398 = vld [vmem:[%s1 + $0x38] sm:$0xf]
      %v399 = vld [vmem:[%s1 + $0x3c] sm:$0xf]
      %v400 = vld [vmem:[%s1 + $0x40] sm:$0xf]
      %v401 = vld [vmem:[%s1 + $0x44] sm:$0xf]
      %v402 = vld [vmem:[%s1 + $0x48] sm:$0xf]
      %v403 = vld [vmem:[%s1 + $0x4c] sm:$0xf]
      %v404 = vld [vmem:[%s1 + $0x50] sm:$0xf]
      %v405 = vld [vmem:[%s1 + $0x54] sm:$0xf]
      %v406 = vld [vmem:[%s1 + $0x58] sm:$0xf]
      %v407 = vld [vmem:[%s1 + $0x5c] sm:$0xf]
      %v408 = vld [vmem:[%s1 + $0x60] sm:$0xf]
      %v409 = vld [vmem:[%s1 + $0x64] sm:$0xf]
      %v410 = vld [vmem:[%s1 + $0x68] sm:$0xf]
      %v411 = vld [vmem:[%s1 + $0x6c] sm:$0xf]
      %v412 = vld [vmem:[%s1 + $0x70] sm:$0xf]
      %v413 = vld [vmem:[%s1 + $0x74] sm:$0xf]
      %v414 = vld [vmem:[%s1 + $0x78] sm:$0xf]
      %v415 = vld [vmem:[%s1 + $0x7c] sm:$0xf]
      %v448 = vunpack.c.l.b16 %v384
      %v449 = vunpack.c.l.b16 %v385
      %v450 = vunpack.c.l.b16 %v386
      %v451 = vunpack.c.l.b16 %v387
      %v452 = vunpack.c.l.b16 %v388
      %v453 = vunpack.c.l.b16 %v389
      %v454 = vunpack.c.l.b16 %v390
      %v455 = vunpack.c.l.b16 %v391
      %v456 = vunpack.c.l.b16 %v392
      %v457 = vunpack.c.l.b16 %v393
      %v458 = vunpack.c.l.b16 %v394
      %v459 = vunpack.c.l.b16 %v395
      %v460 = vunpack.c.l.b16 %v396
      %v461 = vunpack.c.l.b16 %v397
      %v462 = vunpack.c.l.b16 %v398
      %v463 = vunpack.c.l.b16 %v399
      %v464 = vunpack.c.l.b16 %v400
      %v465 = vunpack.c.l.b16 %v401
      %v466 = vunpack.c.l.b16 %v402
      %v467 = vunpack.c.l.b16 %v403
      %v468 = vunpack.c.l.b16 %v404
      %v469 = vunpack.c.l.b16 %v405
      %v470 = vunpack.c.l.b16 %v406
      %v471 = vunpack.c.l.b16 %v407
      %v472 = vunpack.c.l.b16 %v408
      %v473 = vunpack.c.l.b16 %v409
      %v474 = vunpack.c.l.b16 %v410
      %v475 = vunpack.c.l.b16 %v411
      %v476 = vunpack.c.l.b16 %v412
      %v477 = vunpack.c.l.b16 %v413
      %v478 = vunpack.c.l.b16 %v414
      %v479 = vunpack.c.l.b16 %v415
      %v480 = vpack.c.b16 %v449, %v448
      %v481 = vpack.c.b16 %v451, %v450
      %v482 = vpack.c.b16 %v453, %v452
      %v483 = vpack.c.b16 %v455, %v454
      %v484 = vpack.c.b16 %v457, %v456
      %v485 = vpack.c.b16 %v459, %v458
      %v486 = vpack.c.b16 %v461, %v460
      %v487 = vpack.c.b16 %v463, %v462
      %v488 = vpack.c.b16 %v465, %v464
      %v489 = vpack.c.b16 %v467, %v466
      %v490 = vpack.c.b16 %v469, %v468
      %v491 = vpack.c.b16 %v471, %v470
      %v492 = vpack.c.b16 %v473, %v472
      %v493 = vpack.c.b16 %v475, %v474
      %v494 = vpack.c.b16 %v477, %v476
      %v495 = vpack.c.b16 %v479, %v478
      %512 = vmatprep.subr.bf16.mxu0 0
      %513 = vmatpush1.bf16.msra.mxu0 %v480
      %514 = vmatprep.subr.bf16.mxu0 0
      %515 = vmatpush1.bf16.msra.mxu0 %v481
      %516 = vmatprep.subr.bf16.mxu0 0
      %517 = vmatpush1.bf16.msra.mxu0 %v482
      %518 = vmatprep.subr.bf16.mxu0 0
      %519 = vmatpush1.bf16.msra.mxu0 %v483
      %520 = vmatprep.subr.bf16.mxu0 0
      %521 = vmatpush1.bf16.msra.mxu0 %v484
      %522 = vmatprep.subr.bf16.mxu0 0
      %523 = vmatpush1.bf16.msra.mxu0 %v485
      %524 = vmatprep.subr.bf16.mxu0 0
      %525 = vmatpush1.bf16.msra.mxu0 %v486
      %526 = vmatprep.subr.bf16.mxu0 0
      %527 = vmatpush1.bf16.msra.mxu0 %v487
      %528 = vmatprep.subr.bf16.mxu0 0
      %529 = vmatpush1.bf16.msra.mxu0 %v488
      %530 = vmatprep.subr.bf16.mxu0 0
      %531 = vmatpush1.bf16.msra.mxu0 %v489
      %532 = vmatprep.subr.bf16.mxu0 0
      %533 = vmatpush1.bf16.msra.mxu0 %v490
      %534 = vmatprep.subr.bf16.mxu0 0
      %535 = vmatpush1.bf16.msra.mxu0 %v491
      %536 = vmatprep.subr.bf16.mxu0 0
      %537 = vmatpush1.bf16.msra.mxu0 %v492
      %538 = vmatprep.subr.bf16.mxu0 0
      %539 = vmatpush1.bf16.msra.mxu0 %v493
      %540 = vmatprep.subr.bf16.mxu0 0
      %541 = vmatpush1.bf16.msra.mxu0 %v494
      %542 = vmatprep.subr.bf16.mxu0 0
      %543 = vmatpush1.bf16.msra.mxu0 %v495
      %544 = vmatprep.mubr.bf16.mxu0 %v377
      %545 = vmatmul.mubr.bf16.gmra.mrb[0].mxu0 %v376
      %v546 = vpop.f32.mrb[0].mxu0
      %v547 = vadd.f32 0.0, %v546
      %v548 = vpop.f32.mrb[0].mxu0
      %v549 = vpop.f32.mrb[0].mxu0
      %v550 = vadd.f32 0.0, %v549
      %v551 = vpop.f32.mrb[0].mxu0
      %552 = vmatprep.mubr.bf16.mxu0 %v379
      %553 = vmatmul.mubr.bf16.gmra.mrb[0].mxu0 %v378
      %v554 = vpop.f32.mrb[0].mxu0
      %v555 = vadd.f32 0.0, %v554
      %v556 = vpop.f32.mrb[0].mxu0
      %v557 = vpop.f32.mrb[0].mxu0
      %v558 = vadd.f32 0.0, %v557
      %v559 = vpop.f32.mrb[0].mxu0
      %560 = vmatprep.mubr.bf16.mxu0 %v381
      %561 = vmatmul.mubr.bf16.gmra.mrb[0].mxu0 %v380
      %v562 = vpop.f32.mrb[0].mxu0
      %v563 = vadd.f32 0.0, %v562
      %v564 = vpop.f32.mrb[0].mxu0
      %v565 = vpop.f32.mrb[0].mxu0
      %v566 = vadd.f32 0.0, %v565
      %v567 = vpop.f32.mrb[0].mxu0
      %568 = vmatprep.mubr.bf16.mxu0 %v383
      %569 = vmatmul.mubr.bf16.gmra.mrb[0].mxu0 %v382
      %v570 = vpop.f32.mrb[0].mxu0
      %v571 = vadd.f32 0.0, %v570
      %v572 = vpop.f32.mrb[0].mxu0
      %v573 = vpop.f32.mrb[0].mxu0
      %v574 = vadd.f32 0.0, %v573
      %v575 = vpop.f32.mrb[0].mxu0
      %576 = vdwg.mxu0
      %v577 = vld [vmem:[%s5] sm:$0x1]
      %v579 = vlaneseq
      %v580 = vshrl.u32 %v579, 7
      %v581 = vsub.s32 0, %v580
      %v582 = vrot.slane %v577, %v581
      %v584 = vmul.f32 %v547, %v582
      %v585 = vmul.f32 %v550, %v582
      %v586 = vmul.f32 %v555, %v582
      %v587 = vmul.f32 %v558, %v582
      %v588 = vmul.f32 %v563, %v582
      %v589 = vmul.f32 %v566, %v582
      %v590 = vmul.f32 %v571, %v582
      %v591 = vmul.f32 %v574, %v582
      %v592 = vld [vmem:[%s6] sm:$0x1]
      %v594 = vlaneseq
      %v595 = vshrl.u32 %v594, 7
      %v596 = vsub.s32 0, %v595
      %v597 = vrot.slane %v592, %v596
      %v599 = vadd.f32 %v584, %v597
      %v600 = vadd.f32 %v585, %v597
      %v601 = vadd.f32 %v586, %v597
      %v602 = vadd.f32 %v587, %v597
      %v603 = vadd.f32 %v588, %v597
      %v604 = vadd.f32 %v589, %v597
      %v605 = vadd.f32 %v590, %v597
      %v606 = vadd.f32 %v591, %v597
      %v607 = vmax.f32 %v599, 0.0
      %v608 = vmax.f32 %v600, 0.0
      %v609 = vmax.f32 %v601, 0.0
      %v610 = vmax.f32 %v602, 0.0
      %v611 = vmax.f32 %v603, 0.0
      %v612 = vmax.f32 %v604, 0.0
      %v613 = vmax.f32 %v605, 0.0
      %v614 = vmax.f32 %v606, 0.0
      %v615 = vpack.c.bf16 %v608, %v607
      %v616 = vpack.c.bf16 %v610, %v609
      %v617 = vpack.c.bf16 %v612, %v611
      %v618 = vpack.c.bf16 %v614, %v613
      %619 = vst [vmem:[#allocation2] sm:$0xf] 0
      %620 = vst [vmem:[#allocation2 + $0x4] sm:$0x1] 0
      %621 = vst [vmem:[#allocation2 + $0x8] sm:$0xf] 0
      %622 = vst [vmem:[#allocation2 + $0xc] sm:$0x1] 0
      %623 = vst [vmem:[#allocation2 + $0x10] sm:$0xf] 0
      %624 = vst [vmem:[#allocation2 + $0x14] sm:$0x1] 0
      %625 = vst [vmem:[#allocation2 + $0x18] sm:$0xf] 0
      %626 = vst [vmem:[#allocation2 + $0x1c] sm:$0x1] 0
      %627 = vst [vmem:[#allocation2 + $0x20] sm:$0xf] 0
      %628 = vst [vmem:[#allocation2 + $0x24] sm:$0x1] 0
      %629 = vst [vmem:[#allocation2 + $0x28] sm:$0xf] 0
      %630 = vst [vmem:[#allocation2 + $0x2c] sm:$0x1] 0
      %631 = vst [vmem:[#allocation2 + $0x30] sm:$0xf] 0
      %632 = vst [vmem:[#allocation2 + $0x34] sm:$0x1] 0
      %633 = vst [vmem:[#allocation2 + $0x38] sm:$0xf] 0
      %634 = vst [vmem:[#allocation2 + $0x3c] sm:$0x1] 0
      %635 = vst [vmem:[#allocation2 + $0x40] sm:$0xf] 0
      %636 = vst [vmem:[#allocation2 + $0x44] sm:$0x1] 0
      %637 = vst [vmem:[#allocation2 + $0x48] sm:$0xf] 0
      %638 = vst [vmem:[#allocation2 + $0x4c] sm:$0x1] 0
      %v643 = vunpack.c.l.b16 %v615
      %v644 = vunpack.c.h.b16 %v615
      %v645 = vunpack.c.l.b16 %v616
      %v646 = vunpack.c.h.b16 %v616
      %v647 = vunpack.c.l.b16 %v617
      %v648 = vunpack.c.h.b16 %v617
      %v649 = vunpack.c.l.b16 %v618
      %v650 = vunpack.c.h.b16 %v618
      %v651 = vpack.c.b16 %v643, %v643
      %v652 = vpack.c.b16 %v644, %v644
      %v653 = vpack.c.b16 %v645, %v645
      %v654 = vpack.c.b16 %v646, %v646
      %v655 = vpack.c.b16 %v647, %v647
      %v656 = vpack.c.b16 %v648, %v648
      %v657 = vpack.c.b16 %v649, %v649
      %v658 = vpack.c.b16 %v650, %v650
      %v660 = vshrl.u32 %v651, 16
      %v662 = vrot.slane %v660, 7
      %v663 = vshll.u32 %v651, 16
      %v665 = vor.u32 %v662, %v663
      %v666 = vrot.slane %v662, 4
      %v668 = vshrl.u32 %v652, 16
      %v670 = vrot.slane %v668, 7
      %v671 = vshll.u32 %v652, 16
      %v673 = vor.u32 %v670, %v671
      %v674 = vrot.slane %v670, 4
      %v676 = vshrl.u32 %v653, 16
      %v678 = vrot.slane %v676, 7
      %v679 = vshll.u32 %v653, 16
      %v681 = vor.u32 %v678, %v679
      %v682 = vrot.slane %v678, 4
      %v684 = vshrl.u32 %v654, 16
      %v686 = vrot.slane %v684, 7
      %v687 = vshll.u32 %v654, 16
      %v689 = vor.u32 %v686, %v687
      %v690 = vrot.slane %v686, 4
      %v692 = vshrl.u32 %v655, 16
      %v694 = vrot.slane %v692, 7
      %v695 = vshll.u32 %v655, 16
      %v697 = vor.u32 %v694, %v695
      %v698 = vrot.slane %v694, 4
      %v700 = vshrl.u32 %v656, 16
      %v702 = vrot.slane %v700, 7
      %v703 = vshll.u32 %v656, 16
      %v705 = vor.u32 %v702, %v703
      %v706 = vrot.slane %v702, 4
      %v708 = vshrl.u32 %v657, 16
      %v710 = vrot.slane %v708, 7
      %v711 = vshll.u32 %v657, 16
      %v713 = vor.u32 %v710, %v711
      %v714 = vrot.slane %v710, 4
      %v716 = vshrl.u32 %v658, 16
      %v718 = vrot.slane %v716, 7
      %v719 = vshll.u32 %v658, 16
      %v721 = vor.u32 %v718, %v719
      %v722 = vrot.slane %v718, 4
      %s739 = scalar_lea.vmem [#allocation2], 8
      %vm740 = vcmask 1043456
      %vm741 = vsmask.f32 7938
      %vm742 = vmand %vm740, %vm741
      %v743 = vld [vmem:[%s739] sm:$0xf]
      %v744 = vsel %vm742, %v665, %v743
      %745 = vst [vmem:[%s739] sm:$0xf] %v744
      %vm746 = vcmask 1040384
      %vm747 = vsmask.f32 256
      %vm748 = vmand %vm746, %vm747
      %v749 = vld [vmem:[%s739 + $0x4] sm:$0x1]
      %v750 = vsel %vm748, %v666, %v749
      %751 = vst [vmem:[%s739 + $0x4] sm:$0x1] %v750
      %v752 = vld [vmem:[%s739 + $0x8] sm:$0xf]
      %v753 = vsel %vm742, %v673, %v752
      %754 = vst [vmem:[%s739 + $0x8] sm:$0xf] %v753
      %v755 = vld [vmem:[%s739 + $0xc] sm:$0x1]
      %v756 = vsel %vm748, %v674, %v755
      %757 = vst [vmem:[%s739 + $0xc] sm:$0x1] %v756
      %v758 = vld [vmem:[%s739 + $0x10] sm:$0xf]
      %v759 = vsel %vm742, %v681, %v758
      %760 = vst [vmem:[%s739 + $0x10] sm:$0xf] %v759
      %v761 = vld [vmem:[%s739 + $0x14] sm:$0x1]
      %v762 = vsel %vm748, %v682, %v761
      %763 = vst [vmem:[%s739 + $0x14] sm:$0x1] %v762
      %v764 = vld [vmem:[%s739 + $0x18] sm:$0xf]
      %v765 = vsel %vm742, %v689, %v764
      %766 = vst [vmem:[%s739 + $0x18] sm:$0xf] %v765
      %v767 = vld [vmem:[%s739 + $0x1c] sm:$0x1]
      %v768 = vsel %vm748, %v690, %v767
      %769 = vst [vmem:[%s739 + $0x1c] sm:$0x1] %v768
      %v770 = vld [vmem:[%s739 + $0x20] sm:$0xf]
      %v771 = vsel %vm742, %v697, %v770
      %772 = vst [vmem:[%s739 + $0x20] sm:$0xf] %v771
      %v773 = vld [vmem:[%s739 + $0x24] sm:$0x1]
      %v774 = vsel %vm748, %v698, %v773
      %775 = vst [vmem:[%s739 + $0x24] sm:$0x1] %v774
      %v776 = vld [vmem:[%s739 + $0x28] sm:$0xf]
      %v777 = vsel %vm742, %v705, %v776
      %778 = vst [vmem:[%s739 + $0x28] sm:$0xf] %v777
      %v779 = vld [vmem:[%s739 + $0x2c] sm:$0x1]
      %v780 = vsel %vm748, %v706, %v779
      %781 = vst [vmem:[%s739 + $0x2c] sm:$0x1] %v780
      %v782 = vld [vmem:[%s739 + $0x30] sm:$0xf]
      %v783 = vsel %vm742, %v713, %v782
      %784 = vst [vmem:[%s739 + $0x30] sm:$0xf] %v783
      %v785 = vld [vmem:[%s739 + $0x34] sm:$0x1]
      %v786 = vsel %vm748, %v714, %v785
      %787 = vst [vmem:[%s739 + $0x34] sm:$0x1] %v786
      %v788 = vld [vmem:[%s739 + $0x38] sm:$0xf]
      %v789 = vsel %vm742, %v721, %v788
      %790 = vst [vmem:[%s739 + $0x38] sm:$0xf] %v789
      %v791 = vld [vmem:[%s739 + $0x3c] sm:$0x1]
      %v792 = vsel %vm748, %v722, %v791
      %793 = vst [vmem:[%s739 + $0x3c] sm:$0x1] %v792
      %v794 = vld [vmem:[#allocation2] sm:$0xf]
      %v795 = vld [vmem:[#allocation2 + $0x8] sm:$0xf]
      %v796 = vld [vmem:[#allocation2 + $0x10] sm:$0xf]
      %v797 = vld [vmem:[#allocation2 + $0x18] sm:$0xf]
      %v798 = vld [vmem:[#allocation2 + $0x20] sm:$0xf]
      %v799 = vld [vmem:[#allocation2 + $0x28] sm:$0xf]
      %v800 = vld [vmem:[#allocation2 + $0x30] sm:$0xf]
      %v801 = vld [vmem:[#allocation2 + $0x38] sm:$0xf]
      %v802 = vld [vmem:[%s4] sm:$0xf]
      %v803 = vld [vmem:[%s4 + $0x4] sm:$0xf]
      %v804 = vld [vmem:[%s4 + $0x8] sm:$0xf]
      %v805 = vld [vmem:[%s4 + $0xc] sm:$0xf]
      %v806 = vld [vmem:[%s4 + $0x10] sm:$0xf]
      %v807 = vld [vmem:[%s4 + $0x14] sm:$0xf]
      %v808 = vld [vmem:[%s4 + $0x18] sm:$0xf]
      %v809 = vld [vmem:[%s4 + $0x1c] sm:$0xf]
      %v810 = vld [vmem:[%s4 + $0x20] sm:$0xf]
      %v811 = vld [vmem:[%s4 + $0x24] sm:$0xf]
      %v812 = vld [vmem:[%s4 + $0x28] sm:$0xf]
      %v813 = vld [vmem:[%s4 + $0x2c] sm:$0xf]
      %v814 = vld [vmem:[%s4 + $0x30] sm:$0xf]
      %v815 = vld [vmem:[%s4 + $0x34] sm:$0xf]
      %v816 = vld [vmem:[%s4 + $0x38] sm:$0xf]
      %v817 = vld [vmem:[%s4 + $0x3c] sm:$0xf]
      %v818 = vld [vmem:[#allocation2 + $0x4] sm:$0x1]
      %v819 = vld [vmem:[#allocation2 + $0xc] sm:$0x1]
      %v820 = vld [vmem:[#allocation2 + $0x14] sm:$0x1]
      %v821 = vld [vmem:[#allocation2 + $0x1c] sm:$0x1]
      %v822 = vld [vmem:[#allocation2 + $0x24] sm:$0x1]
      %v823 = vld [vmem:[#allocation2 + $0x2c] sm:$0x1]
      %v824 = vld [vmem:[#allocation2 + $0x34] sm:$0x1]
      %v825 = vld [vmem:[#allocation2 + $0x3c] sm:$0x1]
      %vm826 = vsmask.f32 3328
      %vm827 = vsmask.f32 7440
      %vm828 = vmor %vm826, %vm827
      %v830 = vshrl.u32 %v794, 16
      %v832 = vrot.slane %v830, 4
      %v833 = vshll.u32 %v794, 16
      %v835 = vrot.slane %v833, 5
      %v836 = vor.u32 %v832, %v835
      %v837 = vrot.slane %v836, 4
      %v839 = vshll.u32 %v818, 16
      %v841 = vrot.slane %v839, 5
      %v842 = vsel %vm828, %v837, %v841
      %v844 = vshrl.u32 %v795, 16
      %v846 = vrot.slane %v844, 4
      %v847 = vshll.u32 %v795, 16
      %v849 = vrot.slane %v847, 5
      %v850 = vor.u32 %v846, %v849
      %v851 = vrot.slane %v850, 4
      %v853 = vshll.u32 %v819, 16
      %v855 = vrot.slane %v853, 5
      %v856 = vsel %vm828, %v851, %v855
      %v858 = vshrl.u32 %v796, 16
      %v860 = vrot.slane %v858, 4
      %v861 = vshll.u32 %v796, 16
      %v863 = vrot.slane %v861, 5
      %v864 = vor.u32 %v860, %v863
      %v865 = vrot.slane %v864, 4
      %v867 = vshll.u32 %v820, 16
      %v869 = vrot.slane %v867, 5
      %v870 = vsel %vm828, %v865, %v869
      %v872 = vshrl.u32 %v797, 16
      %v874 = vrot.slane %v872, 4
      %v875 = vshll.u32 %v797, 16
      %v877 = vrot.slane %v875, 5
      %v878 = vor.u32 %v874, %v877
      %v879 = vrot.slane %v878, 4
      %v881 = vshll.u32 %v821, 16
      %v883 = vrot.slane %v881, 5
      %v884 = vsel %vm828, %v879, %v883
      %v886 = vshrl.u32 %v798, 16
      %v888 = vrot.slane %v886, 4
      %v889 = vshll.u32 %v798, 16
      %v891 = vrot.slane %v889, 5
      %v892 = vor.u32 %v888, %v891
      %v893 = vrot.slane %v892, 4
      %v895 = vshll.u32 %v822, 16
      %v897 = vrot.slane %v895, 5
      %v898 = vsel %vm828, %v893, %v897
      %v900 = vshrl.u32 %v799, 16
      %v902 = vrot.slane %v900, 4
      %v903 = vshll.u32 %v799, 16
      %v905 = vrot.slane %v903, 5
      %v906 = vor.u32 %v902, %v905
      %v907 = vrot.slane %v906, 4
      %v909 = vshll.u32 %v823, 16
      %v911 = vrot.slane %v909, 5
      %v912 = vsel %vm828, %v907, %v911
      %v914 = vshrl.u32 %v800, 16
      %v916 = vrot.slane %v914, 4
      %v917 = vshll.u32 %v800, 16
      %v919 = vrot.slane %v917, 5
      %v920 = vor.u32 %v916, %v919
      %v921 = vrot.slane %v920, 4
      %v923 = vshll.u32 %v824, 16
      %v925 = vrot.slane %v923, 5
      %v926 = vsel %vm828, %v921, %v925
      %v928 = vshrl.u32 %v801, 16
      %v930 = vrot.slane %v928, 4
      %v931 = vshll.u32 %v801, 16
      %v933 = vrot.slane %v931, 5
      %v934 = vor.u32 %v930, %v933
      %v935 = vrot.slane %v934, 4
      %v937 = vshll.u32 %v825, 16
      %v939 = vrot.slane %v937, 5
      %v940 = vsel %vm828, %v935, %v939
      %s941 = scalar_lea.vmem %s4, 64
      %v942 = vld [vmem:[%s941] sm:$0xf]
      %v943 = vld [vmem:[%s941 + $0x4] sm:$0xf]
      %v944 = vld [vmem:[%s941 + $0x8] sm:$0xf]
      %v945 = vld [vmem:[%s941 + $0xc] sm:$0xf]
      %v946 = vld [vmem:[%s941 + $0x10] sm:$0xf]
      %v947 = vld [vmem:[%s941 + $0x14] sm:$0xf]
      %v948 = vld [vmem:[%s941 + $0x18] sm:$0xf]
      %v949 = vld [vmem:[%s941 + $0x1c] sm:$0xf]
      %v950 = vld [vmem:[%s941 + $0x20] sm:$0xf]
      %v951 = vld [vmem:[%s941 + $0x24] sm:$0xf]
      %v952 = vld [vmem:[%s941 + $0x28] sm:$0xf]
      %v953 = vld [vmem:[%s941 + $0x2c] sm:$0xf]
      %v954 = vld [vmem:[%s941 + $0x30] sm:$0xf]
      %v955 = vld [vmem:[%s941 + $0x34] sm:$0xf]
      %v956 = vld [vmem:[%s941 + $0x38] sm:$0xf]
      %v957 = vld [vmem:[%s941 + $0x3c] sm:$0xf]
      %v958 = vunpack.c.l.b16 %v842
      %v959 = vunpack.c.l.b16 %v856
      %v960 = vunpack.c.l.b16 %v870
      %v961 = vunpack.c.l.b16 %v884
      %v962 = vunpack.c.l.b16 %v898
      %v963 = vunpack.c.l.b16 %v912
      %v964 = vunpack.c.l.b16 %v926
      %v965 = vunpack.c.l.b16 %v940
      %v966 = vpack.c.b16 %v959, %v958
      %v967 = vpack.c.b16 %v961, %v960
      %v968 = vpack.c.b16 %v963, %v962
      %v969 = vpack.c.b16 %v965, %v964
      %v990 = vunpack.c.l.b16 %v942
      %v991 = vunpack.c.l.b16 %v943
      %v992 = vunpack.c.l.b16 %v944
      %v993 = vunpack.c.l.b16 %v945
      %v994 = vunpack.c.l.b16 %v946
      %v995 = vunpack.c.l.b16 %v947
      %v996 = vunpack.c.l.b16 %v948
      %v997 = vunpack.c.l.b16 %v949
      %v998 = vunpack.c.l.b16 %v950
      %v999 = vunpack.c.l.b16 %v951
      %v1000 = vunpack.c.l.b16 %v952
      %v1001 = vunpack.c.l.b16 %v953
      %v1002 = vunpack.c.l.b16 %v954
      %v1003 = vunpack.c.l.b16 %v955
      %v1004 = vunpack.c.l.b16 %v956
      %v1005 = vunpack.c.l.b16 %v957
      %v1006 = vpack.c.b16 %v991, %v990
      %v1007 = vpack.c.b16 %v993, %v992
      %v1008 = vpack.c.b16 %v995, %v994
      %v1009 = vpack.c.b16 %v997, %v996
      %v1010 = vpack.c.b16 %v999, %v998
      %v1011 = vpack.c.b16 %v1001, %v1000
      %v1012 = vpack.c.b16 %v1003, %v1002
      %v1013 = vpack.c.b16 %v1005, %v1004
      %1022 = vmatprep.subr.bf16.mxu0 0
      %1023 = vmatpush1.bf16.msra.mxu0 %v1006
      %1024 = vmatprep.subr.bf16.mxu0 0
      %1025 = vmatpush1.bf16.msra.mxu0 %v1007
      %1026 = vmatprep.subr.bf16.mxu0 0
      %1027 = vmatpush1.bf16.msra.mxu0 %v1008
      %1028 = vmatprep.subr.bf16.mxu0 0
      %1029 = vmatpush1.bf16.msra.mxu0 %v1009
      %1030 = vmatprep.subr.bf16.mxu0 0
      %1031 = vmatpush1.bf16.msra.mxu0 %v1010
      %1032 = vmatprep.subr.bf16.mxu0 0
      %1033 = vmatpush1.bf16.msra.mxu0 %v1011
      %1034 = vmatprep.subr.bf16.mxu0 0
      %1035 = vmatpush1.bf16.msra.mxu0 %v1012
      %1036 = vmatprep.subr.bf16.mxu0 0
      %1037 = vmatpush1.bf16.msra.mxu0 %v1013
      %1038 = vmatprep.subr.bf16.mxu0 0
      %1039 = vmatpush1.bf16.msra.mxu0 0
      %1040 = vmatprep.subr.bf16.mxu0 0
      %1041 = vmatpush1.bf16.msra.mxu0 0
      %1042 = vmatprep.subr.bf16.mxu0 0
      %1043 = vmatpush1.bf16.msra.mxu0 0
      %1044 = vmatprep.subr.bf16.mxu0 0
      %1045 = vmatpush1.bf16.msra.mxu0 0
      %1046 = vmatprep.subr.bf16.mxu0 0
      %1047 = vmatpush1.bf16.msra.mxu0 0
      %1048 = vmatprep.subr.bf16.mxu0 0
      %1049 = vmatpush1.bf16.msra.mxu0 0
      %1050 = vmatprep.subr.bf16.mxu0 0
      %1051 = vmatpush1.bf16.msra.mxu0 0
      %1052 = vmatprep.subr.bf16.mxu0 0
      %1053 = vmatpush1.bf16.msra.mxu0 0
      %1054 = vmatprep.mubr.bf16.mxu0 0
      %1055 = vmatmul.mubr.bf16.gmra.mrb[0].mxu0 %v966
      %v1056 = vpop.f32.mrb[0].mxu0
      %v1057 = vadd.f32 0.0, %v1056
      %v1058 = vpop.f32.mrb[0].mxu0
      %v1059 = vpop.f32.mrb[0].mxu0
      %v1060 = vadd.f32 0.0, %v1059
      %v1061 = vpop.f32.mrb[0].mxu0
      %1062 = vmatprep.mubr.bf16.mxu0 0
      %1063 = vmatmul.mubr.bf16.gmra.mrb[0].mxu0 %v967
      %v1064 = vpop.f32.mrb[0].mxu0
      %v1065 = vadd.f32 0.0, %v1064
      %v1066 = vpop.f32.mrb[0].mxu0
      %v1067 = vpop.f32.mrb[0].mxu0
      %v1068 = vadd.f32 0.0, %v1067
      %v1069 = vpop.f32.mrb[0].mxu0
      %1070 = vmatprep.mubr.bf16.mxu0 0
      %1071 = vmatmul.mubr.bf16.gmra.mrb[0].mxu0 %v968
      %v1072 = vpop.f32.mrb[0].mxu0
      %v1073 = vadd.f32 0.0, %v1072
      %v1074 = vpop.f32.mrb[0].mxu0
      %v1075 = vpop.f32.mrb[0].mxu0
      %v1076 = vadd.f32 0.0, %v1075
      %v1077 = vpop.f32.mrb[0].mxu0
      %1078 = vmatprep.mubr.bf16.mxu0 0
      %1079 = vmatmul.mubr.bf16.gmra.mrb[0].mxu0 %v969
      %v1080 = vpop.f32.mrb[0].mxu0
      %v1081 = vadd.f32 0.0, %v1080
      %v1082 = vpop.f32.mrb[0].mxu0
      %v1083 = vpop.f32.mrb[0].mxu0
      %v1084 = vadd.f32 0.0, %v1083
      %v1085 = vpop.f32.mrb[0].mxu0
      %1086 = vdwg.mxu0
      %v1095 = vunpack.c.l.b16 %v794
      %v1096 = vunpack.c.l.b16 %v795
      %v1097 = vunpack.c.l.b16 %v796
      %v1098 = vunpack.c.l.b16 %v797
      %v1099 = vunpack.c.l.b16 %v798
      %v1100 = vunpack.c.l.b16 %v799
      %v1101 = vunpack.c.l.b16 %v800
      %v1102 = vunpack.c.l.b16 %v801
      %v1103 = vpack.c.b16 %v1096, %v1095
      %v1104 = vpack.c.b16 %v1098, %v1097
      %v1105 = vpack.c.b16 %v1100, %v1099
      %v1106 = vpack.c.b16 %v1102, %v1101
      %v1127 = vunpack.c.l.b16 %v802
      %v1128 = vunpack.c.l.b16 %v803
      %v1129 = vunpack.c.l.b16 %v804
      %v1130 = vunpack.c.l.b16 %v805
      %v1131 = vunpack.c.l.b16 %v806
      %v1132 = vunpack.c.l.b16 %v807
      %v1133 = vunpack.c.l.b16 %v808
      %v1134 = vunpack.c.l.b16 %v809
      %v1135 = vunpack.c.l.b16 %v810
      %v1136 = vunpack.c.l.b16 %v811
      %v1137 = vunpack.c.l.b16 %v812
      %v1138 = vunpack.c.l.b16 %v813
      %v1139 = vunpack.c.l.b16 %v814
      %v1140 = vunpack.c.l.b16 %v815
      %v1141 = vunpack.c.l.b16 %v816
      %v1142 = vunpack.c.l.b16 %v817
      %v1143 = vpack.c.b16 %v1128, %v1127
      %v1144 = vpack.c.b16 %v1130, %v1129
      %v1145 = vpack.c.b16 %v1132, %v1131
      %v1146 = vpack.c.b16 %v1134, %v1133
      %v1147 = vpack.c.b16 %v1136, %v1135
      %v1148 = vpack.c.b16 %v1138, %v1137
      %v1149 = vpack.c.b16 %v1140, %v1139
      %v1150 = vpack.c.b16 %v1142, %v1141
      %1159 = vmatprep.subr.bf16.mxu0 0
      %1160 = vmatpush1.bf16.msra.mxu0 %v1143
      %1161 = vmatprep.subr.bf16.mxu0 0
      %1162 = vmatpush1.bf16.msra.mxu0 %v1144
      %1163 = vmatprep.subr.bf16.mxu0 0
      %1164 = vmatpush1.bf16.msra.mxu0 %v1145
      %1165 = vmatprep.subr.bf16.mxu0 0
      %1166 = vmatpush1.bf16.msra.mxu0 %v1146
      %1167 = vmatprep.subr.bf16.mxu0 0
      %1168 = vmatpush1.bf16.msra.mxu0 %v1147
      %1169 = vmatprep.subr.bf16.mxu0 0
      %1170 = vmatpush1.bf16.msra.mxu0 %v1148
      %1171 = vmatprep.subr.bf16.mxu0 0
      %1172 = vmatpush1.bf16.msra.mxu0 %v1149
      %1173 = vmatprep.subr.bf16.mxu0 0
      %1174 = vmatpush1.bf16.msra.mxu0 %v1150
      %1175 = vmatprep.subr.bf16.mxu0 0
      %1176 = vmatpush1.bf16.msra.mxu0 0
      %1177 = vmatprep.subr.bf16.mxu0 0
      %1178 = vmatpush1.bf16.msra.mxu0 0
      %1179 = vmatprep.subr.bf16.mxu0 0
      %1180 = vmatpush1.bf16.msra.mxu0 0
      %1181 = vmatprep.subr.bf16.mxu0 0
      %1182 = vmatpush1.bf16.msra.mxu0 0
      %1183 = vmatprep.subr.bf16.mxu0 0
      %1184 = vmatpush1.bf16.msra.mxu0 0
      %1185 = vmatprep.subr.bf16.mxu0 0
      %1186 = vmatpush1.bf16.msra.mxu0 0
      %1187 = vmatprep.subr.bf16.mxu0 0
      %1188 = vmatpush1.bf16.msra.mxu0 0
      %1189 = vmatprep.subr.bf16.mxu0 0
      %1190 = vmatpush1.bf16.msra.mxu0 0
      %1191 = vmatprep.mubr.bf16.mxu0 0
      %1192 = vmatmul.mubr.bf16.gmra.mrb[0].mxu0 %v1103
      %v1193 = vpop.f32.mrb[0].mxu0
      %v1194 = vadd.f32 %v1057, %v1193
      %v1195 = vpop.f32.mrb[0].mxu0
      %v1196 = vpop.f32.mrb[0].mxu0
      %v1197 = vadd.f32 %v1060, %v1196
      %v1198 = vpop.f32.mrb[0].mxu0
      %1199 = vmatprep.mubr.bf16.mxu0 0
      %1200 = vmatmul.mubr.bf16.gmra.mrb[0].mxu0 %v1104
      %v1201 = vpop.f32.mrb[0].mxu0
      %v1202 = vadd.f32 %v1065, %v1201
      %v1203 = vpop.f32.mrb[0].mxu0
      %v1204 = vpop.f32.mrb[0].mxu0
      %v1205 = vadd.f32 %v1068, %v1204
      %v1206 = vpop.f32.mrb[0].mxu0
      %1207 = vmatprep.mubr.bf16.mxu0 0
      %1208 = vmatmul.mubr.bf16.gmra.mrb[0].mxu0 %v1105
      %v1209 = vpop.f32.mrb[0].mxu0
      %v1210 = vadd.f32 %v1073, %v1209
      %v1211 = vpop.f32.mrb[0].mxu0
      %v1212 = vpop.f32.mrb[0].mxu0
      %v1213 = vadd.f32 %v1076, %v1212
      %v1214 = vpop.f32.mrb[0].mxu0
      %1215 = vmatprep.mubr.bf16.mxu0 0
      %1216 = vmatmul.mubr.bf16.gmra.mrb[0].mxu0 %v1106
      %v1217 = vpop.f32.mrb[0].mxu0
      %v1218 = vadd.f32 %v1081, %v1217
      %v1219 = vpop.f32.mrb[0].mxu0
      %v1220 = vpop.f32.mrb[0].mxu0
      %v1221 = vadd.f32 %v1084, %v1220
      %v1222 = vpop.f32.mrb[0].mxu0
      %1223 = vdwg.mxu0
      %v1224 = vld [vmem:[#allocation2] sm:$0xe]
      %v1225 = vld [vmem:[#allocation2 + $0x8] sm:$0xe]
      %v1226 = vld [vmem:[#allocation2 + $0x10] sm:$0xe]
      %v1227 = vld [vmem:[#allocation2 + $0x18] sm:$0xe]
      %v1228 = vld [vmem:[#allocation2 + $0x20] sm:$0xe]
      %v1229 = vld [vmem:[#allocation2 + $0x28] sm:$0xe]
      %v1230 = vld [vmem:[#allocation2 + $0x30] sm:$0xe]
      %v1231 = vld [vmem:[#allocation2 + $0x38] sm:$0xe]
      %vm1248 = vcmask 1042432
      %vm1249 = vcmask 1046532
      %vm1250 = vmor %vm1248, %vm1249
      %v1251 = vrot.slane %v1224, 5
      %v1252 = vrot.slane %v1251, 4
      %v1253 = vrot.slane %v818, 5
      %v1254 = vsel %vm1250, %v1252, %v1253
      %v1255 = vrot.slane %v1225, 5
      %v1256 = vrot.slane %v1255, 4
      %v1257 = vrot.slane %v819, 5
      %v1258 = vsel %vm1250, %v1256, %v1257
      %v1259 = vrot.slane %v1226, 5
      %v1260 = vrot.slane %v1259, 4
      %v1261 = vrot.slane %v820, 5
      %v1262 = vsel %vm1250, %v1260, %v1261
      %v1263 = vrot.slane %v1227, 5
      %v1264 = vrot.slane %v1263, 4
      %v1265 = vrot.slane %v821, 5
      %v1266 = vsel %vm1250, %v1264, %v1265
      %v1267 = vrot.slane %v1228, 5
      %v1268 = vrot.slane %v1267, 4
      %v1269 = vrot.slane %v822, 5
      %v1270 = vsel %vm1250, %v1268, %v1269
      %v1271 = vrot.slane %v1229, 5
      %v1272 = vrot.slane %v1271, 4
      %v1273 = vrot.slane %v823, 5
      %v1274 = vsel %vm1250, %v1272, %v1273
      %v1275 = vrot.slane %v1230, 5
      %v1276 = vrot.slane %v1275, 4
      %v1277 = vrot.slane %v824, 5
      %v1278 = vsel %vm1250, %v1276, %v1277
      %v1279 = vrot.slane %v1231, 5
      %v1280 = vrot.slane %v1279, 4
      %v1281 = vrot.slane %v825, 5
      %v1282 = vsel %vm1250, %v1280, %v1281
      %s1283 = scalar_lea.vmem %s4, 128
      %v1284 = vld [vmem:[%s1283] sm:$0xf]
      %v1285 = vld [vmem:[%s1283 + $0x4] sm:$0xf]
      %v1286 = vld [vmem:[%s1283 + $0x8] sm:$0xf]
      %v1287 = vld [vmem:[%s1283 + $0xc] sm:$0xf]
      %v1288 = vld [vmem:[%s1283 + $0x10] sm:$0xf]
      %v1289 = vld [vmem:[%s1283 + $0x14] sm:$0xf]
      %v1290 = vld [vmem:[%s1283 + $0x18] sm:$0xf]
      %v1291 = vld [vmem:[%s1283 + $0x1c] sm:$0xf]
      %v1292 = vld [vmem:[%s1283 + $0x20] sm:$0xf]
      %v1293 = vld [vmem:[%s1283 + $0x24] sm:$0xf]
      %v1294 = vld [vmem:[%s1283 + $0x28] sm:$0xf]
      %v1295 = vld [vmem:[%s1283 + $0x2c] sm:$0xf]
      %v1296 = vld [vmem:[%s1283 + $0x30] sm:$0xf]
      %v1297 = vld [vmem:[%s1283 + $0x34] sm:$0xf]
      %v1298 = vld [vmem:[%s1283 + $0x38] sm:$0xf]
      %v1299 = vld [vmem:[%s1283 + $0x3c] sm:$0xf]
      %v1300 = vunpack.c.l.b16 %v1254
      %v1301 = vunpack.c.l.b16 %v1258
      %v1302 = vunpack.c.l.b16 %v1262
      %v1303 = vunpack.c.l.b16 %v1266
      %v1304 = vunpack.c.l.b16 %v1270
      %v1305 = vunpack.c.l.b16 %v1274
      %v1306 = vunpack.c.l.b16 %v1278
      %v1307 = vunpack.c.l.b16 %v1282
      %v1308 = vpack.c.b16 %v1301, %v1300
      %v1309 = vpack.c.b16 %v1303, %v1302
      %v1310 = vpack.c.b16 %v1305, %v1304
      %v1311 = vpack.c.b16 %v1307, %v1306
      %v1332 = vunpack.c.l.b16 %v1284
      %v1333 = vunpack.c.l.b16 %v1285
      %v1334 = vunpack.c.l.b16 %v1286
      %v1335 = vunpack.c.l.b16 %v1287
      %v1336 = vunpack.c.l.b16 %v1288
      %v1337 = vunpack.c.l.b16 %v1289
      %v1338 = vunpack.c.l.b16 %v1290
      %v1339 = vunpack.c.l.b16 %v1291
      %v1340 = vunpack.c.l.b16 %v1292
      %v1341 = vunpack.c.l.b16 %v1293
      %v1342 = vunpack.c.l.b16 %v1294
      %v1343 = vunpack.c.l.b16 %v1295
      %v1344 = vunpack.c.l.b16 %v1296
      %v1345 = vunpack.c.l.b16 %v1297
      %v1346 = vunpack.c.l.b16 %v1298
      %v1347 = vunpack.c.l.b16 %v1299
      %v1348 = vpack.c.b16 %v1333, %v1332
      %v1349 = vpack.c.b16 %v1335, %v1334
      %v1350 = vpack.c.b16 %v1337, %v1336
      %v1351 = vpack.c.b16 %v1339, %v1338
      %v1352 = vpack.c.b16 %v1341, %v1340
      %v1353 = vpack.c.b16 %v1343, %v1342
      %v1354 = vpack.c.b16 %v1345, %v1344
      %v1355 = vpack.c.b16 %v1347, %v1346
      %1364 = vmatprep.subr.bf16.mxu0 0
      %1365 = vmatpush1.bf16.msra.mxu0 %v1348
      %1366 = vmatprep.subr.bf16.mxu0 0
      %1367 = vmatpush1.bf16.msra.mxu0 %v1349
      %1368 = vmatprep.subr.bf16.mxu0 0
      %1369 = vmatpush1.bf16.msra.mxu0 %v1350
      %1370 = vmatprep.subr.bf16.mxu0 0
      %1371 = vmatpush1.bf16.msra.mxu0 %v1351
      %1372 = vmatprep.subr.bf16.mxu0 0
      %1373 = vmatpush1.bf16.msra.mxu0 %v1352
      %1374 = vmatprep.subr.bf16.mxu0 0
      %1375 = vmatpush1.bf16.msra.mxu0 %v1353
      %1376 = vmatprep.subr.bf16.mxu0 0
      %1377 = vmatpush1.bf16.msra.mxu0 %v1354
      %1378 = vmatprep.subr.bf16.mxu0 0
      %1379 = vmatpush1.bf16.msra.mxu0 %v1355
      %1380 = vmatprep.subr.bf16.mxu0 0
      %1381 = vmatpush1.bf16.msra.mxu0 0
      %1382 = vmatprep.subr.bf16.mxu0 0
      %1383 = vmatpush1.bf16.msra.mxu0 0
      %1384 = vmatprep.subr.bf16.mxu0 0
      %1385 = vmatpush1.bf16.msra.mxu0 0
      %1386 = vmatprep.subr.bf16.mxu0 0
      %1387 = vmatpush1.bf16.msra.mxu0 0
      %1388 = vmatprep.subr.bf16.mxu0 0
      %1389 = vmatpush1.bf16.msra.mxu0 0
      %1390 = vmatprep.subr.bf16.mxu0 0
      %1391 = vmatpush1.bf16.msra.mxu0 0
      %1392 = vmatprep.subr.bf16.mxu0 0
      %1393 = vmatpush1.bf16.msra.mxu0 0
      %1394 = vmatprep.subr.bf16.mxu0 0
      %1395 = vmatpush1.bf16.msra.mxu0 0
      %1396 = vmatprep.mubr.bf16.mxu0 0
      %1397 = vmatmul.mubr.bf16.gmra.mrb[0].mxu0 %v1308
      %v1398 = vpop.f32.mrb[0].mxu0
      %v1399 = vadd.f32 0.0, %v1398
      %v1400 = vpop.f32.mrb[0].mxu0
      %v1401 = vpop.f32.mrb[0].mxu0
      %v1402 = vadd.f32 0.0, %v1401
      %v1403 = vpop.f32.mrb[0].mxu0
      %1404 = vmatprep.mubr.bf16.mxu0 0
      %1405 = vmatmul.mubr.bf16.gmra.mrb[0].mxu0 %v1309
      %v1406 = vpop.f32.mrb[0].mxu0
      %v1407 = vadd.f32 0.0, %v1406
      %v1408 = vpop.f32.mrb[0].mxu0
      %v1409 = vpop.f32.mrb[0].mxu0
      %v1410 = vadd.f32 0.0, %v1409
      %v1411 = vpop.f32.mrb[0].mxu0
      %1412 = vmatprep.mubr.bf16.mxu0 0
      %1413 = vmatmul.mubr.bf16.gmra.mrb[0].mxu0 %v1310
      %v1414 = vpop.f32.mrb[0].mxu0
      %v1415 = vadd.f32 0.0, %v1414
      %v1416 = vpop.f32.mrb[0].mxu0
      %v1417 = vpop.f32.mrb[0].mxu0
      %v1418 = vadd.f32 0.0, %v1417
      %v1419 = vpop.f32.mrb[0].mxu0
      %1420 = vmatprep.mubr.bf16.mxu0 0
      %1421 = vmatmul.mubr.bf16.gmra.mrb[0].mxu0 %v1311
      %v1422 = vpop.f32.mrb[0].mxu0
      %v1423 = vadd.f32 0.0, %v1422
      %v1424 = vpop.f32.mrb[0].mxu0
      %v1425 = vpop.f32.mrb[0].mxu0
      %v1426 = vadd.f32 0.0, %v1425
      %v1427 = vpop.f32.mrb[0].mxu0
      %1428 = vdwg.mxu0
      %v1429 = vadd.f32 %v1194, %v1399
      %v1430 = vadd.f32 %v1197, %v1402
      %v1431 = vadd.f32 %v1202, %v1407
      %v1432 = vadd.f32 %v1205, %v1410
      %v1433 = vadd.f32 %v1210, %v1415
      %v1434 = vadd.f32 %v1213, %v1418
      %v1435 = vadd.f32 %v1218, %v1423
      %v1436 = vadd.f32 %v1221, %v1426
      %v1437 = vld [vmem:[%s739] sm:$0xf]
      %v1438 = vld [vmem:[%s739 + $0x8] sm:$0xf]
      %v1439 = vld [vmem:[%s739 + $0x10] sm:$0xf]
      %v1440 = vld [vmem:[%s739 + $0x18] sm:$0xf]
      %v1441 = vld [vmem:[%s739 + $0x20] sm:$0xf]
      %v1442 = vld [vmem:[%s739 + $0x28] sm:$0xf]
      %v1443 = vld [vmem:[%s739 + $0x30] sm:$0xf]
      %v1444 = vld [vmem:[%s739 + $0x38] sm:$0xf]
      %s1445 = scalar_lea.vmem %s4, 192
      %v1446 = vld [vmem:[%s1445] sm:$0xf]
      %v1447 = vld [vmem:[%s1445 + $0x4] sm:$0xf]
      %v1448 = vld [vmem:[%s1445 + $0x8] sm:$0xf]
      %v1449 = vld [vmem:[%s1445 + $0xc] sm:$0xf]
      %v1450 = vld [vmem:[%s1445 + $0x10] sm:$0xf]
      %v1451 = vld [vmem:[%s1445 + $0x14] sm:$0xf]
      %v1452 = vld [vmem:[%s1445 + $0x18] sm:$0xf]
      %v1453 = vld [vmem:[%s1445 + $0x1c] sm:$0xf]
      %v1454 = vld [vmem:[%s1445 + $0x20] sm:$0xf]
      %v1455 = vld [vmem:[%s1445 + $0x24] sm:$0xf]
      %v1456 = vld [vmem:[%s1445 + $0x28] sm:$0xf]
      %v1457 = vld [vmem:[%s1445 + $0x2c] sm:$0xf]
      %v1458 = vld [vmem:[%s1445 + $0x30] sm:$0xf]
      %v1459 = vld [vmem:[%s1445 + $0x34] sm:$0xf]
      %v1460 = vld [vmem:[%s1445 + $0x38] sm:$0xf]
      %v1461 = vld [vmem:[%s1445 + $0x3c] sm:$0xf]
      %v1470 = vunpack.c.l.b16 %v1437
      %v1471 = vunpack.c.l.b16 %v1438
      %v1472 = vunpack.c.l.b16 %v1439
      %v1473 = vunpack.c.l.b16 %v1440
      %v1474 = vunpack.c.l.b16 %v1441
      %v1475 = vunpack.c.l.b16 %v1442
      %v1476 = vunpack.c.l.b16 %v1443
      %v1477 = vunpack.c.l.b16 %v1444
      %v1478 = vpack.c.b16 %v1471, %v1470
      %v1479 = vpack.c.b16 %v1473, %v1472
      %v1480 = vpack.c.b16 %v1475, %v1474
      %v1481 = vpack.c.b16 %v1477, %v1476
      %v1502 = vunpack.c.l.b16 %v1446
      %v1503 = vunpack.c.l.b16 %v1447
      %v1504 = vunpack.c.l.b16 %v1448
      %v1505 = vunpack.c.l.b16 %v1449
      %v1506 = vunpack.c.l.b16 %v1450
      %v1507 = vunpack.c.l.b16 %v1451
      %v1508 = vunpack.c.l.b16 %v1452
      %v1509 = vunpack.c.l.b16 %v1453
      %v1510 = vunpack.c.l.b16 %v1454
      %v1511 = vunpack.c.l.b16 %v1455
      %v1512 = vunpack.c.l.b16 %v1456
      %v1513 = vunpack.c.l.b16 %v1457
      %v1514 = vunpack.c.l.b16 %v1458
      %v1515 = vunpack.c.l.b16 %v1459
      %v1516 = vunpack.c.l.b16 %v1460
      %v1517 = vunpack.c.l.b16 %v1461
      %v1518 = vpack.c.b16 %v1503, %v1502
      %v1519 = vpack.c.b16 %v1505, %v1504
      %v1520 = vpack.c.b16 %v1507, %v1506
      %v1521 = vpack.c.b16 %v1509, %v1508
      %v1522 = vpack.c.b16 %v1511, %v1510
      %v1523 = vpack.c.b16 %v1513, %v1512
      %v1524 = vpack.c.b16 %v1515, %v1514
      %v1525 = vpack.c.b16 %v1517, %v1516
      %1534 = vmatprep.subr.bf16.mxu0 0
      %1535 = vmatpush1.bf16.msra.mxu0 %v1518
      %1536 = vmatprep.subr.bf16.mxu0 0
      %1537 = vmatpush1.bf16.msra.mxu0 %v1519
      %1538 = vmatprep.subr.bf16.mxu0 0
      %1539 = vmatpush1.bf16.msra.mxu0 %v1520
      %1540 = vmatprep.subr.bf16.mxu0 0
      %1541 = vmatpush1.bf16.msra.mxu0 %v1521
      %1542 = vmatprep.subr.bf16.mxu0 0
      %1543 = vmatpush1.bf16.msra.mxu0 %v1522
      %1544 = vmatprep.subr.bf16.mxu0 0
      %1545 = vmatpush1.bf16.msra.mxu0 %v1523
      %1546 = vmatprep.subr.bf16.mxu0 0
      %1547 = vmatpush1.bf16.msra.mxu0 %v1524
      %1548 = vmatprep.subr.bf16.mxu0 0
      %1549 = vmatpush1.bf16.msra.mxu0 %v1525
      %1550 = vmatprep.subr.bf16.mxu0 0
      %1551 = vmatpush1.bf16.msra.mxu0 0
      %1552 = vmatprep.subr.bf16.mxu0 0
      %1553 = vmatpush1.bf16.msra.mxu0 0
      %1554 = vmatprep.subr.bf16.mxu0 0
      %1555 = vmatpush1.bf16.msra.mxu0 0
      %1556 = vmatprep.subr.bf16.mxu0 0
      %1557 = vmatpush1.bf16.msra.mxu0 0
      %1558 = vmatprep.subr.bf16.mxu0 0
      %1559 = vmatpush1.bf16.msra.mxu0 0
      %1560 = vmatprep.subr.bf16.mxu0 0
      %1561 = vmatpush1.bf16.msra.mxu0 0
      %1562 = vmatprep.subr.bf16.mxu0 0
      %1563 = vmatpush1.bf16.msra.mxu0 0
      %1564 = vmatprep.subr.bf16.mxu0 0
      %1565 = vmatpush1.bf16.msra.mxu0 0
      %1566 = vmatprep.mubr.bf16.mxu0 0
      %1567 = vmatmul.mubr.bf16.gmra.mrb[0].mxu0 %v1478
      %v1568 = vpop.f32.mrb[0].mxu0
      %v1569 = vadd.f32 0.0, %v1568
      %v1570 = vpop.f32.mrb[0].mxu0
      %v1571 = vpop.f32.mrb[0].mxu0
      %v1572 = vadd.f32 0.0, %v1571
      %v1573 = vpop.f32.mrb[0].mxu0
      %1574 = vmatprep.mubr.bf16.mxu0 0
      %1575 = vmatmul.mubr.bf16.gmra.mrb[0].mxu0 %v1479
      %v1576 = vpop.f32.mrb[0].mxu0
      %v1577 = vadd.f32 0.0, %v1576
      %v1578 = vpop.f32.mrb[0].mxu0
      %v1579 = vpop.f32.mrb[0].mxu0
      %v1580 = vadd.f32 0.0, %v1579
      %v1581 = vpop.f32.mrb[0].mxu0
      %1582 = vmatprep.mubr.bf16.mxu0 0
      %1583 = vmatmul.mubr.bf16.gmra.mrb[0].mxu0 %v1480
      %v1584 = vpop.f32.mrb[0].mxu0
      %v1585 = vadd.f32 0.0, %v1584
      %v1586 = vpop.f32.mrb[0].mxu0
      %v1587 = vpop.f32.mrb[0].mxu0
      %v1588 = vadd.f32 0.0, %v1587
      %v1589 = vpop.f32.mrb[0].mxu0
      %1590 = vmatprep.mubr.bf16.mxu0 0
      %1591 = vmatmul.mubr.bf16.gmra.mrb[0].mxu0 %v1481
      %v1592 = vpop.f32.mrb[0].mxu0
      %v1593 = vadd.f32 0.0, %v1592
      %v1594 = vpop.f32.mrb[0].mxu0
      %v1595 = vpop.f32.mrb[0].mxu0
      %v1596 = vadd.f32 0.0, %v1595
      %v1597 = vpop.f32.mrb[0].mxu0
      %1598 = vdwg.mxu0
      %v1599 = vadd.f32 %v1429, %v1569
      %v1600 = vadd.f32 %v1430, %v1572
      %v1601 = vadd.f32 %v1431, %v1577
      %v1602 = vadd.f32 %v1432, %v1580
      %v1603 = vadd.f32 %v1433, %v1585
      %v1604 = vadd.f32 %v1434, %v1588
      %v1605 = vadd.f32 %v1435, %v1593
      %v1606 = vadd.f32 %v1436, %v1596
      %v1607 = vld [vmem:[%s739] sm:$0xf]
      %v1608 = vld [vmem:[%s739 + $0x4] sm:$0x1]
      %v1609 = vld [vmem:[%s739 + $0x8] sm:$0xf]
      %v1610 = vld [vmem:[%s739 + $0xc] sm:$0x1]
      %v1611 = vld [vmem:[%s739 + $0x10] sm:$0xf]
      %v1612 = vld [vmem:[%s739 + $0x14] sm:$0x1]
      %v1613 = vld [vmem:[%s739 + $0x18] sm:$0xf]
      %v1614 = vld [vmem:[%s739 + $0x1c] sm:$0x1]
      %v1615 = vld [vmem:[%s739 + $0x20] sm:$0xf]
      %v1616 = vld [vmem:[%s739 + $0x24] sm:$0x1]
      %v1617 = vld [vmem:[%s739 + $0x28] sm:$0xf]
      %v1618 = vld [vmem:[%s739 + $0x2c] sm:$0x1]
      %v1619 = vld [vmem:[%s739 + $0x30] sm:$0xf]
      %v1620 = vld [vmem:[%s739 + $0x34] sm:$0x1]
      %v1621 = vld [vmem:[%s739 + $0x38] sm:$0xf]
      %v1622 = vld [vmem:[%s739 + $0x3c] sm:$0x1]
      %v1624 = vshrl.u32 %v1607, 16
      %v1626 = vrot.slane %v1624, 4
      %v1627 = vshll.u32 %v1607, 16
      %v1629 = vrot.slane %v1627, 5
      %v1630 = vor.u32 %v1626, %v1629
      %v1631 = vrot.slane %v1630, 4
      %v1633 = vshll.u32 %v1608, 16
      %v1635 = vrot.slane %v1633, 5
      %v1636 = vsel %vm828, %v1631, %v1635
      %v1638 = vshrl.u32 %v1609, 16
      %v1640 = vrot.slane %v1638, 4
      %v1641 = vshll.u32 %v1609, 16
      %v1643 = vrot.slane %v1641, 5
      %v1644 = vor.u32 %v1640, %v1643
      %v1645 = vrot.slane %v1644, 4
      %v1647 = vshll.u32 %v1610, 16
      %v1649 = vrot.slane %v1647, 5
      %v1650 = vsel %vm828, %v1645, %v1649
      %v1652 = vshrl.u32 %v1611, 16
      %v1654 = vrot.slane %v1652, 4
      %v1655 = vshll.u32 %v1611, 16
      %v1657 = vrot.slane %v1655, 5
      %v1658 = vor.u32 %v1654, %v1657
      %v1659 = vrot.slane %v1658, 4
      %v1661 = vshll.u32 %v1612, 16
      %v1663 = vrot.slane %v1661, 5
      %v1664 = vsel %vm828, %v1659, %v1663
      %v1666 = vshrl.u32 %v1613, 16
      %v1668 = vrot.slane %v1666, 4
      %v1669 = vshll.u32 %v1613, 16
      %v1671 = vrot.slane %v1669, 5
      %v1672 = vor.u32 %v1668, %v1671
      %v1673 = vrot.slane %v1672, 4
      %v1675 = vshll.u32 %v1614, 16
      %v1677 = vrot.slane %v1675, 5
      %v1678 = vsel %vm828, %v1673, %v1677
      %v1680 = vshrl.u32 %v1615, 16
      %v1682 = vrot.slane %v1680, 4
      %v1683 = vshll.u32 %v1615, 16
      %v1685 = vrot.slane %v1683, 5
      %v1686 = vor.u32 %v1682, %v1685
      %v1687 = vrot.slane %v1686, 4
      %v1689 = vshll.u32 %v1616, 16
      %v1691 = vrot.slane %v1689, 5
      %v1692 = vsel %vm828, %v1687, %v1691
      %v1694 = vshrl.u32 %v1617, 16
      %v1696 = vrot.slane %v1694, 4
      %v1697 = vshll.u32 %v1617, 16
      %v1699 = vrot.slane %v1697, 5
      %v1700 = vor.u32 %v1696, %v1699
      %v1701 = vrot.slane %v1700, 4
      %v1703 = vshll.u32 %v1618, 16
      %v1705 = vrot.slane %v1703, 5
      %v1706 = vsel %vm828, %v1701, %v1705
      %v1708 = vshrl.u32 %v1619, 16
      %v1710 = vrot.slane %v1708, 4
      %v1711 = vshll.u32 %v1619, 16
      %v1713 = vrot.slane %v1711, 5
      %v1714 = vor.u32 %v1710, %v1713
      %v1715 = vrot.slane %v1714, 4
      %v1717 = vshll.u32 %v1620, 16
      %v1719 = vrot.slane %v1717, 5
      %v1720 = vsel %vm828, %v1715, %v1719
      %v1722 = vshrl.u32 %v1621, 16
      %v1724 = vrot.slane %v1722, 4
      %v1725 = vshll.u32 %v1621, 16
      %v1727 = vrot.slane %v1725, 5
      %v1728 = vor.u32 %v1724, %v1727
      %v1729 = vrot.slane %v1728, 4
      %v1731 = vshll.u32 %v1622, 16
      %v1733 = vrot.slane %v1731, 5
      %v1734 = vsel %vm828, %v1729, %v1733
      %s1735 = scalar_lea.vmem %s4, 256
      %v1736 = vld [vmem:[%s1735] sm:$0xf]
      %v1737 = vld [vmem:[%s1735 + $0x4] sm:$0xf]
      %v1738 = vld [vmem:[%s1735 + $0x8] sm:$0xf]
      %v1739 = vld [vmem:[%s1735 + $0xc] sm:$0xf]
      %v1740 = vld [vmem:[%s1735 + $0x10] sm:$0xf]
      %v1741 = vld [vmem:[%s1735 + $0x14] sm:$0xf]
      %v1742 = vld [vmem:[%s1735 + $0x18] sm:$0xf]
      %v1743 = vld [vmem:[%s1735 + $0x1c] sm:$0xf]
      %v1744 = vld [vmem:[%s1735 + $0x20] sm:$0xf]
      %v1745 = vld [vmem:[%s1735 + $0x24] sm:$0xf]
      %v1746 = vld [vmem:[%s1735 + $0x28] sm:$0xf]
      %v1747 = vld [vmem:[%s1735 + $0x2c] sm:$0xf]
      %v1748 = vld [vmem:[%s1735 + $0x30] sm:$0xf]
      %v1749 = vld [vmem:[%s1735 + $0x34] sm:$0xf]
      %v1750 = vld [vmem:[%s1735 + $0x38] sm:$0xf]
      %v1751 = vld [vmem:[%s1735 + $0x3c] sm:$0xf]
      %v1752 = vunpack.c.l.b16 %v1636
      %v1753 = vunpack.c.l.b16 %v1650
      %v1754 = vunpack.c.l.b16 %v1664
      %v1755 = vunpack.c.l.b16 %v1678
      %v1756 = vunpack.c.l.b16 %v1692
      %v1757 = vunpack.c.l.b16 %v1706
      %v1758 = vunpack.c.l.b16 %v1720
      %v1759 = vunpack.c.l.b16 %v1734
      %v1760 = vpack.c.b16 %v1753, %v1752
      %v1761 = vpack.c.b16 %v1755, %v1754
      %v1762 = vpack.c.b16 %v1757, %v1756
      %v1763 = vpack.c.b16 %v1759, %v1758
      %v1784 = vunpack.c.l.b16 %v1736
      %v1785 = vunpack.c.l.b16 %v1737
      %v1786 = vunpack.c.l.b16 %v1738
      %v1787 = vunpack.c.l.b16 %v1739
      %v1788 = vunpack.c.l.b16 %v1740
      %v1789 = vunpack.c.l.b16 %v1741
      %v1790 = vunpack.c.l.b16 %v1742
      %v1791 = vunpack.c.l.b16 %v1743
      %v1792 = vunpack.c.l.b16 %v1744
      %v1793 = vunpack.c.l.b16 %v1745
      %v1794 = vunpack.c.l.b16 %v1746
      %v1795 = vunpack.c.l.b16 %v1747
      %v1796 = vunpack.c.l.b16 %v1748
      %v1797 = vunpack.c.l.b16 %v1749
      %v1798 = vunpack.c.l.b16 %v1750
      %v1799 = vunpack.c.l.b16 %v1751
      %v1800 = vpack.c.b16 %v1785, %v1784
      %v1801 = vpack.c.b16 %v1787, %v1786
      %v1802 = vpack.c.b16 %v1789, %v1788
      %v1803 = vpack.c.b16 %v1791, %v1790
      %v1804 = vpack.c.b16 %v1793, %v1792
      %v1805 = vpack.c.b16 %v1795, %v1794
      %v1806 = vpack.c.b16 %v1797, %v1796
      %v1807 = vpack.c.b16 %v1799, %v1798
      %1816 = vmatprep.subr.bf16.mxu0 0
      %1817 = vmatpush1.bf16.msra.mxu0 %v1800
      %1818 = vmatprep.subr.bf16.mxu0 0
      %1819 = vmatpush1.bf16.msra.mxu0 %v1801
      %1820 = vmatprep.subr.bf16.mxu0 0
      %1821 = vmatpush1.bf16.msra.mxu0 %v1802
      %1822 = vmatprep.subr.bf16.mxu0 0
      %1823 = vmatpush1.bf16.msra.mxu0 %v1803
      %1824 = vmatprep.subr.bf16.mxu0 0
      %1825 = vmatpush1.bf16.msra.mxu0 %v1804
      %1826 = vmatprep.subr.bf16.mxu0 0
      %1827 = vmatpush1.bf16.msra.mxu0 %v1805
      %1828 = vmatprep.subr.bf16.mxu0 0
      %1829 = vmatpush1.bf16.msra.mxu0 %v1806
      %1830 = vmatprep.subr.bf16.mxu0 0
      %1831 = vmatpush1.bf16.msra.mxu0 %v1807
      %1832 = vmatprep.subr.bf16.mxu0 0
      %1833 = vmatpush1.bf16.msra.mxu0 0
      %1834 = vmatprep.subr.bf16.mxu0 0
      %1835 = vmatpush1.bf16.msra.mxu0 0
      %1836 = vmatprep.subr.bf16.mxu0 0
      %1837 = vmatpush1.bf16.msra.mxu0 0
      %1838 = vmatprep.subr.bf16.mxu0 0
      %1839 = vmatpush1.bf16.msra.mxu0 0
      %1840 = vmatprep.subr.bf16.mxu0 0
      %1841 = vmatpush1.bf16.msra.mxu0 0
      %1842 = vmatprep.subr.bf16.mxu0 0
      %1843 = vmatpush1.bf16.msra.mxu0 0
      %1844 = vmatprep.subr.bf16.mxu0 0
      %1845 = vmatpush1.bf16.msra.mxu0 0
      %1846 = vmatprep.subr.bf16.mxu0 0
      %1847 = vmatpush1.bf16.msra.mxu0 0
      %1848 = vmatprep.mubr.bf16.mxu0 0
      %1849 = vmatmul.mubr.bf16.gmra.mrb[0].mxu0 %v1760
      %v1850 = vpop.f32.mrb[0].mxu0
      %v1851 = vadd.f32 0.0, %v1850
      %v1852 = vpop.f32.mrb[0].mxu0
      %v1853 = vpop.f32.mrb[0].mxu0
      %v1854 = vadd.f32 0.0, %v1853
      %v1855 = vpop.f32.mrb[0].mxu0
      %1856 = vmatprep.mubr.bf16.mxu0 0
      %1857 = vmatmul.mubr.bf16.gmra.mrb[0].mxu0 %v1761
      %v1858 = vpop.f32.mrb[0].mxu0
      %v1859 = vadd.f32 0.0, %v1858
      %v1860 = vpop.f32.mrb[0].mxu0
      %v1861 = vpop.f32.mrb[0].mxu0
      %v1862 = vadd.f32 0.0, %v1861
      %v1863 = vpop.f32.mrb[0].mxu0
      %1864 = vmatprep.mubr.bf16.mxu0 0
      %1865 = vmatmul.mubr.bf16.gmra.mrb[0].mxu0 %v1762
      %v1866 = vpop.f32.mrb[0].mxu0
      %v1867 = vadd.f32 0.0, %v1866
      %v1868 = vpop.f32.mrb[0].mxu0
      %v1869 = vpop.f32.mrb[0].mxu0
      %v1870 = vadd.f32 0.0, %v1869
      %v1871 = vpop.f32.mrb[0].mxu0
      %1872 = vmatprep.mubr.bf16.mxu0 0
      %1873 = vmatmul.mubr.bf16.gmra.mrb[0].mxu0 %v1763
      %v1874 = vpop.f32.mrb[0].mxu0
      %v1875 = vadd.f32 0.0, %v1874
      %v1876 = vpop.f32.mrb[0].mxu0
      %v1877 = vpop.f32.mrb[0].mxu0
      %v1878 = vadd.f32 0.0, %v1877
      %v1879 = vpop.f32.mrb[0].mxu0
      %1880 = vdwg.mxu0
      %v1881 = vadd.f32 %v1599, %v1851
      %v1882 = vadd.f32 %v1600, %v1854
      %v1883 = vadd.f32 %v1601, %v1859
      %v1884 = vadd.f32 %v1602, %v1862
      %v1885 = vadd.f32 %v1603, %v1867
      %v1886 = vadd.f32 %v1604, %v1870
      %v1887 = vadd.f32 %v1605, %v1875
      %v1888 = vadd.f32 %v1606, %v1878
      %v1889 = vld [vmem:[%s739] sm:$0xe]
      %v1890 = vld [vmem:[%s739 + $0x8] sm:$0xe]
      %v1891 = vld [vmem:[%s739 + $0x10] sm:$0xe]
      %v1892 = vld [vmem:[%s739 + $0x18] sm:$0xe]
      %v1893 = vld [vmem:[%s739 + $0x20] sm:$0xe]
      %v1894 = vld [vmem:[%s739 + $0x28] sm:$0xe]
      %v1895 = vld [vmem:[%s739 + $0x30] sm:$0xe]
      %v1896 = vld [vmem:[%s739 + $0x38] sm:$0xe]
      %v1913 = vrot.slane %v1889, 5
      %v1914 = vrot.slane %v1913, 4
      %v1915 = vrot.slane %v1608, 5
      %v1916 = vsel %vm1250, %v1914, %v1915
      %v1917 = vrot.slane %v1890, 5
      %v1918 = vrot.slane %v1917, 4
      %v1919 = vrot.slane %v1610, 5
      %v1920 = vsel %vm1250, %v1918, %v1919
      %v1921 = vrot.slane %v1891, 5
      %v1922 = vrot.slane %v1921, 4
      %v1923 = vrot.slane %v1612, 5
      %v1924 = vsel %vm1250, %v1922, %v1923
      %v1925 = vrot.slane %v1892, 5
      %v1926 = vrot.slane %v1925, 4
      %v1927 = vrot.slane %v1614, 5
      %v1928 = vsel %vm1250, %v1926, %v1927
      %v1929 = vrot.slane %v1893, 5
      %v1930 = vrot.slane %v1929, 4
      %v1931 = vrot.slane %v1616, 5
      %v1932 = vsel %vm1250, %v1930, %v1931
      %v1933 = vrot.slane %v1894, 5
      %v1934 = vrot.slane %v1933, 4
      %v1935 = vrot.slane %v1618, 5
      %v1936 = vsel %vm1250, %v1934, %v1935
      %v1937 = vrot.slane %v1895, 5
      %v1938 = vrot.slane %v1937, 4
      %v1939 = vrot.slane %v1620, 5
      %v1940 = vsel %vm1250, %v1938, %v1939
      %v1941 = vrot.slane %v1896, 5
      %v1942 = vrot.slane %v1941, 4
      %v1943 = vrot.slane %v1622, 5
      %v1944 = vsel %vm1250, %v1942, %v1943
      %s1945 = scalar_lea.vmem %s4, 320
      %v1946 = vld [vmem:[%s1945] sm:$0xf]
      %v1947 = vld [vmem:[%s1945 + $0x4] sm:$0xf]
      %v1948 = vld [vmem:[%s1945 + $0x8] sm:$0xf]
      %v1949 = vld [vmem:[%s1945 + $0xc] sm:$0xf]
      %v1950 = vld [vmem:[%s1945 + $0x10] sm:$0xf]
      %v1951 = vld [vmem:[%s1945 + $0x14] sm:$0xf]
      %v1952 = vld [vmem:[%s1945 + $0x18] sm:$0xf]
      %v1953 = vld [vmem:[%s1945 + $0x1c] sm:$0xf]
      %v1954 = vld [vmem:[%s1945 + $0x20] sm:$0xf]
      %v1955 = vld [vmem:[%s1945 + $0x24] sm:$0xf]
      %v1956 = vld [vmem:[%s1945 + $0x28] sm:$0xf]
      %v1957 = vld [vmem:[%s1945 + $0x2c] sm:$0xf]
      %v1958 = vld [vmem:[%s1945 + $0x30] sm:$0xf]
      %v1959 = vld [vmem:[%s1945 + $0x34] sm:$0xf]
      %v1960 = vld [vmem:[%s1945 + $0x38] sm:$0xf]
      %v1961 = vld [vmem:[%s1945 + $0x3c] sm:$0xf]
      %v1962 = vunpack.c.l.b16 %v1916
      %v1963 = vunpack.c.l.b16 %v1920
      %v1964 = vunpack.c.l.b16 %v1924
      %v1965 = vunpack.c.l.b16 %v1928
      %v1966 = vunpack.c.l.b16 %v1932
      %v1967 = vunpack.c.l.b16 %v1936
      %v1968 = vunpack.c.l.b16 %v1940
      %v1969 = vunpack.c.l.b16 %v1944
      %v1970 = vpack.c.b16 %v1963, %v1962
      %v1971 = vpack.c.b16 %v1965, %v1964
      %v1972 = vpack.c.b16 %v1967, %v1966
      %v1973 = vpack.c.b16 %v1969, %v1968
      %v1994 = vunpack.c.l.b16 %v1946
      %v1995 = vunpack.c.l.b16 %v1947
      %v1996 = vunpack.c.l.b16 %v1948
      %v1997 = vunpack.c.l.b16 %v1949
      %v1998 = vunpack.c.l.b16 %v1950
      %v1999 = vunpack.c.l.b16 %v1951
      %v2000 = vunpack.c.l.b16 %v1952
      %v2001 = vunpack.c.l.b16 %v1953
      %v2002 = vunpack.c.l.b16 %v1954
      %v2003 = vunpack.c.l.b16 %v1955
      %v2004 = vunpack.c.l.b16 %v1956
      %v2005 = vunpack.c.l.b16 %v1957
      %v2006 = vunpack.c.l.b16 %v1958
      %v2007 = vunpack.c.l.b16 %v1959
      %v2008 = vunpack.c.l.b16 %v1960
      %v2009 = vunpack.c.l.b16 %v1961
      %v2010 = vpack.c.b16 %v1995, %v1994
      %v2011 = vpack.c.b16 %v1997, %v1996
      %v2012 = vpack.c.b16 %v1999, %v1998
      %v2013 = vpack.c.b16 %v2001, %v2000
      %v2014 = vpack.c.b16 %v2003, %v2002
      %v2015 = vpack.c.b16 %v2005, %v2004
      %v2016 = vpack.c.b16 %v2007, %v2006
      %v2017 = vpack.c.b16 %v2009, %v2008
      %2026 = vmatprep.subr.bf16.mxu0 0
      %2027 = vmatpush1.bf16.msra.mxu0 %v2010
      %2028 = vmatprep.subr.bf16.mxu0 0
      %2029 = vmatpush1.bf16.msra.mxu0 %v2011
      %2030 = vmatprep.subr.bf16.mxu0 0
      %2031 = vmatpush1.bf16.msra.mxu0 %v2012
      %2032 = vmatprep.subr.bf16.mxu0 0
      %2033 = vmatpush1.bf16.msra.mxu0 %v2013
      %2034 = vmatprep.subr.bf16.mxu0 0
      %2035 = vmatpush1.bf16.msra.mxu0 %v2014
      %2036 = vmatprep.subr.bf16.mxu0 0
      %2037 = vmatpush1.bf16.msra.mxu0 %v2015
      %2038 = vmatprep.subr.bf16.mxu0 0
      %2039 = vmatpush1.bf16.msra.mxu0 %v2016
      %2040 = vmatprep.subr.bf16.mxu0 0
      %2041 = vmatpush1.bf16.msra.mxu0 %v2017
      %2042 = vmatprep.subr.bf16.mxu0 0
      %2043 = vmatpush1.bf16.msra.mxu0 0
      %2044 = vmatprep.subr.bf16.mxu0 0
      %2045 = vmatpush1.bf16.msra.mxu0 0
      %2046 = vmatprep.subr.bf16.mxu0 0
      %2047 = vmatpush1.bf16.msra.mxu0 0
      %2048 = vmatprep.subr.bf16.mxu0 0
      %2049 = vmatpush1.bf16.msra.mxu0 0
      %2050 = vmatprep.subr.bf16.mxu0 0
      %2051 = vmatpush1.bf16.msra.mxu0 0
      %2052 = vmatprep.subr.bf16.mxu0 0
      %2053 = vmatpush1.bf16.msra.mxu0 0
      %2054 = vmatprep.subr.bf16.mxu0 0
      %2055 = vmatpush1.bf16.msra.mxu0 0
      %2056 = vmatprep.subr.bf16.mxu0 0
      %2057 = vmatpush1.bf16.msra.mxu0 0
      %2058 = vmatprep.mubr.bf16.mxu0 0
      %2059 = vmatmul.mubr.bf16.gmra.mrb[0].mxu0 %v1970
      %v2060 = vpop.f32.mrb[0].mxu0
      %v2061 = vadd.f32 0.0, %v2060
      %v2062 = vpop.f32.mrb[0].mxu0
      %v2063 = vpop.f32.mrb[0].mxu0
      %v2064 = vadd.f32 0.0, %v2063
      %v2065 = vpop.f32.mrb[0].mxu0
      %2066 = vmatprep.mubr.bf16.mxu0 0
      %2067 = vmatmul.mubr.bf16.gmra.mrb[0].mxu0 %v1971
      %v2068 = vpop.f32.mrb[0].mxu0
      %v2069 = vadd.f32 0.0, %v2068
      %v2070 = vpop.f32.mrb[0].mxu0
      %v2071 = vpop.f32.mrb[0].mxu0
      %v2072 = vadd.f32 0.0, %v2071
      %v2073 = vpop.f32.mrb[0].mxu0
      %2074 = vmatprep.mubr.bf16.mxu0 0
      %2075 = vmatmul.mubr.bf16.gmra.mrb[0].mxu0 %v1972
      %v2076 = vpop.f32.mrb[0].mxu0
      %v2077 = vadd.f32 0.0, %v2076
      %v2078 = vpop.f32.mrb[0].mxu0
      %v2079 = vpop.f32.mrb[0].mxu0
      %v2080 = vadd.f32 0.0, %v2079
      %v2081 = vpop.f32.mrb[0].mxu0
      %2082 = vmatprep.mubr.bf16.mxu0 0
      %2083 = vmatmul.mubr.bf16.gmra.mrb[0].mxu0 %v1973
      %v2084 = vpop.f32.mrb[0].mxu0
      %v2085 = vadd.f32 0.0, %v2084
      %v2086 = vpop.f32.mrb[0].mxu0
      %v2087 = vpop.f32.mrb[0].mxu0
      %v2088 = vadd.f32 0.0, %v2087
      %v2089 = vpop.f32.mrb[0].mxu0
      %2090 = vdwg.mxu0
      %v2091 = vadd.f32 %v1881, %v2061
      %v2092 = vadd.f32 %v1882, %v2064
      %v2093 = vadd.f32 %v1883, %v2069
      %v2094 = vadd.f32 %v1884, %v2072
      %v2095 = vadd.f32 %v1885, %v2077
      %v2096 = vadd.f32 %v1886, %v2080
      %v2097 = vadd.f32 %v1887, %v2085
      %v2098 = vadd.f32 %v1888, %v2088
      %s2099 = scalar_lea.vmem [#allocation2], 16
      %v2100 = vld [vmem:[%s2099] sm:$0xf]
      %v2101 = vld [vmem:[%s2099 + $0x8] sm:$0xf]
      %v2102 = vld [vmem:[%s2099 + $0x10] sm:$0xf]
      %v2103 = vld [vmem:[%s2099 + $0x18] sm:$0xf]
      %v2104 = vld [vmem:[%s2099 + $0x20] sm:$0xf]
      %v2105 = vld [vmem:[%s2099 + $0x28] sm:$0xf]
      %v2106 = vld [vmem:[%s2099 + $0x30] sm:$0xf]
      %v2107 = vld [vmem:[%s2099 + $0x38] sm:$0xf]
      %s2108 = scalar_lea.vmem %s4, 384
      %v2109 = vld [vmem:[%s2108] sm:$0xf]
      %v2110 = vld [vmem:[%s2108 + $0x4] sm:$0xf]
      %v2111 = vld [vmem:[%s2108 + $0x8] sm:$0xf]
      %v2112 = vld [vmem:[%s2108 + $0xc] sm:$0xf]
      %v2113 = vld [vmem:[%s2108 + $0x10] sm:$0xf]
      %v2114 = vld [vmem:[%s2108 + $0x14] sm:$0xf]
      %v2115 = vld [vmem:[%s2108 + $0x18] sm:$0xf]
      %v2116 = vld [vmem:[%s2108 + $0x1c] sm:$0xf]
      %v2117 = vld [vmem:[%s2108 + $0x20] sm:$0xf]
      %v2118 = vld [vmem:[%s2108 + $0x24] sm:$0xf]
      %v2119 = vld [vmem:[%s2108 + $0x28] sm:$0xf]
      %v2120 = vld [vmem:[%s2108 + $0x2c] sm:$0xf]
      %v2121 = vld [vmem:[%s2108 + $0x30] sm:$0xf]
      %v2122 = vld [vmem:[%s2108 + $0x34] sm:$0xf]
      %v2123 = vld [vmem:[%s2108 + $0x38] sm:$0xf]
      %v2124 = vld [vmem:[%s2108 + $0x3c] sm:$0xf]
      %v2133 = vunpack.c.l.b16 %v2100
      %v2134 = vunpack.c.l.b16 %v2101
      %v2135 = vunpack.c.l.b16 %v2102
      %v2136 = vunpack.c.l.b16 %v2103
      %v2137 = vunpack.c.l.b16 %v2104
      %v2138 = vunpack.c.l.b16 %v2105
      %v2139 = vunpack.c.l.b16 %v2106
      %v2140 = vunpack.c.l.b16 %v2107
      %v2141 = vpack.c.b16 %v2134, %v2133
      %v2142 = vpack.c.b16 %v2136, %v2135
      %v2143 = vpack.c.b16 %v2138, %v2137
      %v2144 = vpack.c.b16 %v2140, %v2139
      %v2165 = vunpack.c.l.b16 %v2109
      %v2166 = vunpack.c.l.b16 %v2110
      %v2167 = vunpack.c.l.b16 %v2111
      %v2168 = vunpack.c.l.b16 %v2112
      %v2169 = vunpack.c.l.b16 %v2113
      %v2170 = vunpack.c.l.b16 %v2114
      %v2171 = vunpack.c.l.b16 %v2115
      %v2172 = vunpack.c.l.b16 %v2116
      %v2173 = vunpack.c.l.b16 %v2117
      %v2174 = vunpack.c.l.b16 %v2118
      %v2175 = vunpack.c.l.b16 %v2119
      %v2176 = vunpack.c.l.b16 %v2120
      %v2177 = vunpack.c.l.b16 %v2121
      %v2178 = vunpack.c.l.b16 %v2122
      %v2179 = vunpack.c.l.b16 %v2123
      %v2180 = vunpack.c.l.b16 %v2124
      %v2181 = vpack.c.b16 %v2166, %v2165
      %v2182 = vpack.c.b16 %v2168, %v2167
      %v2183 = vpack.c.b16 %v2170, %v2169
      %v2184 = vpack.c.b16 %v2172, %v2171
      %v2185 = vpack.c.b16 %v2174, %v2173
      %v2186 = vpack.c.b16 %v2176, %v2175
      %v2187 = vpack.c.b16 %v2178, %v2177
      %v2188 = vpack.c.b16 %v2180, %v2179
      %2197 = vmatprep.subr.bf16.mxu0 0
      %2198 = vmatpush1.bf16.msra.mxu0 %v2181
      %2199 = vmatprep.subr.bf16.mxu0 0
      %2200 = vmatpush1.bf16.msra.mxu0 %v2182
      %2201 = vmatprep.subr.bf16.mxu0 0
      %2202 = vmatpush1.bf16.msra.mxu0 %v2183
      %2203 = vmatprep.subr.bf16.mxu0 0
      %2204 = vmatpush1.bf16.msra.mxu0 %v2184
      %2205 = vmatprep.subr.bf16.mxu0 0
      %2206 = vmatpush1.bf16.msra.mxu0 %v2185
      %2207 = vmatprep.subr.bf16.mxu0 0
      %2208 = vmatpush1.bf16.msra.mxu0 %v2186
      %2209 = vmatprep.subr.bf16.mxu0 0
      %2210 = vmatpush1.bf16.msra.mxu0 %v2187
      %2211 = vmatprep.subr.bf16.mxu0 0
      %2212 = vmatpush1.bf16.msra.mxu0 %v2188
      %2213 = vmatprep.subr.bf16.mxu0 0
      %2214 = vmatpush1.bf16.msra.mxu0 0
      %2215 = vmatprep.subr.bf16.mxu0 0
      %2216 = vmatpush1.bf16.msra.mxu0 0
      %2217 = vmatprep.subr.bf16.mxu0 0
      %2218 = vmatpush1.bf16.msra.mxu0 0
      %2219 = vmatprep.subr.bf16.mxu0 0
      %2220 = vmatpush1.bf16.msra.mxu0 0
      %2221 = vmatprep.subr.bf16.mxu0 0
      %2222 = vmatpush1.bf16.msra.mxu0 0
      %2223 = vmatprep.subr.bf16.mxu0 0
      %2224 = vmatpush1.bf16.msra.mxu0 0
      %2225 = vmatprep.subr.bf16.mxu0 0
      %2226 = vmatpush1.bf16.msra.mxu0 0
      %2227 = vmatprep.subr.bf16.mxu0 0
      %2228 = vmatpush1.bf16.msra.mxu0 0
      %2229 = vmatprep.mubr.bf16.mxu0 0
      %2230 = vmatmul.mubr.bf16.gmra.mrb[0].mxu0 %v2141
      %v2231 = vpop.f32.mrb[0].mxu0
      %v2232 = vadd.f32 0.0, %v2231
      %v2233 = vpop.f32.mrb[0].mxu0
      %v2234 = vpop.f32.mrb[0].mxu0
      %v2235 = vadd.f32 0.0, %v2234
      %v2236 = vpop.f32.mrb[0].mxu0
      %2237 = vmatprep.mubr.bf16.mxu0 0
      %2238 = vmatmul.mubr.bf16.gmra.mrb[0].mxu0 %v2142
      %v2239 = vpop.f32.mrb[0].mxu0
      %v2240 = vadd.f32 0.0, %v2239
      %v2241 = vpop.f32.mrb[0].mxu0
      %v2242 = vpop.f32.mrb[0].mxu0
      %v2243 = vadd.f32 0.0, %v2242
      %v2244 = vpop.f32.mrb[0].mxu0
      %2245 = vmatprep.mubr.bf16.mxu0 0
      %2246 = vmatmul.mubr.bf16.gmra.mrb[0].mxu0 %v2143
      %v2247 = vpop.f32.mrb[0].mxu0
      %v2248 = vadd.f32 0.0, %v2247
      %v2249 = vpop.f32.mrb[0].mxu0
      %v2250 = vpop.f32.mrb[0].mxu0
      %v2251 = vadd.f32 0.0, %v2250
      %v2252 = vpop.f32.mrb[0].mxu0
      %2253 = vmatprep.mubr.bf16.mxu0 0
      %2254 = vmatmul.mubr.bf16.gmra.mrb[0].mxu0 %v2144
      %v2255 = vpop.f32.mrb[0].mxu0
      %v2256 = vadd.f32 0.0, %v2255
      %v2257 = vpop.f32.mrb[0].mxu0
      %v2258 = vpop.f32.mrb[0].mxu0
      %v2259 = vadd.f32 0.0, %v2258
      %v2260 = vpop.f32.mrb[0].mxu0
      %2261 = vdwg.mxu0
      %v2262 = vadd.f32 %v2091, %v2232
      %v2263 = vadd.f32 %v2092, %v2235
      %v2264 = vadd.f32 %v2093, %v2240
      %v2265 = vadd.f32 %v2094, %v2243
      %v2266 = vadd.f32 %v2095, %v2248
      %v2267 = vadd.f32 %v2096, %v2251
      %v2268 = vadd.f32 %v2097, %v2256
      %v2269 = vadd.f32 %v2098, %v2259
      %v2270 = vld [vmem:[%s2099] sm:$0xf]
      %v2271 = vld [vmem:[%s2099 + $0x4] sm:$0x1]
      %v2272 = vld [vmem:[%s2099 + $0x8] sm:$0xf]
      %v2273 = vld [vmem:[%s2099 + $0xc] sm:$0x1]
      %v2274 = vld [vmem:[%s2099 + $0x10] sm:$0xf]
      %v2275 = vld [vmem:[%s2099 + $0x14] sm:$0x1]
      %v2276 = vld [vmem:[%s2099 + $0x18] sm:$0xf]
      %v2277 = vld [vmem:[%s2099 + $0x1c] sm:$0x1]
      %v2278 = vld [vmem:[%s2099 + $0x20] sm:$0xf]
      %v2279 = vld [vmem:[%s2099 + $0x24] sm:$0x1]
      %v2280 = vld [vmem:[%s2099 + $0x28] sm:$0xf]
      %v2281 = vld [vmem:[%s2099 + $0x2c] sm:$0x1]
      %v2282 = vld [vmem:[%s2099 + $0x30] sm:$0xf]
      %v2283 = vld [vmem:[%s2099 + $0x34] sm:$0x1]
      %v2284 = vld [vmem:[%s2099 + $0x38] sm:$0xf]
      %v2285 = vld [vmem:[%s2099 + $0x3c] sm:$0x1]
      %v2287 = vshrl.u32 %v2270, 16
      %v2289 = vrot.slane %v2287, 4
      %v2290 = vshll.u32 %v2270, 16
      %v2292 = vrot.slane %v2290, 5
      %v2293 = vor.u32 %v2289, %v2292
      %v2294 = vrot.slane %v2293, 4
      %v2296 = vshll.u32 %v2271, 16
      %v2298 = vrot.slane %v2296, 5
      %v2299 = vsel %vm828, %v2294, %v2298
      %v2301 = vshrl.u32 %v2272, 16
      %v2303 = vrot.slane %v2301, 4
      %v2304 = vshll.u32 %v2272, 16
      %v2306 = vrot.slane %v2304, 5
      %v2307 = vor.u32 %v2303, %v2306
      %v2308 = vrot.slane %v2307, 4
      %v2310 = vshll.u32 %v2273, 16
      %v2312 = vrot.slane %v2310, 5
      %v2313 = vsel %vm828, %v2308, %v2312
      %v2315 = vshrl.u32 %v2274, 16
      %v2317 = vrot.slane %v2315, 4
      %v2318 = vshll.u32 %v2274, 16
      %v2320 = vrot.slane %v2318, 5
      %v2321 = vor.u32 %v2317, %v2320
      %v2322 = vrot.slane %v2321, 4
      %v2324 = vshll.u32 %v2275, 16
      %v2326 = vrot.slane %v2324, 5
      %v2327 = vsel %vm828, %v2322, %v2326
      %v2329 = vshrl.u32 %v2276, 16
      %v2331 = vrot.slane %v2329, 4
      %v2332 = vshll.u32 %v2276, 16
      %v2334 = vrot.slane %v2332, 5
      %v2335 = vor.u32 %v2331, %v2334
      %v2336 = vrot.slane %v2335, 4
      %v2338 = vshll.u32 %v2277, 16
      %v2340 = vrot.slane %v2338, 5
      %v2341 = vsel %vm828, %v2336, %v2340
      %v2343 = vshrl.u32 %v2278, 16
      %v2345 = vrot.slane %v2343, 4
      %v2346 = vshll.u32 %v2278, 16
      %v2348 = vrot.slane %v2346, 5
      %v2349 = vor.u32 %v2345, %v2348
      %v2350 = vrot.slane %v2349, 4
      %v2352 = vshll.u32 %v2279, 16
      %v2354 = vrot.slane %v2352, 5
      %v2355 = vsel %vm828, %v2350, %v2354
      %v2357 = vshrl.u32 %v2280, 16
      %v2359 = vrot.slane %v2357, 4
      %v2360 = vshll.u32 %v2280, 16
      %v2362 = vrot.slane %v2360, 5
      %v2363 = vor.u32 %v2359, %v2362
      %v2364 = vrot.slane %v2363, 4
      %v2366 = vshll.u32 %v2281, 16
      %v2368 = vrot.slane %v2366, 5
      %v2369 = vsel %vm828, %v2364, %v2368
      %v2371 = vshrl.u32 %v2282, 16
      %v2373 = vrot.slane %v2371, 4
      %v2374 = vshll.u32 %v2282, 16
      %v2376 = vrot.slane %v2374, 5
      %v2377 = vor.u32 %v2373, %v2376
      %v2378 = vrot.slane %v2377, 4
      %v2380 = vshll.u32 %v2283, 16
      %v2382 = vrot.slane %v2380, 5
      %v2383 = vsel %vm828, %v2378, %v2382
      %v2385 = vshrl.u32 %v2284, 16
      %v2387 = vrot.slane %v2385, 4
      %v2388 = vshll.u32 %v2284, 16
      %v2390 = vrot.slane %v2388, 5
      %v2391 = vor.u32 %v2387, %v2390
      %v2392 = vrot.slane %v2391, 4
      %v2394 = vshll.u32 %v2285, 16
      %v2396 = vrot.slane %v2394, 5
      %v2397 = vsel %vm828, %v2392, %v2396
      %s2398 = scalar_lea.vmem %s4, 448
      %v2399 = vld [vmem:[%s2398] sm:$0xf]
      %v2400 = vld [vmem:[%s2398 + $0x4] sm:$0xf]
      %v2401 = vld [vmem:[%s2398 + $0x8] sm:$0xf]
      %v2402 = vld [vmem:[%s2398 + $0xc] sm:$0xf]
      %v2403 = vld [vmem:[%s2398 + $0x10] sm:$0xf]
      %v2404 = vld [vmem:[%s2398 + $0x14] sm:$0xf]
      %v2405 = vld [vmem:[%s2398 + $0x18] sm:$0xf]
      %v2406 = vld [vmem:[%s2398 + $0x1c] sm:$0xf]
      %v2407 = vld [vmem:[%s2398 + $0x20] sm:$0xf]
      %v2408 = vld [vmem:[%s2398 + $0x24] sm:$0xf]
      %v2409 = vld [vmem:[%s2398 + $0x28] sm:$0xf]
      %v2410 = vld [vmem:[%s2398 + $0x2c] sm:$0xf]
      %v2411 = vld [vmem:[%s2398 + $0x30] sm:$0xf]
      %v2412 = vld [vmem:[%s2398 + $0x34] sm:$0xf]
      %v2413 = vld [vmem:[%s2398 + $0x38] sm:$0xf]
      %v2414 = vld [vmem:[%s2398 + $0x3c] sm:$0xf]
      %v2415 = vunpack.c.l.b16 %v2299
      %v2416 = vunpack.c.l.b16 %v2313
      %v2417 = vunpack.c.l.b16 %v2327
      %v2418 = vunpack.c.l.b16 %v2341
      %v2419 = vunpack.c.l.b16 %v2355
      %v2420 = vunpack.c.l.b16 %v2369
      %v2421 = vunpack.c.l.b16 %v2383
      %v2422 = vunpack.c.l.b16 %v2397
      %v2423 = vpack.c.b16 %v2416, %v2415
      %v2424 = vpack.c.b16 %v2418, %v2417
      %v2425 = vpack.c.b16 %v2420, %v2419
      %v2426 = vpack.c.b16 %v2422, %v2421
      %v2447 = vunpack.c.l.b16 %v2399
      %v2448 = vunpack.c.l.b16 %v2400
      %v2449 = vunpack.c.l.b16 %v2401
      %v2450 = vunpack.c.l.b16 %v2402
      %v2451 = vunpack.c.l.b16 %v2403
      %v2452 = vunpack.c.l.b16 %v2404
      %v2453 = vunpack.c.l.b16 %v2405
      %v2454 = vunpack.c.l.b16 %v2406
      %v2455 = vunpack.c.l.b16 %v2407
      %v2456 = vunpack.c.l.b16 %v2408
      %v2457 = vunpack.c.l.b16 %v2409
      %v2458 = vunpack.c.l.b16 %v2410
      %v2459 = vunpack.c.l.b16 %v2411
      %v2460 = vunpack.c.l.b16 %v2412
      %v2461 = vunpack.c.l.b16 %v2413
      %v2462 = vunpack.c.l.b16 %v2414
      %v2463 = vpack.c.b16 %v2448, %v2447
      %v2464 = vpack.c.b16 %v2450, %v2449
      %v2465 = vpack.c.b16 %v2452, %v2451
      %v2466 = vpack.c.b16 %v2454, %v2453
      %v2467 = vpack.c.b16 %v2456, %v2455
      %v2468 = vpack.c.b16 %v2458, %v2457
      %v2469 = vpack.c.b16 %v2460, %v2459
      %v2470 = vpack.c.b16 %v2462, %v2461
      %2479 = vmatprep.subr.bf16.mxu0 0
      %2480 = vmatpush1.bf16.msra.mxu0 %v2463
      %2481 = vmatprep.subr.bf16.mxu0 0
      %2482 = vmatpush1.bf16.msra.mxu0 %v2464
      %2483 = vmatprep.subr.bf16.mxu0 0
      %2484 = vmatpush1.bf16.msra.mxu0 %v2465
      %2485 = vmatprep.subr.bf16.mxu0 0
      %2486 = vmatpush1.bf16.msra.mxu0 %v2466
      %2487 = vmatprep.subr.bf16.mxu0 0
      %2488 = vmatpush1.bf16.msra.mxu0 %v2467
      %2489 = vmatprep.subr.bf16.mxu0 0
      %2490 = vmatpush1.bf16.msra.mxu0 %v2468
      %2491 = vmatprep.subr.bf16.mxu0 0
      %2492 = vmatpush1.bf16.msra.mxu0 %v2469
      %2493 = vmatprep.subr.bf16.mxu0 0
      %2494 = vmatpush1.bf16.msra.mxu0 %v2470
      %2495 = vmatprep.subr.bf16.mxu0 0
      %2496 = vmatpush1.bf16.msra.mxu0 0
      %2497 = vmatprep.subr.bf16.mxu0 0
      %2498 = vmatpush1.bf16.msra.mxu0 0
      %2499 = vmatprep.subr.bf16.mxu0 0
      %2500 = vmatpush1.bf16.msra.mxu0 0
      %2501 = vmatprep.subr.bf16.mxu0 0
      %2502 = vmatpush1.bf16.msra.mxu0 0
      %2503 = vmatprep.subr.bf16.mxu0 0
      %2504 = vmatpush1.bf16.msra.mxu0 0
      %2505 = vmatprep.subr.bf16.mxu0 0
      %2506 = vmatpush1.bf16.msra.mxu0 0
      %2507 = vmatprep.subr.bf16.mxu0 0
      %2508 = vmatpush1.bf16.msra.mxu0 0
      %2509 = vmatprep.subr.bf16.mxu0 0
      %2510 = vmatpush1.bf16.msra.mxu0 0
      %2511 = vmatprep.mubr.bf16.mxu0 0
      %2512 = vmatmul.mubr.bf16.gmra.mrb[0].mxu0 %v2423
      %v2513 = vpop.f32.mrb[0].mxu0
      %v2514 = vadd.f32 0.0, %v2513
      %v2515 = vpop.f32.mrb[0].mxu0
      %v2516 = vpop.f32.mrb[0].mxu0
      %v2517 = vadd.f32 0.0, %v2516
      %v2518 = vpop.f32.mrb[0].mxu0
      %2519 = vmatprep.mubr.bf16.mxu0 0
      %2520 = vmatmul.mubr.bf16.gmra.mrb[0].mxu0 %v2424
      %v2521 = vpop.f32.mrb[0].mxu0
      %v2522 = vadd.f32 0.0, %v2521
      %v2523 = vpop.f32.mrb[0].mxu0
      %v2524 = vpop.f32.mrb[0].mxu0
      %v2525 = vadd.f32 0.0, %v2524
      %v2526 = vpop.f32.mrb[0].mxu0
      %2527 = vmatprep.mubr.bf16.mxu0 0
      %2528 = vmatmul.mubr.bf16.gmra.mrb[0].mxu0 %v2425
      %v2529 = vpop.f32.mrb[0].mxu0
      %v2530 = vadd.f32 0.0, %v2529
      %v2531 = vpop.f32.mrb[0].mxu0
      %v2532 = vpop.f32.mrb[0].mxu0
      %v2533 = vadd.f32 0.0, %v2532
      %v2534 = vpop.f32.mrb[0].mxu0
      %2535 = vmatprep.mubr.bf16.mxu0 0
      %2536 = vmatmul.mubr.bf16.gmra.mrb[0].mxu0 %v2426
      %v2537 = vpop.f32.mrb[0].mxu0
      %v2538 = vadd.f32 0.0, %v2537
      %v2539 = vpop.f32.mrb[0].mxu0
      %v2540 = vpop.f32.mrb[0].mxu0
      %v2541 = vadd.f32 0.0, %v2540
      %v2542 = vpop.f32.mrb[0].mxu0
      %2543 = vdwg.mxu0
      %v2544 = vadd.f32 %v2262, %v2514
      %v2545 = vadd.f32 %v2263, %v2517
      %v2546 = vadd.f32 %v2264, %v2522
      %v2547 = vadd.f32 %v2265, %v2525
      %v2548 = vadd.f32 %v2266, %v2530
      %v2549 = vadd.f32 %v2267, %v2533
      %v2550 = vadd.f32 %v2268, %v2538
      %v2551 = vadd.f32 %v2269, %v2541
      %v2552 = vld [vmem:[%s2099] sm:$0xe]
      %v2553 = vld [vmem:[%s2099 + $0x8] sm:$0xe]
      %v2554 = vld [vmem:[%s2099 + $0x10] sm:$0xe]
      %v2555 = vld [vmem:[%s2099 + $0x18] sm:$0xe]
      %v2556 = vld [vmem:[%s2099 + $0x20] sm:$0xe]
      %v2557 = vld [vmem:[%s2099 + $0x28] sm:$0xe]
      %v2558 = vld [vmem:[%s2099 + $0x30] sm:$0xe]
      %v2559 = vld [vmem:[%s2099 + $0x38] sm:$0xe]
      %v2576 = vrot.slane %v2552, 5
      %v2577 = vrot.slane %v2576, 4
      %v2578 = vrot.slane %v2271, 5
      %v2579 = vsel %vm1250, %v2577, %v2578
      %v2580 = vrot.slane %v2553, 5
      %v2581 = vrot.slane %v2580, 4
      %v2582 = vrot.slane %v2273, 5
      %v2583 = vsel %vm1250, %v2581, %v2582
      %v2584 = vrot.slane %v2554, 5
      %v2585 = vrot.slane %v2584, 4
      %v2586 = vrot.slane %v2275, 5
      %v2587 = vsel %vm1250, %v2585, %v2586
      %v2588 = vrot.slane %v2555, 5
      %v2589 = vrot.slane %v2588, 4
      %v2590 = vrot.slane %v2277, 5
      %v2591 = vsel %vm1250, %v2589, %v2590
      %v2592 = vrot.slane %v2556, 5
      %v2593 = vrot.slane %v2592, 4
      %v2594 = vrot.slane %v2279, 5
      %v2595 = vsel %vm1250, %v2593, %v2594
      %v2596 = vrot.slane %v2557, 5
      %v2597 = vrot.slane %v2596, 4
      %v2598 = vrot.slane %v2281, 5
      %v2599 = vsel %vm1250, %v2597, %v2598
      %v2600 = vrot.slane %v2558, 5
      %v2601 = vrot.slane %v2600, 4
      %v2602 = vrot.slane %v2283, 5
      %v2603 = vsel %vm1250, %v2601, %v2602
      %v2604 = vrot.slane %v2559, 5
      %v2605 = vrot.slane %v2604, 4
      %v2606 = vrot.slane %v2285, 5
      %v2607 = vsel %vm1250, %v2605, %v2606
      %s2608 = scalar_lea.vmem %s4, 512
      %v2609 = vld [vmem:[%s2608] sm:$0xf]
      %v2610 = vld [vmem:[%s2608 + $0x4] sm:$0xf]
      %v2611 = vld [vmem:[%s2608 + $0x8] sm:$0xf]
      %v2612 = vld [vmem:[%s2608 + $0xc] sm:$0xf]
      %v2613 = vld [vmem:[%s2608 + $0x10] sm:$0xf]
      %v2614 = vld [vmem:[%s2608 + $0x14] sm:$0xf]
      %v2615 = vld [vmem:[%s2608 + $0x18] sm:$0xf]
      %v2616 = vld [vmem:[%s2608 + $0x1c] sm:$0xf]
      %v2617 = vld [vmem:[%s2608 + $0x20] sm:$0xf]
      %v2618 = vld [vmem:[%s2608 + $0x24] sm:$0xf]
      %v2619 = vld [vmem:[%s2608 + $0x28] sm:$0xf]
      %v2620 = vld [vmem:[%s2608 + $0x2c] sm:$0xf]
      %v2621 = vld [vmem:[%s2608 + $0x30] sm:$0xf]
      %v2622 = vld [vmem:[%s2608 + $0x34] sm:$0xf]
      %v2623 = vld [vmem:[%s2608 + $0x38] sm:$0xf]
      %v2624 = vld [vmem:[%s2608 + $0x3c] sm:$0xf]
      %v2625 = vunpack.c.l.b16 %v2579
      %v2626 = vunpack.c.l.b16 %v2583
      %v2627 = vunpack.c.l.b16 %v2587
      %v2628 = vunpack.c.l.b16 %v2591
      %v2629 = vunpack.c.l.b16 %v2595
      %v2630 = vunpack.c.l.b16 %v2599
      %v2631 = vunpack.c.l.b16 %v2603
      %v2632 = vunpack.c.l.b16 %v2607
      %v2633 = vpack.c.b16 %v2626, %v2625
      %v2634 = vpack.c.b16 %v2628, %v2627
      %v2635 = vpack.c.b16 %v2630, %v2629
      %v2636 = vpack.c.b16 %v2632, %v2631
      %v2657 = vunpack.c.l.b16 %v2609
      %v2658 = vunpack.c.l.b16 %v2610
      %v2659 = vunpack.c.l.b16 %v2611
      %v2660 = vunpack.c.l.b16 %v2612
      %v2661 = vunpack.c.l.b16 %v2613
      %v2662 = vunpack.c.l.b16 %v2614
      %v2663 = vunpack.c.l.b16 %v2615
      %v2664 = vunpack.c.l.b16 %v2616
      %v2665 = vunpack.c.l.b16 %v2617
      %v2666 = vunpack.c.l.b16 %v2618
      %v2667 = vunpack.c.l.b16 %v2619
      %v2668 = vunpack.c.l.b16 %v2620
      %v2669 = vunpack.c.l.b16 %v2621
      %v2670 = vunpack.c.l.b16 %v2622
      %v2671 = vunpack.c.l.b16 %v2623
      %v2672 = vunpack.c.l.b16 %v2624
      %v2673 = vpack.c.b16 %v2658, %v2657
      %v2674 = vpack.c.b16 %v2660, %v2659
      %v2675 = vpack.c.b16 %v2662, %v2661
      %v2676 = vpack.c.b16 %v2664, %v2663
      %v2677 = vpack.c.b16 %v2666, %v2665
      %v2678 = vpack.c.b16 %v2668, %v2667
      %v2679 = vpack.c.b16 %v2670, %v2669
      %v2680 = vpack.c.b16 %v2672, %v2671
      %2689 = vmatprep.subr.bf16.mxu0 0
      %2690 = vmatpush1.bf16.msra.mxu0 %v2673
      %2691 = vmatprep.subr.bf16.mxu0 0
      %2692 = vmatpush1.bf16.msra.mxu0 %v2674
      %2693 = vmatprep.subr.bf16.mxu0 0
      %2694 = vmatpush1.bf16.msra.mxu0 %v2675
      %2695 = vmatprep.subr.bf16.mxu0 0
      %2696 = vmatpush1.bf16.msra.mxu0 %v2676
      %2697 = vmatprep.subr.bf16.mxu0 0
      %2698 = vmatpush1.bf16.msra.mxu0 %v2677
      %2699 = vmatprep.subr.bf16.mxu0 0
      %2700 = vmatpush1.bf16.msra.mxu0 %v2678
      %2701 = vmatprep.subr.bf16.mxu0 0
      %2702 = vmatpush1.bf16.msra.mxu0 %v2679
      %2703 = vmatprep.subr.bf16.mxu0 0
      %2704 = vmatpush1.bf16.msra.mxu0 %v2680
      %2705 = vmatprep.subr.bf16.mxu0 0
      %2706 = vmatpush1.bf16.msra.mxu0 0
      %2707 = vmatprep.subr.bf16.mxu0 0
      %2708 = vmatpush1.bf16.msra.mxu0 0
      %2709 = vmatprep.subr.bf16.mxu0 0
      %2710 = vmatpush1.bf16.msra.mxu0 0
      %2711 = vmatprep.subr.bf16.mxu0 0
      %2712 = vmatpush1.bf16.msra.mxu0 0
      %2713 = vmatprep.subr.bf16.mxu0 0
      %2714 = vmatpush1.bf16.msra.mxu0 0
      %2715 = vmatprep.subr.bf16.mxu0 0
      %2716 = vmatpush1.bf16.msra.mxu0 0
      %2717 = vmatprep.subr.bf16.mxu0 0
      %2718 = vmatpush1.bf16.msra.mxu0 0
      %2719 = vmatprep.subr.bf16.mxu0 0
      %2720 = vmatpush1.bf16.msra.mxu0 0
      %2721 = vmatprep.mubr.bf16.mxu0 0
      %2722 = vmatmul.mubr.bf16.gmra.mrb[0].mxu0 %v2633
      %v2723 = vpop.f32.mrb[0].mxu0
      %v2724 = vadd.f32 0.0, %v2723
      %v2725 = vpop.f32.mrb[0].mxu0
      %v2726 = vpop.f32.mrb[0].mxu0
      %v2727 = vadd.f32 0.0, %v2726
      %v2728 = vpop.f32.mrb[0].mxu0
      %2729 = vmatprep.mubr.bf16.mxu0 0
      %2730 = vmatmul.mubr.bf16.gmra.mrb[0].mxu0 %v2634
      %v2731 = vpop.f32.mrb[0].mxu0
      %v2732 = vadd.f32 0.0, %v2731
      %v2733 = vpop.f32.mrb[0].mxu0
      %v2734 = vpop.f32.mrb[0].mxu0
      %v2735 = vadd.f32 0.0, %v2734
      %v2736 = vpop.f32.mrb[0].mxu0
      %2737 = vmatprep.mubr.bf16.mxu0 0
      %2738 = vmatmul.mubr.bf16.gmra.mrb[0].mxu0 %v2635
      %v2739 = vpop.f32.mrb[0].mxu0
      %v2740 = vadd.f32 0.0, %v2739
      %v2741 = vpop.f32.mrb[0].mxu0
      %v2742 = vpop.f32.mrb[0].mxu0
      %v2743 = vadd.f32 0.0, %v2742
      %v2744 = vpop.f32.mrb[0].mxu0
      %2745 = vmatprep.mubr.bf16.mxu0 0
      %2746 = vmatmul.mubr.bf16.gmra.mrb[0].mxu0 %v2636
      %v2747 = vpop.f32.mrb[0].mxu0
      %v2748 = vadd.f32 0.0, %v2747
      %v2749 = vpop.f32.mrb[0].mxu0
      %v2750 = vpop.f32.mrb[0].mxu0
      %v2751 = vadd.f32 0.0, %v2750
      %v2752 = vpop.f32.mrb[0].mxu0
      %2753 = vdwg.mxu0
      %v2754 = vadd.f32 %v2544, %v2724
      %v2755 = vadd.f32 %v2545, %v2727
      %v2756 = vadd.f32 %v2546, %v2732
      %v2757 = vadd.f32 %v2547, %v2735
      %v2758 = vadd.f32 %v2548, %v2740
      %v2759 = vadd.f32 %v2549, %v2743
      %v2760 = vadd.f32 %v2550, %v2748
      %v2761 = vadd.f32 %v2551, %v2751
      %v2762 = vpack.c.bf16 %v2754, %v2754
      %v2763 = vpack.c.bf16 %v2755, %v2755
      %v2764 = vpack.c.bf16 %v2756, %v2756
      %v2765 = vpack.c.bf16 %v2757, %v2757
      %v2766 = vpack.c.bf16 %v2758, %v2758
      %v2767 = vpack.c.bf16 %v2759, %v2759
      %v2768 = vpack.c.bf16 %v2760, %v2760
      %v2769 = vpack.c.bf16 %v2761, %v2761
      %2770 = vst [vmem:[%s278] sm:$0xf] %v2762
      %2771 = vst [vmem:[%s278 + $0x4] sm:$0xf] %v2763
      %2772 = vst [vmem:[%s278 + $0x8] sm:$0xf] %v2764
      %2773 = vst [vmem:[%s278 + $0xc] sm:$0xf] %v2765
      %2774 = vst [vmem:[%s278 + $0x10] sm:$0xf] %v2766
      %2775 = vst [vmem:[%s278 + $0x14] sm:$0xf] %v2767
      %2776 = vst [vmem:[%s278 + $0x18] sm:$0xf] %v2768
      %2777 = vst [vmem:[%s278 + $0x1c] sm:$0xf] %v2769
      %p2778 = scmp.lt.s32.totalorder %s18, 1
      %s2779 = scalar_select %p2778, %s18, 1
      %s2780 = smul.addr %s2779, 8
      %s2781 = smul.addr %s2780, 4
      %s2782 = scalar_lea.vmem %s7, %s2781
      // Predicated region
      $region49: #{feature_extractor.9} parent=47 // pred_check
        %p2783 = pneg %p188
      $region50: #{feature_extractor.9} parent=47 // pred_check_branch
        %2785 = sbr.rel (%p2783) target = $region52
      $region51: #{feature_extractor.9} parent=47 // pred_region
        _
      $region52: #{feature_extractor.9} parent=47 // pred_fallthru
        _
    $region48: #{feature_extractor.9} parent=5 // pred_fallthru
      _
    %p2786 = scmp.le.s32.totalorder 2, %s13
    // Predicated region
    $region53: #{feature_extractor.9} parent=5 // pred_check
      %p2787 = pneg %p2786
    $region54: #{feature_extractor.9} parent=5 // pred_check_branch
      %2789 = sbr.rel (%p2787) target = $region56
    $region55: #{feature_extractor.9} parent=5 // pred_region
      %s2790 = ssub.s32 %s13, 2
      // Predicated region
      $region57: #{feature_extractor.9} parent=55 // pred_check
        %p2791 = pneg %p194
      $region58: #{feature_extractor.9} parent=55 // pred_check_branch
        %2793 = sbr.rel (%p2791) target = $region60
      $region59: #{feature_extractor.9} parent=55 // pred_region
        %p2794 = scmp.lt.s32.totalorder %s19, 1
        %s2795 = scalar_select %p2794, %s19, 1
        %s2796 = smul.addr %s2795, 8
        %s2797 = smul.addr %s2796, 4
        %s2798 = scalar_lea.vmem %s7, %s2797
      $region60: #{feature_extractor.9} parent=55 // pred_fallthru
        _
    $region56: #{feature_extractor.9} parent=5 // pred_fallthru
      _
  $region6: #{feature_extractor.9} parent=0 // loop_footer
    %s17 = sadd.s32 1, %s13
  $region7: #{feature_extractor.9} parent=0 // loop_footer_branch
    %12 = sbr.rel target = $region3
  $region8: #{feature_extractor.9} parent=0 // loop_exit
    _

// kernel: feature_extractor.15
$region0: #{feature_extractor.15}
  #allocation0 [shape = 'u32[]', space=smem, size = 0x4, offset = 0x4, fixed_abs, tag = 'smem constant byte address 0x4 - core index']
  #allocation1 [shape = 'u32[144,128]{1,0:T(1,128)}', space=vmem, size = 0x12000, scoped, tag = 'internal scratch']
  %s0 = inlined_call_operand.vmem [shape: bf16[128,1024], index: 0, kind: input, shape index: {}]
  %s1 = inlined_call_operand.vmem [shape: bf16[1024,128], index: 1, kind: input, shape index: {}]
  %s2 = inlined_call_operand.vmem [shape: f32[1,1024], index: 2, kind: input, shape index: {}]
  %s3 = inlined_call_operand.vmem [shape: f32[1,1024], index: 3, kind: input, shape index: {}]
  %s4 = inlined_call_operand.vmem [shape: bf16[128,128], index: 4, kind: output, shape index: {}]
  %s5 = sld [smem:[#allocation0]]
  $region26: #{feature_extractor.15} parent=0
    _
  %s7 = ssub.s32 1, %s5
  %s8 = scalar_select 0, %s7, %s5
  // Predicated region
  $region2: #{feature_extractor.15} parent=0 // pred_check
    _
  $region3: #{feature_extractor.15} parent=0 // pred_check_branch
    %10 = sbr.rel (0) target = $region5
  $region4: #{feature_extractor.15} parent=0 // pred_region
    _
  $region5: #{feature_extractor.15} parent=0 // pred_fallthru
    _
  // Predicated region
  $region6: #{feature_extractor.15} parent=0 // pred_check
    _
  $region7: #{feature_extractor.15} parent=0 // pred_check_branch
    %12 = sbr.rel (0) target = $region9
  $region8: #{feature_extractor.15} parent=0 // pred_region
    _
  $region9: #{feature_extractor.15} parent=0 // pred_fallthru
    _
  // Predicated region
  $region10: #{feature_extractor.15} parent=0 // pred_check
    _
  $region11: #{feature_extractor.15} parent=0 // pred_check_branch
    %14 = sbr.rel (0) target = $region13
  $region12: #{feature_extractor.15} parent=0 // pred_region
    _
  $region13: #{feature_extractor.15} parent=0 // pred_fallthru
    _
  // Predicated region
  $region14: #{feature_extractor.15} parent=0 // pred_check
    _
  $region15: #{feature_extractor.15} parent=0 // pred_check_branch
    %16 = sbr.rel (0) target = $region17
  $region16: #{feature_extractor.15} parent=0 // pred_region
    _
  $region17: #{feature_extractor.15} parent=0 // pred_fallthru
    _
  %v18 = vld [vmem:[%s0] sm:$0xff]
  %v19 = vld [vmem:[%s0 + $0x8] sm:$0xff]
  %v20 = vld [vmem:[%s0 + $0x10] sm:$0xff]
  %v21 = vld [vmem:[%s0 + $0x18] sm:$0xff]
  %v22 = vld [vmem:[%s0 + $0x20] sm:$0xff]
  %v23 = vld [vmem:[%s0 + $0x28] sm:$0xff]
  %v24 = vld [vmem:[%s0 + $0x30] sm:$0xff]
  %v25 = vld [vmem:[%s0 + $0x38] sm:$0xff]
  %v26 = vld [vmem:[%s0 + $0x40] sm:$0xff]
  %v27 = vld [vmem:[%s0 + $0x48] sm:$0xff]
  %v28 = vld [vmem:[%s0 + $0x50] sm:$0xff]
  %v29 = vld [vmem:[%s0 + $0x58] sm:$0xff]
  %v30 = vld [vmem:[%s0 + $0x60] sm:$0xff]
  %v31 = vld [vmem:[%s0 + $0x68] sm:$0xff]
  %v32 = vld [vmem:[%s0 + $0x70] sm:$0xff]
  %v33 = vld [vmem:[%s0 + $0x78] sm:$0xff]
  %v34 = vld [vmem:[%s0 + $0x80] sm:$0xff]
  %v35 = vld [vmem:[%s0 + $0x88] sm:$0xff]
  %v36 = vld [vmem:[%s0 + $0x90] sm:$0xff]
  %v37 = vld [vmem:[%s0 + $0x98] sm:$0xff]
  %v38 = vld [vmem:[%s0 + $0xa0] sm:$0xff]
  %v39 = vld [vmem:[%s0 + $0xa8] sm:$0xff]
  %v40 = vld [vmem:[%s0 + $0xb0] sm:$0xff]
  %v41 = vld [vmem:[%s0 + $0xb8] sm:$0xff]
  %v42 = vld [vmem:[%s0 + $0xc0] sm:$0xff]
  %v43 = vld [vmem:[%s0 + $0xc8] sm:$0xff]
  %v44 = vld [vmem:[%s0 + $0xd0] sm:$0xff]
  %v45 = vld [vmem:[%s0 + $0xd8] sm:$0xff]
  %v46 = vld [vmem:[%s0 + $0xe0] sm:$0xff]
  %v47 = vld [vmem:[%s0 + $0xe8] sm:$0xff]
  %v48 = vld [vmem:[%s0 + $0xf0] sm:$0xff]
  %v49 = vld [vmem:[%s0 + $0xf8] sm:$0xff]
  %v50 = vld [vmem:[%s0 + $0x100] sm:$0xff]
  %v51 = vld [vmem:[%s0 + $0x108] sm:$0xff]
  %v52 = vld [vmem:[%s0 + $0x110] sm:$0xff]
  %v53 = vld [vmem:[%s0 + $0x118] sm:$0xff]
  %v54 = vld [vmem:[%s0 + $0x120] sm:$0xff]
  %v55 = vld [vmem:[%s0 + $0x128] sm:$0xff]
  %v56 = vld [vmem:[%s0 + $0x130] sm:$0xff]
  %v57 = vld [vmem:[%s0 + $0x138] sm:$0xff]
  %v58 = vld [vmem:[%s0 + $0x140] sm:$0xff]
  %v59 = vld [vmem:[%s0 + $0x148] sm:$0xff]
  %v60 = vld [vmem:[%s0 + $0x150] sm:$0xff]
  %v61 = vld [vmem:[%s0 + $0x158] sm:$0xff]
  %v62 = vld [vmem:[%s0 + $0x160] sm:$0xff]
  %v63 = vld [vmem:[%s0 + $0x168] sm:$0xff]
  %v64 = vld [vmem:[%s0 + $0x170] sm:$0xff]
  %v65 = vld [vmem:[%s0 + $0x178] sm:$0xff]
  %v66 = vld [vmem:[%s0 + $0x180] sm:$0xff]
  %v67 = vld [vmem:[%s0 + $0x188] sm:$0xff]
  %v68 = vld [vmem:[%s0 + $0x190] sm:$0xff]
  %v69 = vld [vmem:[%s0 + $0x198] sm:$0xff]
  %v70 = vld [vmem:[%s0 + $0x1a0] sm:$0xff]
  %v71 = vld [vmem:[%s0 + $0x1a8] sm:$0xff]
  %v72 = vld [vmem:[%s0 + $0x1b0] sm:$0xff]
  %v73 = vld [vmem:[%s0 + $0x1b8] sm:$0xff]
  %v74 = vld [vmem:[%s0 + $0x1c0] sm:$0xff]
  %v75 = vld [vmem:[%s0 + $0x1c8] sm:$0xff]
  %v76 = vld [vmem:[%s0 + $0x1d0] sm:$0xff]
  %v77 = vld [vmem:[%s0 + $0x1d8] sm:$0xff]
  %v78 = vld [vmem:[%s0 + $0x1e0] sm:$0xff]
  %v79 = vld [vmem:[%s0 + $0x1e8] sm:$0xff]
  %v80 = vld [vmem:[%s0 + $0x1f0] sm:$0xff]
  %v81 = vld [vmem:[%s0 + $0x1f8] sm:$0xff]
  %v82 = vunpack.c.l.bf16 %v18
  %v83 = vunpack.c.h.bf16 %v18
  %v84 = vunpack.c.l.bf16 %v19
  %v85 = vunpack.c.h.bf16 %v19
  %v86 = vunpack.c.l.bf16 %v20
  %v87 = vunpack.c.h.bf16 %v20
  %v88 = vunpack.c.l.bf16 %v21
  %v89 = vunpack.c.h.bf16 %v21
  %v90 = vunpack.c.l.bf16 %v22
  %v91 = vunpack.c.h.bf16 %v22
  %v92 = vunpack.c.l.bf16 %v23
  %v93 = vunpack.c.h.bf16 %v23
  %v94 = vunpack.c.l.bf16 %v24
  %v95 = vunpack.c.h.bf16 %v24
  %v96 = vunpack.c.l.bf16 %v25
  %v97 = vunpack.c.h.bf16 %v25
  %v98 = vunpack.c.l.bf16 %v26
  %v99 = vunpack.c.h.bf16 %v26
  %v100 = vunpack.c.l.bf16 %v27
  %v101 = vunpack.c.h.bf16 %v27
  %v102 = vunpack.c.l.bf16 %v28
  %v103 = vunpack.c.h.bf16 %v28
  %v104 = vunpack.c.l.bf16 %v29
  %v105 = vunpack.c.h.bf16 %v29
  %v106 = vunpack.c.l.bf16 %v30
  %v107 = vunpack.c.h.bf16 %v30
  %v108 = vunpack.c.l.bf16 %v31
  %v109 = vunpack.c.h.bf16 %v31
  %v110 = vunpack.c.l.bf16 %v32
  %v111 = vunpack.c.h.bf16 %v32
  %v112 = vunpack.c.l.bf16 %v33
  %v113 = vunpack.c.h.bf16 %v33
  %v114 = vunpack.c.l.bf16 %v34
  %v115 = vunpack.c.h.bf16 %v34
  %v116 = vunpack.c.l.bf16 %v35
  %v117 = vunpack.c.h.bf16 %v35
  %v118 = vunpack.c.l.bf16 %v36
  %v119 = vunpack.c.h.bf16 %v36
  %v120 = vunpack.c.l.bf16 %v37
  %v121 = vunpack.c.h.bf16 %v37
  %v122 = vunpack.c.l.bf16 %v38
  %v123 = vunpack.c.h.bf16 %v38
  %v124 = vunpack.c.l.bf16 %v39
  %v125 = vunpack.c.h.bf16 %v39
  %v126 = vunpack.c.l.bf16 %v40
  %v127 = vunpack.c.h.bf16 %v40
  %v128 = vunpack.c.l.bf16 %v41
  %v129 = vunpack.c.h.bf16 %v41
  %v130 = vunpack.c.l.bf16 %v42
  %v131 = vunpack.c.h.bf16 %v42
  %v132 = vunpack.c.l.bf16 %v43
  %v133 = vunpack.c.h.bf16 %v43
  %v134 = vunpack.c.l.bf16 %v44
  %v135 = vunpack.c.h.bf16 %v44
  %v136 = vunpack.c.l.bf16 %v45
  %v137 = vunpack.c.h.bf16 %v45
  %v138 = vunpack.c.l.bf16 %v46
  %v139 = vunpack.c.h.bf16 %v46
  %v140 = vunpack.c.l.bf16 %v47
  %v141 = vunpack.c.h.bf16 %v47
  %v142 = vunpack.c.l.bf16 %v48
  %v143 = vunpack.c.h.bf16 %v48
  %v144 = vunpack.c.l.bf16 %v49
  %v145 = vunpack.c.h.bf16 %v49
  %v146 = vunpack.c.l.bf16 %v50
  %v147 = vunpack.c.h.bf16 %v50
  %v148 = vunpack.c.l.bf16 %v51
  %v149 = vunpack.c.h.bf16 %v51
  %v150 = vunpack.c.l.bf16 %v52
  %v151 = vunpack.c.h.bf16 %v52
  %v152 = vunpack.c.l.bf16 %v53
  %v153 = vunpack.c.h.bf16 %v53
  %v154 = vunpack.c.l.bf16 %v54
  %v155 = vunpack.c.h.bf16 %v54
  %v156 = vunpack.c.l.bf16 %v55
  %v157 = vunpack.c.h.bf16 %v55
  %v158 = vunpack.c.l.bf16 %v56
  %v159 = vunpack.c.h.bf16 %v56
  %v160 = vunpack.c.l.bf16 %v57
  %v161 = vunpack.c.h.bf16 %v57
  %v162 = vunpack.c.l.bf16 %v58
  %v163 = vunpack.c.h.bf16 %v58
  %v164 = vunpack.c.l.bf16 %v59
  %v165 = vunpack.c.h.bf16 %v59
  %v166 = vunpack.c.l.bf16 %v60
  %v167 = vunpack.c.h.bf16 %v60
  %v168 = vunpack.c.l.bf16 %v61
  %v169 = vunpack.c.h.bf16 %v61
  %v170 = vunpack.c.l.bf16 %v62
  %v171 = vunpack.c.h.bf16 %v62
  %v172 = vunpack.c.l.bf16 %v63
  %v173 = vunpack.c.h.bf16 %v63
  %v174 = vunpack.c.l.bf16 %v64
  %v175 = vunpack.c.h.bf16 %v64
  %v176 = vunpack.c.l.bf16 %v65
  %v177 = vunpack.c.h.bf16 %v65
  %v178 = vunpack.c.l.bf16 %v66
  %v179 = vunpack.c.h.bf16 %v66
  %v180 = vunpack.c.l.bf16 %v67
  %v181 = vunpack.c.h.bf16 %v67
  %v182 = vunpack.c.l.bf16 %v68
  %v183 = vunpack.c.h.bf16 %v68
  %v184 = vunpack.c.l.bf16 %v69
  %v185 = vunpack.c.h.bf16 %v69
  %v186 = vunpack.c.l.bf16 %v70
  %v187 = vunpack.c.h.bf16 %v70
  %v188 = vunpack.c.l.bf16 %v71
  %v189 = vunpack.c.h.bf16 %v71
  %v190 = vunpack.c.l.bf16 %v72
  %v191 = vunpack.c.h.bf16 %v72
  %v192 = vunpack.c.l.bf16 %v73
  %v193 = vunpack.c.h.bf16 %v73
  %v194 = vunpack.c.l.bf16 %v74
  %v195 = vunpack.c.h.bf16 %v74
  %v196 = vunpack.c.l.bf16 %v75
  %v197 = vunpack.c.h.bf16 %v75
  %v198 = vunpack.c.l.bf16 %v76
  %v199 = vunpack.c.h.bf16 %v76
  %v200 = vunpack.c.l.bf16 %v77
  %v201 = vunpack.c.h.bf16 %v77
  %v202 = vunpack.c.l.bf16 %v78
  %v203 = vunpack.c.h.bf16 %v78
  %v204 = vunpack.c.l.bf16 %v79
  %v205 = vunpack.c.h.bf16 %v79
  %v206 = vunpack.c.l.bf16 %v80
  %v207 = vunpack.c.h.bf16 %v80
  %v208 = vunpack.c.l.bf16 %v81
  %v209 = vunpack.c.h.bf16 %v81
  %v210 = vld [vmem:[%s2] sm:$0xff]
  %v212 = vlaneseq
  %v213 = vshrl.u32 %v212, 7
  %v214 = vsub.s32 0, %v213
  %v215 = vrot.slane %v210, %v214
  %v216 = vlaneseq
  %v217 = vshrl.u32 %v216, 7
  %v218 = vsub.s32 1, %v217
  %v219 = vrot.slane %v210, %v218
  %v220 = vlaneseq
  %v221 = vshrl.u32 %v220, 7
  %v222 = vsub.s32 2, %v221
  %v223 = vrot.slane %v210, %v222
  %v224 = vlaneseq
  %v225 = vshrl.u32 %v224, 7
  %v226 = vsub.s32 3, %v225
  %v227 = vrot.slane %v210, %v226
  %v228 = vlaneseq
  %v229 = vshrl.u32 %v228, 7
  %v230 = vsub.s32 4, %v229
  %v231 = vrot.slane %v210, %v230
  %v232 = vlaneseq
  %v233 = vshrl.u32 %v232, 7
  %v234 = vsub.s32 5, %v233
  %v235 = vrot.slane %v210, %v234
  %v236 = vlaneseq
  %v237 = vshrl.u32 %v236, 7
  %v238 = vsub.s32 6, %v237
  %v239 = vrot.slane %v210, %v238
  %v240 = vlaneseq
  %v241 = vshrl.u32 %v240, 7
  %v242 = vsub.s32 7, %v241
  %v243 = vrot.slane %v210, %v242
  %v252 = vmul.f32 %v82, %v215
  %v253 = vmul.f32 %v83, %v219
  %v254 = vmul.f32 %v84, %v223
  %v255 = vmul.f32 %v85, %v227
  %v256 = vmul.f32 %v86, %v231
  %v257 = vmul.f32 %v87, %v235
  %v258 = vmul.f32 %v88, %v239
  %v259 = vmul.f32 %v89, %v243
  %v260 = vmul.f32 %v90, %v215
  %v261 = vmul.f32 %v91, %v219
  %v262 = vmul.f32 %v92, %v223
  %v263 = vmul.f32 %v93, %v227
  %v264 = vmul.f32 %v94, %v231
  %v265 = vmul.f32 %v95, %v235
  %v266 = vmul.f32 %v96, %v239
  %v267 = vmul.f32 %v97, %v243
  %v268 = vmul.f32 %v98, %v215
  %v269 = vmul.f32 %v99, %v219
  %v270 = vmul.f32 %v100, %v223
  %v271 = vmul.f32 %v101, %v227
  %v272 = vmul.f32 %v102, %v231
  %v273 = vmul.f32 %v103, %v235
  %v274 = vmul.f32 %v104, %v239
  %v275 = vmul.f32 %v105, %v243
  %v276 = vmul.f32 %v106, %v215
  %v277 = vmul.f32 %v107, %v219
  %v278 = vmul.f32 %v108, %v223
  %v279 = vmul.f32 %v109, %v227
  %v280 = vmul.f32 %v110, %v231
  %v281 = vmul.f32 %v111, %v235
  %v282 = vmul.f32 %v112, %v239
  %v283 = vmul.f32 %v113, %v243
  %v284 = vmul.f32 %v114, %v215
  %v285 = vmul.f32 %v115, %v219
  %v286 = vmul.f32 %v116, %v223
  %v287 = vmul.f32 %v117, %v227
  %v288 = vmul.f32 %v118, %v231
  %v289 = vmul.f32 %v119, %v235
  %v290 = vmul.f32 %v120, %v239
  %v291 = vmul.f32 %v121, %v243
  %v292 = vmul.f32 %v122, %v215
  %v293 = vmul.f32 %v123, %v219
  %v294 = vmul.f32 %v124, %v223
  %v295 = vmul.f32 %v125, %v227
  %v296 = vmul.f32 %v126, %v231
  %v297 = vmul.f32 %v127, %v235
  %v298 = vmul.f32 %v128, %v239
  %v299 = vmul.f32 %v129, %v243
  %v300 = vmul.f32 %v130, %v215
  %v301 = vmul.f32 %v131, %v219
  %v302 = vmul.f32 %v132, %v223
  %v303 = vmul.f32 %v133, %v227
  %v304 = vmul.f32 %v134, %v231
  %v305 = vmul.f32 %v135, %v235
  %v306 = vmul.f32 %v136, %v239
  %v307 = vmul.f32 %v137, %v243
  %v308 = vmul.f32 %v138, %v215
  %v309 = vmul.f32 %v139, %v219
  %v310 = vmul.f32 %v140, %v223
  %v311 = vmul.f32 %v141, %v227
  %v312 = vmul.f32 %v142, %v231
  %v313 = vmul.f32 %v143, %v235
  %v314 = vmul.f32 %v144, %v239
  %v315 = vmul.f32 %v145, %v243
  %v316 = vmul.f32 %v146, %v215
  %v317 = vmul.f32 %v147, %v219
  %v318 = vmul.f32 %v148, %v223
  %v319 = vmul.f32 %v149, %v227
  %v320 = vmul.f32 %v150, %v231
  %v321 = vmul.f32 %v151, %v235
  %v322 = vmul.f32 %v152, %v239
  %v323 = vmul.f32 %v153, %v243
  %v324 = vmul.f32 %v154, %v215
  %v325 = vmul.f32 %v155, %v219
  %v326 = vmul.f32 %v156, %v223
  %v327 = vmul.f32 %v157, %v227
  %v328 = vmul.f32 %v158, %v231
  %v329 = vmul.f32 %v159, %v235
  %v330 = vmul.f32 %v160, %v239
  %v331 = vmul.f32 %v161, %v243
  %v332 = vmul.f32 %v162, %v215
  %v333 = vmul.f32 %v163, %v219
  %v334 = vmul.f32 %v164, %v223
  %v335 = vmul.f32 %v165, %v227
  %v336 = vmul.f32 %v166, %v231
  %v337 = vmul.f32 %v167, %v235
  %v338 = vmul.f32 %v168, %v239
  %v339 = vmul.f32 %v169, %v243
  %v340 = vmul.f32 %v170, %v215
  %v341 = vmul.f32 %v171, %v219
  %v342 = vmul.f32 %v172, %v223
  %v343 = vmul.f32 %v173, %v227
  %v344 = vmul.f32 %v174, %v231
  %v345 = vmul.f32 %v175, %v235
  %v346 = vmul.f32 %v176, %v239
  %v347 = vmul.f32 %v177, %v243
  %v348 = vmul.f32 %v178, %v215
  %v349 = vmul.f32 %v179, %v219
  %v350 = vmul.f32 %v180, %v223
  %v351 = vmul.f32 %v181, %v227
  %v352 = vmul.f32 %v182, %v231
  %v353 = vmul.f32 %v183, %v235
  %v354 = vmul.f32 %v184, %v239
  %v355 = vmul.f32 %v185, %v243
  %v356 = vmul.f32 %v186, %v215
  %v357 = vmul.f32 %v187, %v219
  %v358 = vmul.f32 %v188, %v223
  %v359 = vmul.f32 %v189, %v227
  %v360 = vmul.f32 %v190, %v231
  %v361 = vmul.f32 %v191, %v235
  %v362 = vmul.f32 %v192, %v239
  %v363 = vmul.f32 %v193, %v243
  %v364 = vmul.f32 %v194, %v215
  %v365 = vmul.f32 %v195, %v219
  %v366 = vmul.f32 %v196, %v223
  %v367 = vmul.f32 %v197, %v227
  %v368 = vmul.f32 %v198, %v231
  %v369 = vmul.f32 %v199, %v235
  %v370 = vmul.f32 %v200, %v239
  %v371 = vmul.f32 %v201, %v243
  %v372 = vmul.f32 %v202, %v215
  %v373 = vmul.f32 %v203, %v219
  %v374 = vmul.f32 %v204, %v223
  %v375 = vmul.f32 %v205, %v227
  %v376 = vmul.f32 %v206, %v231
  %v377 = vmul.f32 %v207, %v235
  %v378 = vmul.f32 %v208, %v239
  %v379 = vmul.f32 %v209, %v243
  %v380 = vld [vmem:[%s3] sm:$0xff]
  %v382 = vlaneseq
  %v383 = vshrl.u32 %v382, 7
  %v384 = vsub.s32 0, %v383
  %v385 = vrot.slane %v380, %v384
  %v386 = vlaneseq
  %v387 = vshrl.u32 %v386, 7
  %v388 = vsub.s32 1, %v387
  %v389 = vrot.slane %v380, %v388
  %v390 = vlaneseq
  %v391 = vshrl.u32 %v390, 7
  %v392 = vsub.s32 2, %v391
  %v393 = vrot.slane %v380, %v392
  %v394 = vlaneseq
  %v395 = vshrl.u32 %v394, 7
  %v396 = vsub.s32 3, %v395
  %v397 = vrot.slane %v380, %v396
  %v398 = vlaneseq
  %v399 = vshrl.u32 %v398, 7
  %v400 = vsub.s32 4, %v399
  %v401 = vrot.slane %v380, %v400
  %v402 = vlaneseq
  %v403 = vshrl.u32 %v402, 7
  %v404 = vsub.s32 5, %v403
  %v405 = vrot.slane %v380, %v404
  %v406 = vlaneseq
  %v407 = vshrl.u32 %v406, 7
  %v408 = vsub.s32 6, %v407
  %v409 = vrot.slane %v380, %v408
  %v410 = vlaneseq
  %v411 = vshrl.u32 %v410, 7
  %v412 = vsub.s32 7, %v411
  %v413 = vrot.slane %v380, %v412
  %v422 = vadd.f32 %v252, %v385
  %v423 = vadd.f32 %v253, %v389
  %v424 = vadd.f32 %v254, %v393
  %v425 = vadd.f32 %v255, %v397
  %v426 = vadd.f32 %v256, %v401
  %v427 = vadd.f32 %v257, %v405
  %v428 = vadd.f32 %v258, %v409
  %v429 = vadd.f32 %v259, %v413
  %v430 = vadd.f32 %v260, %v385
  %v431 = vadd.f32 %v261, %v389
  %v432 = vadd.f32 %v262, %v393
  %v433 = vadd.f32 %v263, %v397
  %v434 = vadd.f32 %v264, %v401
  %v435 = vadd.f32 %v265, %v405
  %v436 = vadd.f32 %v266, %v409
  %v437 = vadd.f32 %v267, %v413
  %v438 = vadd.f32 %v268, %v385
  %v439 = vadd.f32 %v269, %v389
  %v440 = vadd.f32 %v270, %v393
  %v441 = vadd.f32 %v271, %v397
  %v442 = vadd.f32 %v272, %v401
  %v443 = vadd.f32 %v273, %v405
  %v444 = vadd.f32 %v274, %v409
  %v445 = vadd.f32 %v275, %v413
  %v446 = vadd.f32 %v276, %v385
  %v447 = vadd.f32 %v277, %v389
  %v448 = vadd.f32 %v278, %v393
  %v449 = vadd.f32 %v279, %v397
  %v450 = vadd.f32 %v280, %v401
  %v451 = vadd.f32 %v281, %v405
  %v452 = vadd.f32 %v282, %v409
  %v453 = vadd.f32 %v283, %v413
  %v454 = vadd.f32 %v284, %v385
  %v455 = vadd.f32 %v285, %v389
  %v456 = vadd.f32 %v286, %v393
  %v457 = vadd.f32 %v287, %v397
  %v458 = vadd.f32 %v288, %v401
  %v459 = vadd.f32 %v289, %v405
  %v460 = vadd.f32 %v290, %v409
  %v461 = vadd.f32 %v291, %v413
  %v462 = vadd.f32 %v292, %v385
  %v463 = vadd.f32 %v293, %v389
  %v464 = vadd.f32 %v294, %v393
  %v465 = vadd.f32 %v295, %v397
  %v466 = vadd.f32 %v296, %v401
  %v467 = vadd.f32 %v297, %v405
  %v468 = vadd.f32 %v298, %v409
  %v469 = vadd.f32 %v299, %v413
  %v470 = vadd.f32 %v300, %v385
  %v471 = vadd.f32 %v301, %v389
  %v472 = vadd.f32 %v302, %v393
  %v473 = vadd.f32 %v303, %v397
  %v474 = vadd.f32 %v304, %v401
  %v475 = vadd.f32 %v305, %v405
  %v476 = vadd.f32 %v306, %v409
  %v477 = vadd.f32 %v307, %v413
  %v478 = vadd.f32 %v308, %v385
  %v479 = vadd.f32 %v309, %v389
  %v480 = vadd.f32 %v310, %v393
  %v481 = vadd.f32 %v311, %v397
  %v482 = vadd.f32 %v312, %v401
  %v483 = vadd.f32 %v313, %v405
  %v484 = vadd.f32 %v314, %v409
  %v485 = vadd.f32 %v315, %v413
  %v486 = vadd.f32 %v316, %v385
  %v487 = vadd.f32 %v317, %v389
  %v488 = vadd.f32 %v318, %v393
  %v489 = vadd.f32 %v319, %v397
  %v490 = vadd.f32 %v320, %v401
  %v491 = vadd.f32 %v321, %v405
  %v492 = vadd.f32 %v322, %v409
  %v493 = vadd.f32 %v323, %v413
  %v494 = vadd.f32 %v324, %v385
  %v495 = vadd.f32 %v325, %v389
  %v496 = vadd.f32 %v326, %v393
  %v497 = vadd.f32 %v327, %v397
  %v498 = vadd.f32 %v328, %v401
  %v499 = vadd.f32 %v329, %v405
  %v500 = vadd.f32 %v330, %v409
  %v501 = vadd.f32 %v331, %v413
  %v502 = vadd.f32 %v332, %v385
  %v503 = vadd.f32 %v333, %v389
  %v504 = vadd.f32 %v334, %v393
  %v505 = vadd.f32 %v335, %v397
  %v506 = vadd.f32 %v336, %v401
  %v507 = vadd.f32 %v337, %v405
  %v508 = vadd.f32 %v338, %v409
  %v509 = vadd.f32 %v339, %v413
  %v510 = vadd.f32 %v340, %v385
  %v511 = vadd.f32 %v341, %v389
  %v512 = vadd.f32 %v342, %v393
  %v513 = vadd.f32 %v343, %v397
  %v514 = vadd.f32 %v344, %v401
  %v515 = vadd.f32 %v345, %v405
  %v516 = vadd.f32 %v346, %v409
  %v517 = vadd.f32 %v347, %v413
  %v518 = vadd.f32 %v348, %v385
  %v519 = vadd.f32 %v349, %v389
  %v520 = vadd.f32 %v350, %v393
  %v521 = vadd.f32 %v351, %v397
  %v522 = vadd.f32 %v352, %v401
  %v523 = vadd.f32 %v353, %v405
  %v524 = vadd.f32 %v354, %v409
  %v525 = vadd.f32 %v355, %v413
  %v526 = vadd.f32 %v356, %v385
  %v527 = vadd.f32 %v357, %v389
  %v528 = vadd.f32 %v358, %v393
  %v529 = vadd.f32 %v359, %v397
  %v530 = vadd.f32 %v360, %v401
  %v531 = vadd.f32 %v361, %v405
  %v532 = vadd.f32 %v362, %v409
  %v533 = vadd.f32 %v363, %v413
  %v534 = vadd.f32 %v364, %v385
  %v535 = vadd.f32 %v365, %v389
  %v536 = vadd.f32 %v366, %v393
  %v537 = vadd.f32 %v367, %v397
  %v538 = vadd.f32 %v368, %v401
  %v539 = vadd.f32 %v369, %v405
  %v540 = vadd.f32 %v370, %v409
  %v541 = vadd.f32 %v371, %v413
  %v542 = vadd.f32 %v372, %v385
  %v543 = vadd.f32 %v373, %v389
  %v544 = vadd.f32 %v374, %v393
  %v545 = vadd.f32 %v375, %v397
  %v546 = vadd.f32 %v376, %v401
  %v547 = vadd.f32 %v377, %v405
  %v548 = vadd.f32 %v378, %v409
  %v549 = vadd.f32 %v379, %v413
  %v550 = vmax.f32 %v422, 0.0
  %v551 = vmax.f32 %v423, 0.0
  %v552 = vmax.f32 %v424, 0.0
  %v553 = vmax.f32 %v425, 0.0
  %v554 = vmax.f32 %v426, 0.0
  %v555 = vmax.f32 %v427, 0.0
  %v556 = vmax.f32 %v428, 0.0
  %v557 = vmax.f32 %v429, 0.0
  %v558 = vmax.f32 %v430, 0.0
  %v559 = vmax.f32 %v431, 0.0
  %v560 = vmax.f32 %v432, 0.0
  %v561 = vmax.f32 %v433, 0.0
  %v562 = vmax.f32 %v434, 0.0
  %v563 = vmax.f32 %v435, 0.0
  %v564 = vmax.f32 %v436, 0.0
  %v565 = vmax.f32 %v437, 0.0
  %v566 = vmax.f32 %v438, 0.0
  %v567 = vmax.f32 %v439, 0.0
  %v568 = vmax.f32 %v440, 0.0
  %v569 = vmax.f32 %v441, 0.0
  %v570 = vmax.f32 %v442, 0.0
  %v571 = vmax.f32 %v443, 0.0
  %v572 = vmax.f32 %v444, 0.0
  %v573 = vmax.f32 %v445, 0.0
  %v574 = vmax.f32 %v446, 0.0
  %v575 = vmax.f32 %v447, 0.0
  %v576 = vmax.f32 %v448, 0.0
  %v577 = vmax.f32 %v449, 0.0
  %v578 = vmax.f32 %v450, 0.0
  %v579 = vmax.f32 %v451, 0.0
  %v580 = vmax.f32 %v452, 0.0
  %v581 = vmax.f32 %v453, 0.0
  %v582 = vmax.f32 %v454, 0.0
  %v583 = vmax.f32 %v455, 0.0
  %v584 = vmax.f32 %v456, 0.0
  %v585 = vmax.f32 %v457, 0.0
  %v586 = vmax.f32 %v458, 0.0
  %v587 = vmax.f32 %v459, 0.0
  %v588 = vmax.f32 %v460, 0.0
  %v589 = vmax.f32 %v461, 0.0
  %v590 = vmax.f32 %v462, 0.0
  %v591 = vmax.f32 %v463, 0.0
  %v592 = vmax.f32 %v464, 0.0
  %v593 = vmax.f32 %v465, 0.0
  %v594 = vmax.f32 %v466, 0.0
  %v595 = vmax.f32 %v467, 0.0
  %v596 = vmax.f32 %v468, 0.0
  %v597 = vmax.f32 %v469, 0.0
  %v598 = vmax.f32 %v470, 0.0
  %v599 = vmax.f32 %v471, 0.0
  %v600 = vmax.f32 %v472, 0.0
  %v601 = vmax.f32 %v473, 0.0
  %v602 = vmax.f32 %v474, 0.0
  %v603 = vmax.f32 %v475, 0.0
  %v604 = vmax.f32 %v476, 0.0
  %v605 = vmax.f32 %v477, 0.0
  %v606 = vmax.f32 %v478, 0.0
  %v607 = vmax.f32 %v479, 0.0
  %v608 = vmax.f32 %v480, 0.0
  %v609 = vmax.f32 %v481, 0.0
  %v610 = vmax.f32 %v482, 0.0
  %v611 = vmax.f32 %v483, 0.0
  %v612 = vmax.f32 %v484, 0.0
  %v613 = vmax.f32 %v485, 0.0
  %v614 = vmax.f32 %v486, 0.0
  %v615 = vmax.f32 %v487, 0.0
  %v616 = vmax.f32 %v488, 0.0
  %v617 = vmax.f32 %v489, 0.0
  %v618 = vmax.f32 %v490, 0.0
  %v619 = vmax.f32 %v491, 0.0
  %v620 = vmax.f32 %v492, 0.0
  %v621 = vmax.f32 %v493, 0.0
  %v622 = vmax.f32 %v494, 0.0
  %v623 = vmax.f32 %v495, 0.0
  %v624 = vmax.f32 %v496, 0.0
  %v625 = vmax.f32 %v497, 0.0
  %v626 = vmax.f32 %v498, 0.0
  %v627 = vmax.f32 %v499, 0.0
  %v628 = vmax.f32 %v500, 0.0
  %v629 = vmax.f32 %v501, 0.0
  %v630 = vmax.f32 %v502, 0.0
  %v631 = vmax.f32 %v503, 0.0
  %v632 = vmax.f32 %v504, 0.0
  %v633 = vmax.f32 %v505, 0.0
  %v634 = vmax.f32 %v506, 0.0
  %v635 = vmax.f32 %v507, 0.0
  %v636 = vmax.f32 %v508, 0.0
  %v637 = vmax.f32 %v509, 0.0
  %v638 = vmax.f32 %v510, 0.0
  %v639 = vmax.f32 %v511, 0.0
  %v640 = vmax.f32 %v512, 0.0
  %v641 = vmax.f32 %v513, 0.0
  %v642 = vmax.f32 %v514, 0.0
  %v643 = vmax.f32 %v515, 0.0
  %v644 = vmax.f32 %v516, 0.0
  %v645 = vmax.f32 %v517, 0.0
  %v646 = vmax.f32 %v518, 0.0
  %v647 = vmax.f32 %v519, 0.0
  %v648 = vmax.f32 %v520, 0.0
  %v649 = vmax.f32 %v521, 0.0
  %v650 = vmax.f32 %v522, 0.0
  %v651 = vmax.f32 %v523, 0.0
  %v652 = vmax.f32 %v524, 0.0
  %v653 = vmax.f32 %v525, 0.0
  %v654 = vmax.f32 %v526, 0.0
  %v655 = vmax.f32 %v527, 0.0
  %v656 = vmax.f32 %v528, 0.0
  %v657 = vmax.f32 %v529, 0.0
  %v658 = vmax.f32 %v530, 0.0
  %v659 = vmax.f32 %v531, 0.0
  %v660 = vmax.f32 %v532, 0.0
  %v661 = vmax.f32 %v533, 0.0
  %v662 = vmax.f32 %v534, 0.0
  %v663 = vmax.f32 %v535, 0.0
  %v664 = vmax.f32 %v536, 0.0
  %v665 = vmax.f32 %v537, 0.0
  %v666 = vmax.f32 %v538, 0.0
  %v667 = vmax.f32 %v539, 0.0
  %v668 = vmax.f32 %v540, 0.0
  %v669 = vmax.f32 %v541, 0.0
  %v670 = vmax.f32 %v542, 0.0
  %v671 = vmax.f32 %v543, 0.0
  %v672 = vmax.f32 %v544, 0.0
  %v673 = vmax.f32 %v545, 0.0
  %v674 = vmax.f32 %v546, 0.0
  %v675 = vmax.f32 %v547, 0.0
  %v676 = vmax.f32 %v548, 0.0
  %v677 = vmax.f32 %v549, 0.0
  %v678 = vpack.c.bf16 %v558, %v550
  %v679 = vpack.c.bf16 %v559, %v551
  %v680 = vpack.c.bf16 %v560, %v552
  %v681 = vpack.c.bf16 %v561, %v553
  %v682 = vpack.c.bf16 %v562, %v554
  %v683 = vpack.c.bf16 %v563, %v555
  %v684 = vpack.c.bf16 %v564, %v556
  %v685 = vpack.c.bf16 %v565, %v557
  %v686 = vpack.c.bf16 %v574, %v566
  %v687 = vpack.c.bf16 %v575, %v567
  %v688 = vpack.c.bf16 %v576, %v568
  %v689 = vpack.c.bf16 %v577, %v569
  %v690 = vpack.c.bf16 %v578, %v570
  %v691 = vpack.c.bf16 %v579, %v571
  %v692 = vpack.c.bf16 %v580, %v572
  %v693 = vpack.c.bf16 %v581, %v573
  %v694 = vpack.c.bf16 %v590, %v582
  %v695 = vpack.c.bf16 %v591, %v583
  %v696 = vpack.c.bf16 %v592, %v584
  %v697 = vpack.c.bf16 %v593, %v585
  %v698 = vpack.c.bf16 %v594, %v586
  %v699 = vpack.c.bf16 %v595, %v587
  %v700 = vpack.c.bf16 %v596, %v588
  %v701 = vpack.c.bf16 %v597, %v589
  %v702 = vpack.c.bf16 %v606, %v598
  %v703 = vpack.c.bf16 %v607, %v599
  %v704 = vpack.c.bf16 %v608, %v600
  %v705 = vpack.c.bf16 %v609, %v601
  %v706 = vpack.c.bf16 %v610, %v602
  %v707 = vpack.c.bf16 %v611, %v603
  %v708 = vpack.c.bf16 %v612, %v604
  %v709 = vpack.c.bf16 %v613, %v605
  %v710 = vpack.c.bf16 %v622, %v614
  %v711 = vpack.c.bf16 %v623, %v615
  %v712 = vpack.c.bf16 %v624, %v616
  %v713 = vpack.c.bf16 %v625, %v617
  %v714 = vpack.c.bf16 %v626, %v618
  %v715 = vpack.c.bf16 %v627, %v619
  %v716 = vpack.c.bf16 %v628, %v620
  %v717 = vpack.c.bf16 %v629, %v621
  %v718 = vpack.c.bf16 %v638, %v630
  %v719 = vpack.c.bf16 %v639, %v631
  %v720 = vpack.c.bf16 %v640, %v632
  %v721 = vpack.c.bf16 %v641, %v633
  %v722 = vpack.c.bf16 %v642, %v634
  %v723 = vpack.c.bf16 %v643, %v635
  %v724 = vpack.c.bf16 %v644, %v636
  %v725 = vpack.c.bf16 %v645, %v637
  %v726 = vpack.c.bf16 %v654, %v646
  %v727 = vpack.c.bf16 %v655, %v647
  %v728 = vpack.c.bf16 %v656, %v648
  %v729 = vpack.c.bf16 %v657, %v649
  %v730 = vpack.c.bf16 %v658, %v650
  %v731 = vpack.c.bf16 %v659, %v651
  %v732 = vpack.c.bf16 %v660, %v652
  %v733 = vpack.c.bf16 %v661, %v653
  %v734 = vpack.c.bf16 %v670, %v662
  %v735 = vpack.c.bf16 %v671, %v663
  %v736 = vpack.c.bf16 %v672, %v664
  %v737 = vpack.c.bf16 %v673, %v665
  %v738 = vpack.c.bf16 %v674, %v666
  %v739 = vpack.c.bf16 %v675, %v667
  %v740 = vpack.c.bf16 %v676, %v668
  %v741 = vpack.c.bf16 %v677, %v669
  %v742 = vld [vmem:[%s1] sm:$0xf]
  %v743 = vld [vmem:[%s1 + $0x4] sm:$0xf]
  %v744 = vld [vmem:[%s1 + $0x8] sm:$0xf]
  %v745 = vld [vmem:[%s1 + $0xc] sm:$0xf]
  %v746 = vld [vmem:[%s1 + $0x10] sm:$0xf]
  %v747 = vld [vmem:[%s1 + $0x14] sm:$0xf]
  %v748 = vld [vmem:[%s1 + $0x18] sm:$0xf]
  %v749 = vld [vmem:[%s1 + $0x1c] sm:$0xf]
  %v750 = vld [vmem:[%s1 + $0x20] sm:$0xf]
  %v751 = vld [vmem:[%s1 + $0x24] sm:$0xf]
  %v752 = vld [vmem:[%s1 + $0x28] sm:$0xf]
  %v753 = vld [vmem:[%s1 + $0x2c] sm:$0xf]
  %v754 = vld [vmem:[%s1 + $0x30] sm:$0xf]
  %v755 = vld [vmem:[%s1 + $0x34] sm:$0xf]
  %v756 = vld [vmem:[%s1 + $0x38] sm:$0xf]
  %v757 = vld [vmem:[%s1 + $0x3c] sm:$0xf]
  %v758 = vld [vmem:[%s1 + $0x40] sm:$0xf]
  %v759 = vld [vmem:[%s1 + $0x44] sm:$0xf]
  %v760 = vld [vmem:[%s1 + $0x48] sm:$0xf]
  %v761 = vld [vmem:[%s1 + $0x4c] sm:$0xf]
  %v762 = vld [vmem:[%s1 + $0x50] sm:$0xf]
  %v763 = vld [vmem:[%s1 + $0x54] sm:$0xf]
  %v764 = vld [vmem:[%s1 + $0x58] sm:$0xf]
  %v765 = vld [vmem:[%s1 + $0x5c] sm:$0xf]
  %v766 = vld [vmem:[%s1 + $0x60] sm:$0xf]
  %v767 = vld [vmem:[%s1 + $0x64] sm:$0xf]
  %v768 = vld [vmem:[%s1 + $0x68] sm:$0xf]
  %v769 = vld [vmem:[%s1 + $0x6c] sm:$0xf]
  %v770 = vld [vmem:[%s1 + $0x70] sm:$0xf]
  %v771 = vld [vmem:[%s1 + $0x74] sm:$0xf]
  %v772 = vld [vmem:[%s1 + $0x78] sm:$0xf]
  %v773 = vld [vmem:[%s1 + $0x7c] sm:$0xf]
  %v774 = vld [vmem:[%s1 + $0x80] sm:$0xf]
  %v775 = vld [vmem:[%s1 + $0x84] sm:$0xf]
  %v776 = vld [vmem:[%s1 + $0x88] sm:$0xf]
  %v777 = vld [vmem:[%s1 + $0x8c] sm:$0xf]
  %v778 = vld [vmem:[%s1 + $0x90] sm:$0xf]
  %v779 = vld [vmem:[%s1 + $0x94] sm:$0xf]
  %v780 = vld [vmem:[%s1 + $0x98] sm:$0xf]
  %v781 = vld [vmem:[%s1 + $0x9c] sm:$0xf]
  %v782 = vld [vmem:[%s1 + $0xa0] sm:$0xf]
  %v783 = vld [vmem:[%s1 + $0xa4] sm:$0xf]
  %v784 = vld [vmem:[%s1 + $0xa8] sm:$0xf]
  %v785 = vld [vmem:[%s1 + $0xac] sm:$0xf]
  %v786 = vld [vmem:[%s1 + $0xb0] sm:$0xf]
  %v787 = vld [vmem:[%s1 + $0xb4] sm:$0xf]
  %v788 = vld [vmem:[%s1 + $0xb8] sm:$0xf]
  %v789 = vld [vmem:[%s1 + $0xbc] sm:$0xf]
  %v790 = vld [vmem:[%s1 + $0xc0] sm:$0xf]
  %v791 = vld [vmem:[%s1 + $0xc4] sm:$0xf]
  %v792 = vld [vmem:[%s1 + $0xc8] sm:$0xf]
  %v793 = vld [vmem:[%s1 + $0xcc] sm:$0xf]
  %v794 = vld [vmem:[%s1 + $0xd0] sm:$0xf]
  %v795 = vld [vmem:[%s1 + $0xd4] sm:$0xf]
  %v796 = vld [vmem:[%s1 + $0xd8] sm:$0xf]
  %v797 = vld [vmem:[%s1 + $0xdc] sm:$0xf]
  %v798 = vld [vmem:[%s1 + $0xe0] sm:$0xf]
  %v799 = vld [vmem:[%s1 + $0xe4] sm:$0xf]
  %v800 = vld [vmem:[%s1 + $0xe8] sm:$0xf]
  %v801 = vld [vmem:[%s1 + $0xec] sm:$0xf]
  %v802 = vld [vmem:[%s1 + $0xf0] sm:$0xf]
  %v803 = vld [vmem:[%s1 + $0xf4] sm:$0xf]
  %v804 = vld [vmem:[%s1 + $0xf8] sm:$0xf]
  %v805 = vld [vmem:[%s1 + $0xfc] sm:$0xf]
  %v806 = vld [vmem:[%s1 + $0x100] sm:$0xf]
  %v807 = vld [vmem:[%s1 + $0x104] sm:$0xf]
  %v808 = vld [vmem:[%s1 + $0x108] sm:$0xf]
  %v809 = vld [vmem:[%s1 + $0x10c] sm:$0xf]
  %v810 = vld [vmem:[%s1 + $0x110] sm:$0xf]
  %v811 = vld [vmem:[%s1 + $0x114] sm:$0xf]
  %v812 = vld [vmem:[%s1 + $0x118] sm:$0xf]
  %v813 = vld [vmem:[%s1 + $0x11c] sm:$0xf]
  %v814 = vld [vmem:[%s1 + $0x120] sm:$0xf]
  %v815 = vld [vmem:[%s1 + $0x124] sm:$0xf]
  %v816 = vld [vmem:[%s1 + $0x128] sm:$0xf]
  %v817 = vld [vmem:[%s1 + $0x12c] sm:$0xf]
  %v818 = vld [vmem:[%s1 + $0x130] sm:$0xf]
  %v819 = vld [vmem:[%s1 + $0x134] sm:$0xf]
  %v820 = vld [vmem:[%s1 + $0x138] sm:$0xf]
  %v821 = vld [vmem:[%s1 + $0x13c] sm:$0xf]
  %v822 = vld [vmem:[%s1 + $0x140] sm:$0xf]
  %v823 = vld [vmem:[%s1 + $0x144] sm:$0xf]
  %v824 = vld [vmem:[%s1 + $0x148] sm:$0xf]
  %v825 = vld [vmem:[%s1 + $0x14c] sm:$0xf]
  %v826 = vld [vmem:[%s1 + $0x150] sm:$0xf]
  %v827 = vld [vmem:[%s1 + $0x154] sm:$0xf]
  %v828 = vld [vmem:[%s1 + $0x158] sm:$0xf]
  %v829 = vld [vmem:[%s1 + $0x15c] sm:$0xf]
  %v830 = vld [vmem:[%s1 + $0x160] sm:$0xf]
  %v831 = vld [vmem:[%s1 + $0x164] sm:$0xf]
  %v832 = vld [vmem:[%s1 + $0x168] sm:$0xf]
  %v833 = vld [vmem:[%s1 + $0x16c] sm:$0xf]
  %v834 = vld [vmem:[%s1 + $0x170] sm:$0xf]
  %v835 = vld [vmem:[%s1 + $0x174] sm:$0xf]
  %v836 = vld [vmem:[%s1 + $0x178] sm:$0xf]
  %v837 = vld [vmem:[%s1 + $0x17c] sm:$0xf]
  %v838 = vld [vmem:[%s1 + $0x180] sm:$0xf]
  %v839 = vld [vmem:[%s1 + $0x184] sm:$0xf]
  %v840 = vld [vmem:[%s1 + $0x188] sm:$0xf]
  %v841 = vld [vmem:[%s1 + $0x18c] sm:$0xf]
  %v842 = vld [vmem:[%s1 + $0x190] sm:$0xf]
  %v843 = vld [vmem:[%s1 + $0x194] sm:$0xf]
  %v844 = vld [vmem:[%s1 + $0x198] sm:$0xf]
  %v845 = vld [vmem:[%s1 + $0x19c] sm:$0xf]
  %v846 = vld [vmem:[%s1 + $0x1a0] sm:$0xf]
  %v847 = vld [vmem:[%s1 + $0x1a4] sm:$0xf]
  %v848 = vld [vmem:[%s1 + $0x1a8] sm:$0xf]
  %v849 = vld [vmem:[%s1 + $0x1ac] sm:$0xf]
  %v850 = vld [vmem:[%s1 + $0x1b0] sm:$0xf]
  %v851 = vld [vmem:[%s1 + $0x1b4] sm:$0xf]
  %v852 = vld [vmem:[%s1 + $0x1b8] sm:$0xf]
  %v853 = vld [vmem:[%s1 + $0x1bc] sm:$0xf]
  %v854 = vld [vmem:[%s1 + $0x1c0] sm:$0xf]
  %v855 = vld [vmem:[%s1 + $0x1c4] sm:$0xf]
  %v856 = vld [vmem:[%s1 + $0x1c8] sm:$0xf]
  %v857 = vld [vmem:[%s1 + $0x1cc] sm:$0xf]
  %v858 = vld [vmem:[%s1 + $0x1d0] sm:$0xf]
  %v859 = vld [vmem:[%s1 + $0x1d4] sm:$0xf]
  %v860 = vld [vmem:[%s1 + $0x1d8] sm:$0xf]
  %v861 = vld [vmem:[%s1 + $0x1dc] sm:$0xf]
  %v862 = vld [vmem:[%s1 + $0x1e0] sm:$0xf]
  %v863 = vld [vmem:[%s1 + $0x1e4] sm:$0xf]
  %v864 = vld [vmem:[%s1 + $0x1e8] sm:$0xf]
  %v865 = vld [vmem:[%s1 + $0x1ec] sm:$0xf]
  %v866 = vld [vmem:[%s1 + $0x1f0] sm:$0xf]
  %v867 = vld [vmem:[%s1 + $0x1f4] sm:$0xf]
  %v868 = vld [vmem:[%s1 + $0x1f8] sm:$0xf]
  %v869 = vld [vmem:[%s1 + $0x1fc] sm:$0xf]
  %v998 = vunpack.c.l.b16 %v742
  %v999 = vunpack.c.l.b16 %v743
  %v1000 = vunpack.c.l.b16 %v744
  %v1001 = vunpack.c.l.b16 %v745
  %v1002 = vunpack.c.l.b16 %v746
  %v1003 = vunpack.c.l.b16 %v747
  %v1004 = vunpack.c.l.b16 %v748
  %v1005 = vunpack.c.l.b16 %v749
  %v1006 = vunpack.c.l.b16 %v750
  %v1007 = vunpack.c.l.b16 %v751
  %v1008 = vunpack.c.l.b16 %v752
  %v1009 = vunpack.c.l.b16 %v753
  %v1010 = vunpack.c.l.b16 %v754
  %v1011 = vunpack.c.l.b16 %v755
  %v1012 = vunpack.c.l.b16 %v756
  %v1013 = vunpack.c.l.b16 %v757
  %v1014 = vunpack.c.l.b16 %v758
  %v1015 = vunpack.c.l.b16 %v759
  %v1016 = vunpack.c.l.b16 %v760
  %v1017 = vunpack.c.l.b16 %v761
  %v1018 = vunpack.c.l.b16 %v762
  %v1019 = vunpack.c.l.b16 %v763
  %v1020 = vunpack.c.l.b16 %v764
  %v1021 = vunpack.c.l.b16 %v765
  %v1022 = vunpack.c.l.b16 %v766
  %v1023 = vunpack.c.l.b16 %v767
  %v1024 = vunpack.c.l.b16 %v768
  %v1025 = vunpack.c.l.b16 %v769
  %v1026 = vunpack.c.l.b16 %v770
  %v1027 = vunpack.c.l.b16 %v771
  %v1028 = vunpack.c.l.b16 %v772
  %v1029 = vunpack.c.l.b16 %v773
  %v1030 = vunpack.c.l.b16 %v774
  %v1031 = vunpack.c.l.b16 %v775
  %v1032 = vunpack.c.l.b16 %v776
  %v1033 = vunpack.c.l.b16 %v777
  %v1034 = vunpack.c.l.b16 %v778
  %v1035 = vunpack.c.l.b16 %v779
  %v1036 = vunpack.c.l.b16 %v780
  %v1037 = vunpack.c.l.b16 %v781
  %v1038 = vunpack.c.l.b16 %v782
  %v1039 = vunpack.c.l.b16 %v783
  %v1040 = vunpack.c.l.b16 %v784
  %v1041 = vunpack.c.l.b16 %v785
  %v1042 = vunpack.c.l.b16 %v786
  %v1043 = vunpack.c.l.b16 %v787
  %v1044 = vunpack.c.l.b16 %v788
  %v1045 = vunpack.c.l.b16 %v789
  %v1046 = vunpack.c.l.b16 %v790
  %v1047 = vunpack.c.l.b16 %v791
  %v1048 = vunpack.c.l.b16 %v792
  %v1049 = vunpack.c.l.b16 %v793
  %v1050 = vunpack.c.l.b16 %v794
  %v1051 = vunpack.c.l.b16 %v795
  %v1052 = vunpack.c.l.b16 %v796
  %v1053 = vunpack.c.l.b16 %v797
  %v1054 = vunpack.c.l.b16 %v798
  %v1055 = vunpack.c.l.b16 %v799
  %v1056 = vunpack.c.l.b16 %v800
  %v1057 = vunpack.c.l.b16 %v801
  %v1058 = vunpack.c.l.b16 %v802
  %v1059 = vunpack.c.l.b16 %v803
  %v1060 = vunpack.c.l.b16 %v804
  %v1061 = vunpack.c.l.b16 %v805
  %v1062 = vunpack.c.l.b16 %v806
  %v1063 = vunpack.c.l.b16 %v807
  %v1064 = vunpack.c.l.b16 %v808
  %v1065 = vunpack.c.l.b16 %v809
  %v1066 = vunpack.c.l.b16 %v810
  %v1067 = vunpack.c.l.b16 %v811
  %v1068 = vunpack.c.l.b16 %v812
  %v1069 = vunpack.c.l.b16 %v813
  %v1070 = vunpack.c.l.b16 %v814
  %v1071 = vunpack.c.l.b16 %v815
  %v1072 = vunpack.c.l.b16 %v816
  %v1073 = vunpack.c.l.b16 %v817
  %v1074 = vunpack.c.l.b16 %v818
  %v1075 = vunpack.c.l.b16 %v819
  %v1076 = vunpack.c.l.b16 %v820
  %v1077 = vunpack.c.l.b16 %v821
  %v1078 = vunpack.c.l.b16 %v822
  %v1079 = vunpack.c.l.b16 %v823
  %v1080 = vunpack.c.l.b16 %v824
  %v1081 = vunpack.c.l.b16 %v825
  %v1082 = vunpack.c.l.b16 %v826
  %v1083 = vunpack.c.l.b16 %v827
  %v1084 = vunpack.c.l.b16 %v828
  %v1085 = vunpack.c.l.b16 %v829
  %v1086 = vunpack.c.l.b16 %v830
  %v1087 = vunpack.c.l.b16 %v831
  %v1088 = vunpack.c.l.b16 %v832
  %v1089 = vunpack.c.l.b16 %v833
  %v1090 = vunpack.c.l.b16 %v834
  %v1091 = vunpack.c.l.b16 %v835
  %v1092 = vunpack.c.l.b16 %v836
  %v1093 = vunpack.c.l.b16 %v837
  %v1094 = vunpack.c.l.b16 %v838
  %v1095 = vunpack.c.l.b16 %v839
  %v1096 = vunpack.c.l.b16 %v840
  %v1097 = vunpack.c.l.b16 %v841
  %v1098 = vunpack.c.l.b16 %v842
  %v1099 = vunpack.c.l.b16 %v843
  %v1100 = vunpack.c.l.b16 %v844
  %v1101 = vunpack.c.l.b16 %v845
  %v1102 = vunpack.c.l.b16 %v846
  %v1103 = vunpack.c.l.b16 %v847
  %v1104 = vunpack.c.l.b16 %v848
  %v1105 = vunpack.c.l.b16 %v849
  %v1106 = vunpack.c.l.b16 %v850
  %v1107 = vunpack.c.l.b16 %v851
  %v1108 = vunpack.c.l.b16 %v852
  %v1109 = vunpack.c.l.b16 %v853
  %v1110 = vunpack.c.l.b16 %v854
  %v1111 = vunpack.c.l.b16 %v855
  %v1112 = vunpack.c.l.b16 %v856
  %v1113 = vunpack.c.l.b16 %v857
  %v1114 = vunpack.c.l.b16 %v858
  %v1115 = vunpack.c.l.b16 %v859
  %v1116 = vunpack.c.l.b16 %v860
  %v1117 = vunpack.c.l.b16 %v861
  %v1118 = vunpack.c.l.b16 %v862
  %v1119 = vunpack.c.l.b16 %v863
  %v1120 = vunpack.c.l.b16 %v864
  %v1121 = vunpack.c.l.b16 %v865
  %v1122 = vunpack.c.l.b16 %v866
  %v1123 = vunpack.c.l.b16 %v867
  %v1124 = vunpack.c.l.b16 %v868
  %v1125 = vunpack.c.l.b16 %v869
  %v1126 = vpack.c.b16 %v999, %v998
  %v1127 = vpack.c.b16 %v1001, %v1000
  %v1128 = vpack.c.b16 %v1003, %v1002
  %v1129 = vpack.c.b16 %v1005, %v1004
  %v1130 = vpack.c.b16 %v1007, %v1006
  %v1131 = vpack.c.b16 %v1009, %v1008
  %v1132 = vpack.c.b16 %v1011, %v1010
  %v1133 = vpack.c.b16 %v1013, %v1012
  %v1134 = vpack.c.b16 %v1015, %v1014
  %v1135 = vpack.c.b16 %v1017, %v1016
  %v1136 = vpack.c.b16 %v1019, %v1018
  %v1137 = vpack.c.b16 %v1021, %v1020
  %v1138 = vpack.c.b16 %v1023, %v1022
  %v1139 = vpack.c.b16 %v1025, %v1024
  %v1140 = vpack.c.b16 %v1027, %v1026
  %v1141 = vpack.c.b16 %v1029, %v1028
  %v1142 = vpack.c.b16 %v1031, %v1030
  %v1143 = vpack.c.b16 %v1033, %v1032
  %v1144 = vpack.c.b16 %v1035, %v1034
  %v1145 = vpack.c.b16 %v1037, %v1036
  %v1146 = vpack.c.b16 %v1039, %v1038
  %v1147 = vpack.c.b16 %v1041, %v1040
  %v1148 = vpack.c.b16 %v1043, %v1042
  %v1149 = vpack.c.b16 %v1045, %v1044
  %v1150 = vpack.c.b16 %v1047, %v1046
  %v1151 = vpack.c.b16 %v1049, %v1048
  %v1152 = vpack.c.b16 %v1051, %v1050
  %v1153 = vpack.c.b16 %v1053, %v1052
  %v1154 = vpack.c.b16 %v1055, %v1054
  %v1155 = vpack.c.b16 %v1057, %v1056
  %v1156 = vpack.c.b16 %v1059, %v1058
  %v1157 = vpack.c.b16 %v1061, %v1060
  %v1158 = vpack.c.b16 %v1063, %v1062
  %v1159 = vpack.c.b16 %v1065, %v1064
  %v1160 = vpack.c.b16 %v1067, %v1066
  %v1161 = vpack.c.b16 %v1069, %v1068
  %v1162 = vpack.c.b16 %v1071, %v1070
  %v1163 = vpack.c.b16 %v1073, %v1072
  %v1164 = vpack.c.b16 %v1075, %v1074
  %v1165 = vpack.c.b16 %v1077, %v1076
  %v1166 = vpack.c.b16 %v1079, %v1078
  %v1167 = vpack.c.b16 %v1081, %v1080
  %v1168 = vpack.c.b16 %v1083, %v1082
  %v1169 = vpack.c.b16 %v1085, %v1084
  %v1170 = vpack.c.b16 %v1087, %v1086
  %v1171 = vpack.c.b16 %v1089, %v1088
  %v1172 = vpack.c.b16 %v1091, %v1090
  %v1173 = vpack.c.b16 %v1093, %v1092
  %v1174 = vpack.c.b16 %v1095, %v1094
  %v1175 = vpack.c.b16 %v1097, %v1096
  %v1176 = vpack.c.b16 %v1099, %v1098
  %v1177 = vpack.c.b16 %v1101, %v1100
  %v1178 = vpack.c.b16 %v1103, %v1102
  %v1179 = vpack.c.b16 %v1105, %v1104
  %v1180 = vpack.c.b16 %v1107, %v1106
  %v1181 = vpack.c.b16 %v1109, %v1108
  %v1182 = vpack.c.b16 %v1111, %v1110
  %v1183 = vpack.c.b16 %v1113, %v1112
  %v1184 = vpack.c.b16 %v1115, %v1114
  %v1185 = vpack.c.b16 %v1117, %v1116
  %v1186 = vpack.c.b16 %v1119, %v1118
  %v1187 = vpack.c.b16 %v1121, %v1120
  %v1188 = vpack.c.b16 %v1123, %v1122
  %v1189 = vpack.c.b16 %v1125, %v1124
  %1254 = vmatprep.subr.bf16.mxu0 0
  %1255 = vmatpush1.bf16.msra.mxu0 %v1126
  %1256 = vmatprep.subr.bf16.mxu0 0
  %1257 = vmatpush1.bf16.msra.mxu0 %v1127
  %1258 = vmatprep.subr.bf16.mxu0 0
  %1259 = vmatpush1.bf16.msra.mxu0 %v1128
  %1260 = vmatprep.subr.bf16.mxu0 0
  %1261 = vmatpush1.bf16.msra.mxu0 %v1129
  %1262 = vmatprep.subr.bf16.mxu0 0
  %1263 = vmatpush1.bf16.msra.mxu0 %v1130
  %1264 = vmatprep.subr.bf16.mxu0 0
  %1265 = vmatpush1.bf16.msra.mxu0 %v1131
  %1266 = vmatprep.subr.bf16.mxu0 0
  %1267 = vmatpush1.bf16.msra.mxu0 %v1132
  %1268 = vmatprep.subr.bf16.mxu0 0
  %1269 = vmatpush1.bf16.msra.mxu0 %v1133
  %1270 = vmatprep.subr.bf16.mxu0 0
  %1271 = vmatpush1.bf16.msra.mxu0 %v1134
  %1272 = vmatprep.subr.bf16.mxu0 0
  %1273 = vmatpush1.bf16.msra.mxu0 %v1135
  %1274 = vmatprep.subr.bf16.mxu0 0
  %1275 = vmatpush1.bf16.msra.mxu0 %v1136
  %1276 = vmatprep.subr.bf16.mxu0 0
  %1277 = vmatpush1.bf16.msra.mxu0 %v1137
  %1278 = vmatprep.subr.bf16.mxu0 0
  %1279 = vmatpush1.bf16.msra.mxu0 %v1138
  %1280 = vmatprep.subr.bf16.mxu0 0
  %1281 = vmatpush1.bf16.msra.mxu0 %v1139
  %1282 = vmatprep.subr.bf16.mxu0 0
  %1283 = vmatpush1.bf16.msra.mxu0 %v1140
  %1284 = vmatprep.subr.bf16.mxu0 0
  %1285 = vmatpush1.bf16.msra.mxu0 %v1141
  %1286 = vmatprep.mubr.bf16.mxu0 %v679
  %1287 = vmatmul.mubr.bf16.gmra.mrb[0].mxu0 %v678
  %v1288 = vpop.f32.mrb[0].mxu0
  %v1289 = vadd.f32 0.0, %v1288
  %v1290 = vpop.f32.mrb[0].mxu0
  %v1291 = vpop.f32.mrb[0].mxu0
  %v1292 = vadd.f32 0.0, %v1291
  %v1293 = vpop.f32.mrb[0].mxu0
  %1294 = vmatprep.mubr.bf16.mxu0 %v687
  %1295 = vmatmul.mubr.bf16.gmra.mrb[0].mxu0 %v686
  %v1296 = vpop.f32.mrb[0].mxu0
  %v1297 = vadd.f32 0.0, %v1296
  %v1298 = vpop.f32.mrb[0].mxu0
  %v1299 = vpop.f32.mrb[0].mxu0
  %v1300 = vadd.f32 0.0, %v1299
  %v1301 = vpop.f32.mrb[0].mxu0
  %1302 = vmatprep.mubr.bf16.mxu0 %v695
  %1303 = vmatmul.mubr.bf16.gmra.mrb[0].mxu0 %v694
  %v1304 = vpop.f32.mrb[0].mxu0
  %v1305 = vadd.f32 0.0, %v1304
  %v1306 = vpop.f32.mrb[0].mxu0
  %v1307 = vpop.f32.mrb[0].mxu0
  %v1308 = vadd.f32 0.0, %v1307
  %v1309 = vpop.f32.mrb[0].mxu0
  %1310 = vmatprep.mubr.bf16.mxu0 %v703
  %1311 = vmatmul.mubr.bf16.gmra.mrb[0].mxu0 %v702
  %v1312 = vpop.f32.mrb[0].mxu0
  %v1313 = vadd.f32 0.0, %v1312
  %v1314 = vpop.f32.mrb[0].mxu0
  %v1315 = vpop.f32.mrb[0].mxu0
  %v1316 = vadd.f32 0.0, %v1315
  %v1317 = vpop.f32.mrb[0].mxu0
  %1318 = vmatprep.mubr.bf16.mxu0 %v711
  %1319 = vmatmul.mubr.bf16.gmra.mrb[0].mxu0 %v710
  %v1320 = vpop.f32.mrb[0].mxu0
  %v1321 = vadd.f32 0.0, %v1320
  %v1322 = vpop.f32.mrb[0].mxu0
  %v1323 = vpop.f32.mrb[0].mxu0
  %v1324 = vadd.f32 0.0, %v1323
  %v1325 = vpop.f32.mrb[0].mxu0
  %1326 = vmatprep.mubr.bf16.mxu0 %v719
  %1327 = vmatmul.mubr.bf16.gmra.mrb[0].mxu0 %v718
  %v1328 = vpop.f32.mrb[0].mxu0
  %v1329 = vadd.f32 0.0, %v1328
  %v1330 = vpop.f32.mrb[0].mxu0
  %v1331 = vpop.f32.mrb[0].mxu0
  %v1332 = vadd.f32 0.0, %v1331
  %v1333 = vpop.f32.mrb[0].mxu0
  %1334 = vmatprep.mubr.bf16.mxu0 %v727
  %1335 = vmatmul.mubr.bf16.gmra.mrb[0].mxu0 %v726
  %v1336 = vpop.f32.mrb[0].mxu0
  %v1337 = vadd.f32 0.0, %v1336
  %v1338 = vpop.f32.mrb[0].mxu0
  %v1339 = vpop.f32.mrb[0].mxu0
  %v1340 = vadd.f32 0.0, %v1339
  %v1341 = vpop.f32.mrb[0].mxu0
  %1342 = vmatprep.mubr.bf16.mxu0 %v735
  %1343 = vmatmul.mubr.bf16.gmra.mrb[0].mxu0 %v734
  %v1344 = vpop.f32.mrb[0].mxu0
  %v1345 = vadd.f32 0.0, %v1344
  %v1346 = vpop.f32.mrb[0].mxu0
  %v1347 = vpop.f32.mrb[0].mxu0
  %v1348 = vadd.f32 0.0, %v1347
  %v1349 = vpop.f32.mrb[0].mxu0
  %1350 = vdwg.mxu0
  %1351 = vmatprep.subr.bf16.mxu0 0
  %1352 = vmatpush1.bf16.msra.mxu0 %v1142
  %1353 = vmatprep.subr.bf16.mxu0 0
  %1354 = vmatpush1.bf16.msra.mxu0 %v1143
  %1355 = vmatprep.subr.bf16.mxu0 0
  %1356 = vmatpush1.bf16.msra.mxu0 %v1144
  %1357 = vmatprep.subr.bf16.mxu0 0
  %1358 = vmatpush1.bf16.msra.mxu0 %v1145
  %1359 = vmatprep.subr.bf16.mxu0 0
  %1360 = vmatpush1.bf16.msra.mxu0 %v1146
  %1361 = vmatprep.subr.bf16.mxu0 0
  %1362 = vmatpush1.bf16.msra.mxu0 %v1147
  %1363 = vmatprep.subr.bf16.mxu0 0
  %1364 = vmatpush1.bf16.msra.mxu0 %v1148
  %1365 = vmatprep.subr.bf16.mxu0 0
  %1366 = vmatpush1.bf16.msra.mxu0 %v1149
  %1367 = vmatprep.subr.bf16.mxu0 0
  %1368 = vmatpush1.bf16.msra.mxu0 %v1150
  %1369 = vmatprep.subr.bf16.mxu0 0
  %1370 = vmatpush1.bf16.msra.mxu0 %v1151
  %1371 = vmatprep.subr.bf16.mxu0 0
  %1372 = vmatpush1.bf16.msra.mxu0 %v1152
  %1373 = vmatprep.subr.bf16.mxu0 0
  %1374 = vmatpush1.bf16.msra.mxu0 %v1153
  %1375 = vmatprep.subr.bf16.mxu0 0
  %1376 = vmatpush1.bf16.msra.mxu0 %v1154
  %1377 = vmatprep.subr.bf16.mxu0 0
  %1378 = vmatpush1.bf16.msra.mxu0 %v1155
  %1379 = vmatprep.subr.bf16.mxu0 0
  %1380 = vmatpush1.bf16.msra.mxu0 %v1156
  %1381 = vmatprep.subr.bf16.mxu0 0
  %1382 = vmatpush1.bf16.msra.mxu0 %v1157
  %1383 = vmatprep.mubr.bf16.mxu0 %v681
  %1384 = vmatmul.mubr.bf16.gmra.mrb[0].mxu0 %v680
  %v1385 = vpop.f32.mrb[0].mxu0
  %v1386 = vadd.f32 %v1289, %v1385
  %v1387 = vpop.f32.mrb[0].mxu0
  %v1388 = vpop.f32.mrb[0].mxu0
  %v1389 = vadd.f32 %v1292, %v1388
  %v1390 = vpop.f32.mrb[0].mxu0
  %1391 = vmatprep.mubr.bf16.mxu0 %v689
  %1392 = vmatmul.mubr.bf16.gmra.mrb[0].mxu0 %v688
  %v1393 = vpop.f32.mrb[0].mxu0
  %v1394 = vadd.f32 %v1297, %v1393
  %v1395 = vpop.f32.mrb[0].mxu0
  %v1396 = vpop.f32.mrb[0].mxu0
  %v1397 = vadd.f32 %v1300, %v1396
  %v1398 = vpop.f32.mrb[0].mxu0
  %1399 = vmatprep.mubr.bf16.mxu0 %v697
  %1400 = vmatmul.mubr.bf16.gmra.mrb[0].mxu0 %v696
  %v1401 = vpop.f32.mrb[0].mxu0
  %v1402 = vadd.f32 %v1305, %v1401
  %v1403 = vpop.f32.mrb[0].mxu0
  %v1404 = vpop.f32.mrb[0].mxu0
  %v1405 = vadd.f32 %v1308, %v1404
  %v1406 = vpop.f32.mrb[0].mxu0
  %1407 = vmatprep.mubr.bf16.mxu0 %v705
  %1408 = vmatmul.mubr.bf16.gmra.mrb[0].mxu0 %v704
  %v1409 = vpop.f32.mrb[0].mxu0
  %v1410 = vadd.f32 %v1313, %v1409
  %v1411 = vpop.f32.mrb[0].mxu0
  %v1412 = vpop.f32.mrb[0].mxu0
  %v1413 = vadd.f32 %v1316, %v1412
  %v1414 = vpop.f32.mrb[0].mxu0
  %1415 = vmatprep.mubr.bf16.mxu0 %v713
  %1416 = vmatmul.mubr.bf16.gmra.mrb[0].mxu0 %v712
  %v1417 = vpop.f32.mrb[0].mxu0
  %v1418 = vadd.f32 %v1321, %v1417
  %v1419 = vpop.f32.mrb[0].mxu0
  %v1420 = vpop.f32.mrb[0].mxu0
  %v1421 = vadd.f32 %v1324, %v1420
  %v1422 = vpop.f32.mrb[0].mxu0
  %1423 = vmatprep.mubr.bf16.mxu0 %v721
  %1424 = vmatmul.mubr.bf16.gmra.mrb[0].mxu0 %v720
  %v1425 = vpop.f32.mrb[0].mxu0
  %v1426 = vadd.f32 %v1329, %v1425
  %v1427 = vpop.f32.mrb[0].mxu0
  %v1428 = vpop.f32.mrb[0].mxu0
  %v1429 = vadd.f32 %v1332, %v1428
  %v1430 = vpop.f32.mrb[0].mxu0
  %1431 = vmatprep.mubr.bf16.mxu0 %v729
  %1432 = vmatmul.mubr.bf16.gmra.mrb[0].mxu0 %v728
  %v1433 = vpop.f32.mrb[0].mxu0
  %v1434 = vadd.f32 %v1337, %v1433
  %v1435 = vpop.f32.mrb[0].mxu0
  %v1436 = vpop.f32.mrb[0].mxu0
  %v1437 = vadd.f32 %v1340, %v1436
  %v1438 = vpop.f32.mrb[0].mxu0
  %1439 = vmatprep.mubr.bf16.mxu0 %v737
  %1440 = vmatmul.mubr.bf16.gmra.mrb[0].mxu0 %v736
  %v1441 = vpop.f32.mrb[0].mxu0
  %v1442 = vadd.f32 %v1345, %v1441
  %v1443 = vpop.f32.mrb[0].mxu0
  %v1444 = vpop.f32.mrb[0].mxu0
  %v1445 = vadd.f32 %v1348, %v1444
  %v1446 = vpop.f32.mrb[0].mxu0
  %1447 = vdwg.mxu0
  %1448 = vmatprep.subr.bf16.mxu0 0
  %1449 = vmatpush1.bf16.msra.mxu0 %v1158
  %1450 = vmatprep.subr.bf16.mxu0 0
  %1451 = vmatpush1.bf16.msra.mxu0 %v1159
  %1452 = vmatprep.subr.bf16.mxu0 0
  %1453 = vmatpush1.bf16.msra.mxu0 %v1160
  %1454 = vmatprep.subr.bf16.mxu0 0
  %1455 = vmatpush1.bf16.msra.mxu0 %v1161
  %1456 = vmatprep.subr.bf16.mxu0 0
  %1457 = vmatpush1.bf16.msra.mxu0 %v1162
  %1458 = vmatprep.subr.bf16.mxu0 0
  %1459 = vmatpush1.bf16.msra.mxu0 %v1163
  %1460 = vmatprep.subr.bf16.mxu0 0
  %1461 = vmatpush1.bf16.msra.mxu0 %v1164
  %1462 = vmatprep.subr.bf16.mxu0 0
  %1463 = vmatpush1.bf16.msra.mxu0 %v1165
  %1464 = vmatprep.subr.bf16.mxu0 0
  %1465 = vmatpush1.bf16.msra.mxu0 %v1166
  %1466 = vmatprep.subr.bf16.mxu0 0
  %1467 = vmatpush1.bf16.msra.mxu0 %v1167
  %1468 = vmatprep.subr.bf16.mxu0 0
  %1469 = vmatpush1.bf16.msra.mxu0 %v1168
  %1470 = vmatprep.subr.bf16.mxu0 0
  %1471 = vmatpush1.bf16.msra.mxu0 %v1169
  %1472 = vmatprep.subr.bf16.mxu0 0
  %1473 = vmatpush1.bf16.msra.mxu0 %v1170
  %1474 = vmatprep.subr.bf16.mxu0 0
  %1475 = vmatpush1.bf16.msra.mxu0 %v1171
  %1476 = vmatprep.subr.bf16.mxu0 0
  %1477 = vmatpush1.bf16.msra.mxu0 %v1172
  %1478 = vmatprep.subr.bf16.mxu0 0
  %1479 = vmatpush1.bf16.msra.mxu0 %v1173
  %1480 = vmatprep.mubr.bf16.mxu0 %v683
  %1481 = vmatmul.mubr.bf16.gmra.mrb[0].mxu0 %v682
  %v1482 = vpop.f32.mrb[0].mxu0
  %v1483 = vadd.f32 %v1386, %v1482
  %v1484 = vpop.f32.mrb[0].mxu0
  %v1485 = vpop.f32.mrb[0].mxu0
  %v1486 = vadd.f32 %v1389, %v1485
  %v1487 = vpop.f32.mrb[0].mxu0
  %1488 = vmatprep.mubr.bf16.mxu0 %v691
  %1489 = vmatmul.mubr.bf16.gmra.mrb[0].mxu0 %v690
  %v1490 = vpop.f32.mrb[0].mxu0
  %v1491 = vadd.f32 %v1394, %v1490
  %v1492 = vpop.f32.mrb[0].mxu0
  %v1493 = vpop.f32.mrb[0].mxu0
  %v1494 = vadd.f32 %v1397, %v1493
  %v1495 = vpop.f32.mrb[0].mxu0
  %1496 = vmatprep.mubr.bf16.mxu0 %v699
  %1497 = vmatmul.mubr.bf16.gmra.mrb[0].mxu0 %v698
  %v1498 = vpop.f32.mrb[0].mxu0
  %v1499 = vadd.f32 %v1402, %v1498
  %v1500 = vpop.f32.mrb[0].mxu0
  %v1501 = vpop.f32.mrb[0].mxu0
  %v1502 = vadd.f32 %v1405, %v1501
  %v1503 = vpop.f32.mrb[0].mxu0
  %1504 = vmatprep.mubr.bf16.mxu0 %v707
  %1505 = vmatmul.mubr.bf16.gmra.mrb[0].mxu0 %v706
  %v1506 = vpop.f32.mrb[0].mxu0
  %v1507 = vadd.f32 %v1410, %v1506
  %v1508 = vpop.f32.mrb[0].mxu0
  %v1509 = vpop.f32.mrb[0].mxu0
  %v1510 = vadd.f32 %v1413, %v1509
  %v1511 = vpop.f32.mrb[0].mxu0
  %1512 = vmatprep.mubr.bf16.mxu0 %v715
  %1513 = vmatmul.mubr.bf16.gmra.mrb[0].mxu0 %v714
  %v1514 = vpop.f32.mrb[0].mxu0
  %v1515 = vadd.f32 %v1418, %v1514
  %v1516 = vpop.f32.mrb[0].mxu0
  %v1517 = vpop.f32.mrb[0].mxu0
  %v1518 = vadd.f32 %v1421, %v1517
  %v1519 = vpop.f32.mrb[0].mxu0
  %1520 = vmatprep.mubr.bf16.mxu0 %v723
  %1521 = vmatmul.mubr.bf16.gmra.mrb[0].mxu0 %v722
  %v1522 = vpop.f32.mrb[0].mxu0
  %v1523 = vadd.f32 %v1426, %v1522
  %v1524 = vpop.f32.mrb[0].mxu0
  %v1525 = vpop.f32.mrb[0].mxu0
  %v1526 = vadd.f32 %v1429, %v1525
  %v1527 = vpop.f32.mrb[0].mxu0
  %1528 = vmatprep.mubr.bf16.mxu0 %v731
  %1529 = vmatmul.mubr.bf16.gmra.mrb[0].mxu0 %v730
  %v1530 = vpop.f32.mrb[0].mxu0
  %v1531 = vadd.f32 %v1434, %v1530
  %v1532 = vpop.f32.mrb[0].mxu0
  %v1533 = vpop.f32.mrb[0].mxu0
  %v1534 = vadd.f32 %v1437, %v1533
  %v1535 = vpop.f32.mrb[0].mxu0
  %1536 = vmatprep.mubr.bf16.mxu0 %v739
  %1537 = vmatmul.mubr.bf16.gmra.mrb[0].mxu0 %v738
  %v1538 = vpop.f32.mrb[0].mxu0
  %v1539 = vadd.f32 %v1442, %v1538
  %v1540 = vpop.f32.mrb[0].mxu0
  %v1541 = vpop.f32.mrb[0].mxu0
  %v1542 = vadd.f32 %v1445, %v1541
  %v1543 = vpop.f32.mrb[0].mxu0
  %1544 = vdwg.mxu0
  %1545 = vmatprep.subr.bf16.mxu0 0
  %1546 = vmatpush1.bf16.msra.mxu0 %v1174
  %1547 = vmatprep.subr.bf16.mxu0 0
  %1548 = vmatpush1.bf16.msra.mxu0 %v1175
  %1549 = vmatprep.subr.bf16.mxu0 0
  %1550 = vmatpush1.bf16.msra.mxu0 %v1176
  %1551 = vmatprep.subr.bf16.mxu0 0
  %1552 = vmatpush1.bf16.msra.mxu0 %v1177
  %1553 = vmatprep.subr.bf16.mxu0 0
  %1554 = vmatpush1.bf16.msra.mxu0 %v1178
  %1555 = vmatprep.subr.bf16.mxu0 0
  %1556 = vmatpush1.bf16.msra.mxu0 %v1179
  %1557 = vmatprep.subr.bf16.mxu0 0
  %1558 = vmatpush1.bf16.msra.mxu0 %v1180
  %1559 = vmatprep.subr.bf16.mxu0 0
  %1560 = vmatpush1.bf16.msra.mxu0 %v1181
  %1561 = vmatprep.subr.bf16.mxu0 0
  %1562 = vmatpush1.bf16.msra.mxu0 %v1182
  %1563 = vmatprep.subr.bf16.mxu0 0
  %1564 = vmatpush1.bf16.msra.mxu0 %v1183
  %1565 = vmatprep.subr.bf16.mxu0 0
  %1566 = vmatpush1.bf16.msra.mxu0 %v1184
  %1567 = vmatprep.subr.bf16.mxu0 0
  %1568 = vmatpush1.bf16.msra.mxu0 %v1185
  %1569 = vmatprep.subr.bf16.mxu0 0
  %1570 = vmatpush1.bf16.msra.mxu0 %v1186
  %1571 = vmatprep.subr.bf16.mxu0 0
  %1572 = vmatpush1.bf16.msra.mxu0 %v1187
  %1573 = vmatprep.subr.bf16.mxu0 0
  %1574 = vmatpush1.bf16.msra.mxu0 %v1188
  %1575 = vmatprep.subr.bf16.mxu0 0
  %1576 = vmatpush1.bf16.msra.mxu0 %v1189
  %1577 = vmatprep.mubr.bf16.mxu0 %v685
  %1578 = vmatmul.mubr.bf16.gmra.mrb[0].mxu0 %v684
  %v1579 = vpop.f32.mrb[0].mxu0
  %v1580 = vadd.f32 %v1483, %v1579
  %v1581 = vpop.f32.mrb[0].mxu0
  %v1582 = vpop.f32.mrb[0].mxu0
  %v1583 = vadd.f32 %v1486, %v1582
  %v1584 = vpop.f32.mrb[0].mxu0
  %1585 = vmatprep.mubr.bf16.mxu0 %v693
  %1586 = vmatmul.mubr.bf16.gmra.mrb[0].mxu0 %v692
  %v1587 = vpop.f32.mrb[0].mxu0
  %v1588 = vadd.f32 %v1491, %v1587
  %v1589 = vpop.f32.mrb[0].mxu0
  %v1590 = vpop.f32.mrb[0].mxu0
  %v1591 = vadd.f32 %v1494, %v1590
  %v1592 = vpop.f32.mrb[0].mxu0
  %1593 = vmatprep.mubr.bf16.mxu0 %v701
  %1594 = vmatmul.mubr.bf16.gmra.mrb[0].mxu0 %v700
  %v1595 = vpop.f32.mrb[0].mxu0
  %v1596 = vadd.f32 %v1499, %v1595
  %v1597 = vpop.f32.mrb[0].mxu0
  %v1598 = vpop.f32.mrb[0].mxu0
  %v1599 = vadd.f32 %v1502, %v1598
  %v1600 = vpop.f32.mrb[0].mxu0
  %1601 = vmatprep.mubr.bf16.mxu0 %v709
  %1602 = vmatmul.mubr.bf16.gmra.mrb[0].mxu0 %v708
  %v1603 = vpop.f32.mrb[0].mxu0
  %v1604 = vadd.f32 %v1507, %v1603
  %v1605 = vpop.f32.mrb[0].mxu0
  %v1606 = vpop.f32.mrb[0].mxu0
  %v1607 = vadd.f32 %v1510, %v1606
  %v1608 = vpop.f32.mrb[0].mxu0
  %1609 = vmatprep.mubr.bf16.mxu0 %v717
  %1610 = vmatmul.mubr.bf16.gmra.mrb[0].mxu0 %v716
  %v1611 = vpop.f32.mrb[0].mxu0
  %v1612 = vadd.f32 %v1515, %v1611
  %v1613 = vpop.f32.mrb[0].mxu0
  %v1614 = vpop.f32.mrb[0].mxu0
  %v1615 = vadd.f32 %v1518, %v1614
  %v1616 = vpop.f32.mrb[0].mxu0
  %1617 = vmatprep.mubr.bf16.mxu0 %v725
  %1618 = vmatmul.mubr.bf16.gmra.mrb[0].mxu0 %v724
  %v1619 = vpop.f32.mrb[0].mxu0
  %v1620 = vadd.f32 %v1523, %v1619
  %v1621 = vpop.f32.mrb[0].mxu0
  %v1622 = vpop.f32.mrb[0].mxu0
  %v1623 = vadd.f32 %v1526, %v1622
  %v1624 = vpop.f32.mrb[0].mxu0
  %1625 = vmatprep.mubr.bf16.mxu0 %v733
  %1626 = vmatmul.mubr.bf16.gmra.mrb[0].mxu0 %v732
  %v1627 = vpop.f32.mrb[0].mxu0
  %v1628 = vadd.f32 %v1531, %v1627
  %v1629 = vpop.f32.mrb[0].mxu0
  %v1630 = vpop.f32.mrb[0].mxu0
  %v1631 = vadd.f32 %v1534, %v1630
  %v1632 = vpop.f32.mrb[0].mxu0
  %1633 = vmatprep.mubr.bf16.mxu0 %v741
  %1634 = vmatmul.mubr.bf16.gmra.mrb[0].mxu0 %v740
  %v1635 = vpop.f32.mrb[0].mxu0
  %v1636 = vadd.f32 %v1539, %v1635
  %v1637 = vpop.f32.mrb[0].mxu0
  %v1638 = vpop.f32.mrb[0].mxu0
  %v1639 = vadd.f32 %v1542, %v1638
  %v1640 = vpop.f32.mrb[0].mxu0
  %1641 = vdwg.mxu0
  %v1642 = vpack.c.bf16 %v1583, %v1580
  %v1643 = vpack.c.bf16 %v1591, %v1588
  %v1644 = vpack.c.bf16 %v1599, %v1596
  %v1645 = vpack.c.bf16 %v1607, %v1604
  %v1646 = vpack.c.bf16 %v1615, %v1612
  %v1647 = vpack.c.bf16 %v1623, %v1620
  %v1648 = vpack.c.bf16 %v1631, %v1628
  %v1649 = vpack.c.bf16 %v1639, %v1636
  %v1658 = vunpack.c.l.b16 %v1642
  %v1659 = vunpack.c.h.b16 %v1642
  %v1660 = vunpack.c.l.b16 %v1643
  %v1661 = vunpack.c.h.b16 %v1643
  %v1662 = vunpack.c.l.b16 %v1644
  %v1663 = vunpack.c.h.b16 %v1644
  %v1664 = vunpack.c.l.b16 %v1645
  %v1665 = vunpack.c.h.b16 %v1645
  %v1666 = vunpack.c.l.b16 %v1646
  %v1667 = vunpack.c.h.b16 %v1646
  %v1668 = vunpack.c.l.b16 %v1647
  %v1669 = vunpack.c.h.b16 %v1647
  %v1670 = vunpack.c.l.b16 %v1648
  %v1671 = vunpack.c.h.b16 %v1648
  %v1672 = vunpack.c.l.b16 %v1649
  %v1673 = vunpack.c.h.b16 %v1649
  %v1674 = vpack.c.b16 %v1658, %v1658
  %v1675 = vpack.c.b16 %v1659, %v1659
  %v1676 = vpack.c.b16 %v1660, %v1660
  %v1677 = vpack.c.b16 %v1661, %v1661
  %v1678 = vpack.c.b16 %v1662, %v1662
  %v1679 = vpack.c.b16 %v1663, %v1663
  %v1680 = vpack.c.b16 %v1664, %v1664
  %v1681 = vpack.c.b16 %v1665, %v1665
  %v1682 = vpack.c.b16 %v1666, %v1666
  %v1683 = vpack.c.b16 %v1667, %v1667
  %v1684 = vpack.c.b16 %v1668, %v1668
  %v1685 = vpack.c.b16 %v1669, %v1669
  %v1686 = vpack.c.b16 %v1670, %v1670
  %v1687 = vpack.c.b16 %v1671, %v1671
  %v1688 = vpack.c.b16 %v1672, %v1672
  %v1689 = vpack.c.b16 %v1673, %v1673
  %1706 = vst [vmem:[%s4] sm:$0xf] %v1674
  %1707 = vst [vmem:[%s4 + $0x4] sm:$0xf] %v1675
  %1708 = vst [vmem:[%s4 + $0x8] sm:$0xf] %v1676
  %1709 = vst [vmem:[%s4 + $0xc] sm:$0xf] %v1677
  %1710 = vst [vmem:[%s4 + $0x10] sm:$0xf] %v1678
  %1711 = vst [vmem:[%s4 + $0x14] sm:$0xf] %v1679
  %1712 = vst [vmem:[%s4 + $0x18] sm:$0xf] %v1680
  %1713 = vst [vmem:[%s4 + $0x1c] sm:$0xf] %v1681
  %1714 = vst [vmem:[%s4 + $0x20] sm:$0xf] %v1682
  %1715 = vst [vmem:[%s4 + $0x24] sm:$0xf] %v1683
  %1716 = vst [vmem:[%s4 + $0x28] sm:$0xf] %v1684
  %1717 = vst [vmem:[%s4 + $0x2c] sm:$0xf] %v1685
  %1718 = vst [vmem:[%s4 + $0x30] sm:$0xf] %v1686
  %1719 = vst [vmem:[%s4 + $0x34] sm:$0xf] %v1687
  %1720 = vst [vmem:[%s4 + $0x38] sm:$0xf] %v1688
  %1721 = vst [vmem:[%s4 + $0x3c] sm:$0xf] %v1689
  // Predicated region
  $region18: #{feature_extractor.15} parent=0 // pred_check
    _
  $region19: #{feature_extractor.15} parent=0 // pred_check_branch
    %1723 = sbr.rel (0) target = $region21
  $region20: #{feature_extractor.15} parent=0 // pred_region
    _
  $region21: #{feature_extractor.15} parent=0 // pred_fallthru
    _
  // Predicated region
  $region22: #{feature_extractor.15} parent=0 // pred_check
    _
  $region23: #{feature_extractor.15} parent=0 // pred_check_branch
    %1725 = sbr.rel (0) target = $region25
  $region24: #{feature_extractor.15} parent=0 // pred_region
    _
  $region25: #{feature_extractor.15} parent=0 // pred_fallthru
    _

</llo_original>
